<compile_context>
chip_gen: v7x
topology: tpu7x:2x2x1
jax: 0.10.0
libtpu: 0.0.40
codegen_flags: <defaults>
</compile_context>

<pallas_src>
import functools

import jax
import jax.numpy as jnp
import numpy as np
from jax import lax
from jax.experimental import pallas as pl
from jax.experimental.pallas import tpu as pltpu


HEAD_PAD = 128  # pad the 100-wide head hidden layer to a full lane width


# ----------------------------- fused Pallas kernel --------------------------

def _net_kernel(words_ref, emb_ref, slab_a_ref, slab_b_ref, slab_c_ref,
                out_ref, x_scr, hb_scr, sem):
    T, E = x_scr.shape
    H = hb_scr.shape[1] // 2
    head_pad = slab_b_ref.shape[0] - 7 * H
    out_size = out_ref.shape[1]

    # ---- embedding gather: token ids in SMEM, table stays in HBM ----
    copies = []
    for t in range(T):
        idx = words_ref[t]
        cp = pltpu.make_async_copy(emb_ref.at[pl.ds(idx, 1), :],
                                   x_scr.at[pl.ds(t, 1), :],
                                   sem.at[t])
        cp.start()
        copies.append(cp)
    for cp in copies:
        cp.wait()

    x = x_scr[...]                                                  # (T, E)
    # paired input [x_t | x_{T-1-t}]: one matmul yields time-aligned fwd/bwd gates
    x_rev = jnp.concatenate([x[T - 1 - t:T - t, :] for t in range(T)], axis=0)
    xp = jnp.concatenate([x, x_rev], axis=1)                        # (T, 2E)

    def gate_scale(hw):
        lane = lax.broadcasted_iota(jnp.int32, (1, 4 * hw), 1)
        return jnp.where((lane >= 2 * hw) & (lane < 3 * hw), 2.0, 1.0).astype(jnp.float32)

    def cell(gates, c_prev, scale, hw):
        # single full-width sigmoid; tanh(g) = 2*sigmoid(2g) - 1
        s = jax.nn.sigmoid(gates * scale)
        i = s[:, 0 * hw:1 * hw]
        f = s[:, 1 * hw:2 * hw]
        g = 2.0 * s[:, 2 * hw:3 * hw] - 1.0
        o = s[:, 3 * hw:4 * hw]
        c_new = f * c_prev + i * g
        h_new = o * jnp.tanh(c_new)
        return h_new, c_new

    scale2 = gate_scale(2 * H)     # merged (both directions) layer-0 cell
    scale1 = gate_scale(H)         # single-direction layer-1 cell

    def rows(ref, start, size, cols):
        v = ref[pl.ds(start, size), :]
        return v if cols == v.shape[1] else v[:, :cols]

    bc = slab_c_ref[...]                                            # (5, WC), tiny
    b0 = bc[0:1, :8 * H]
    b1f = bc[1:2, :4 * H]
    b1b = bc[2:3, :4 * H]
    bd1 = bc[3:4, :head_pad]
    bd2 = bc[4:5, :out_size]

    # ---- layer 0: both directions in one recurrence ----
    w_pair = rows(slab_a_ref, 0, 2 * E, 8 * H)                      # (2E, 8H)
    whh_blk = rows(slab_a_ref, 2 * E, 2 * H, 8 * H)                 # (2H, 8H) block-diag
    g0 = jnp.dot(xp, w_pair, preferred_element_type=jnp.float32) + b0   # (T, 8H)

    h = jnp.zeros((1, 2 * H), jnp.float32)
    c = jnp.zeros((1, 2 * H), jnp.float32)
    for s in range(T):                       # T=8: keep fully unrolled
        gates = g0[s:s + 1, :] + jnp.dot(h, whh_blk, preferred_element_type=jnp.float32)
        h, c = cell(gates, c, scale2, 2 * H)
        hb_scr[pl.ds(s, 1), pl.ds(0, H)] = h[:, :H]                 # fwd output, time s
        hb_scr[pl.ds(T - 1 - s, 1), pl.ds(H, H)] = h[:, H:]         # bwd output, time T-1-s

    x1 = hb_scr[...]                                                # (T, 2H) = [fwd | bwd]

    # ---- layer 1 forward ----
    wih1f = rows(slab_b_ref, 0, 2 * H, 4 * H)
    whh1f = rows(slab_b_ref, 2 * H, H, 4 * H)
    g1 = jnp.dot(x1, wih1f, preferred_element_type=jnp.float32) + b1f    # (T, 4H)
    h1 = jnp.zeros((1, H), jnp.float32)
    c1 = jnp.zeros((1, H), jnp.float32)
    for s in range(T):
        gates = g1[s:s + 1, :] + jnp.dot(h1, whh1f, preferred_element_type=jnp.float32)
        h1, c1 = cell(gates, c1, scale1, H)

    # ---- layer 1 backward: lstm_out[-1] only needs ONE step from zero state,
    #      so W_hh of this direction never contributes ----
    wih1b = rows(slab_b_ref, 3 * H, 2 * H, 4 * H)
    gates_b = jnp.dot(x1[T - 1:T, :], wih1b, preferred_element_type=jnp.float32) + b1b
    h1b, _ = cell(gates_b, jnp.zeros((1, H), jnp.float32), scale1, H)

    # ---- head: dense(2H -> 128 padded) -> relu -> out ----
    w1 = rows(slab_b_ref, 5 * H, 2 * H, head_pad)
    w2 = slab_b_ref[pl.ds(7 * H, head_pad), :]                      # (head_pad, WB)
    hcat = jnp.concatenate([h1, h1b], axis=1)                       # (1, 2H)
    hid = jnp.maximum(jnp.dot(hcat, w1, preferred_element_type=jnp.float32) + bd1, 0.0)
    out_full = jnp.dot(hid, w2, preferred_element_type=jnp.float32)
    out_ref[...] = out_full[:, :out_size] + bd2


# ----------------------------- one-time parameter packing -------------------

def pack_params(p, head_pad=HEAD_PAD):
    """Run ONCE at parameter-load time (outside jit): transpose / fuse / pad /
    pack everything into 3 VMEM slabs + the HBM-resident embedding table."""
    f32 = lambda a: jnp.asarray(a, jnp.float32)
    emb = f32(p["embedding"])                                       # (vocab, E)

    wih0f, whh0f, bih0f, bhh0f = p["l0_fwd"]
    wih0b, whh0b, bih0b, bhh0b = p["l0_bwd"]
    wih1f, whh1f, bih1f, bhh1f = p["l1_fwd"]
    wih1b, _whh1b, bih1b, bhh1b = p["l1_bwd"]    # layer-1 bwd W_hh never affects lstm_out[-1]
    H = whh0f.shape[1]

    def gate_major(w4h, d):
        """Scatter (rows,4H) [i|f|g|o] columns into (rows,8H) gate-major slots
        [i_f i_b | f_f f_b | g_f g_b | o_f o_b] for direction d in {0,1}."""
        out = jnp.zeros((w4h.shape[0], 8 * H), jnp.float32)
        for k in range(4):
            out = out.at[:, (2 * k + d) * H:(2 * k + d + 1) * H].set(w4h[:, k * H:(k + 1) * H])
        return out

    # layer-0 slab: paired input projection + block-diagonal recurrent weight
    w_pair = jnp.concatenate([gate_major(f32(wih0f).T, 0),
                              gate_major(f32(wih0b).T, 1)], axis=0)      # (2E, 8H)
    whh_blk = jnp.concatenate([gate_major(f32(whh0f).T, 0),
                               gate_major(f32(whh0b).T, 1)], axis=0)     # (2H, 8H)
    slab_a = jnp.concatenate([w_pair, whh_blk], axis=0)

    b0 = (gate_major(f32(bih0f + bhh0f).reshape(1, -1), 0)
          + gate_major(f32(bih0b + bhh0b).reshape(1, -1), 1))            # (1, 8H)
    b1f = f32(bih1f + bhh1f).reshape(1, -1)
    b1b = f32(bih1b + bhh1b).reshape(1, -1)

    w1 = f32(p["dense_w"])                                               # (2H, 100)
    bd1 = f32(p["dense_b"]).reshape(1, -1)
    w2 = f32(p["out_w"])                                                 # (100, out)
    bd2 = f32(p["out_b"]).reshape(1, -1)
    out_size = w2.shape[1]
    assert w1.shape[1] <= head_pad

    wb = max(4 * H, head_pad)

    def pad2(a, rows, cols):
        return jnp.zeros((rows, cols), jnp.float32).at[:a.shape[0], :a.shape[1]].set(a)

    # layer-1 + head slab (zero padding is exact: padded bias / w2 rows are 0)
    slab_b = jnp.concatenate([
        pad2(f32(wih1f).T, 2 * H, wb),
        pad2(f32(whh1f).T, H, wb),
        pad2(f32(wih1b).T, 2 * H, wb),
        pad2(w1, 2 * H, wb),
        pad2(w2, head_pad, wb),
    ], axis=0)                                                           # (7H + head_pad, wb)

    wc = max(8 * H, head_pad, out_size)
    slab_c = jnp.concatenate([pad2(b0, 1, wc), pad2(b1f, 1, wc), pad2(b1b, 1, wc),
                              pad2(bd1, 1, wc), pad2(bd2, 1, wc)], axis=0)   # (5, wc)

    return dict(emb=emb, slab_a=slab_a, slab_b=slab_b, slab_c=slab_c,
                out_size=int(out_size))


# ----------------------------- jitted forward -------------------------------

@functools.partial(jax.jit, static_argnames=("out_size",))
def _net_forward_packed(words, emb, slab_a, slab_b, slab_c, *, out_size):
    T = words.shape[0]
    H = slab_a.shape[1] // 8
    E = (slab_a.shape[0] - 2 * H) // 2

    smem = pl.BlockSpec(memory_space=pltpu.MemorySpace.SMEM)
    vmem = pl.BlockSpec(memory_space=pltpu.MemorySpace.VMEM)
    hbm = pl.BlockSpec(memory_space=pl.ANY)          # embedding table stays in HBM

    return pl.pallas_call(
        _net_kernel,
        out_shape=jax.ShapeDtypeStruct((1, out_size), jnp.float32),
        in_specs=[smem, hbm, vmem, vmem, vmem],
        out_specs=vmem,
        scratch_shapes=[pltpu.VMEM((T, E), jnp.float32),       # gathered embeddings
                        pltpu.VMEM((T, 2 * H), jnp.float32),   # layer-0 outputs [fwd|bwd]
                        pltpu.SemaphoreType.DMA((T,))],        # per-token gather sems
    )(words.astype(jnp.int32), emb, slab_a, slab_b, slab_c)


def net_forward(words, packed):
    """words: int32 (T,) token indices. Returns (1, out_size)."""
    return _net_forward_packed(words, packed["emb"], packed["slab_a"],
                               packed["slab_b"], packed["slab_c"],
                               out_size=packed["out_size"])


# -------------------------- deterministic params -----------------------------

def xavier_normal(key, shape):
    fan_out, fan_in = shape[0], shape[1]
    std = np.sqrt(2.0 / (fan_in + fan_out))
    return (jax.random.normal(key, shape, jnp.float32) * std).astype(jnp.float32)


def make_params(key, vocab, E, H, out_size):
    ks = jax.random.split(key, 16)
    zeros4h = jnp.zeros((4 * H,), jnp.float32)

    def lstm_dir(k1, k2, in_dim):
        return (xavier_normal(k1, (4 * H, in_dim)),   # w_ih
                xavier_normal(k2, (4 * H, H)),        # w_hh
                zeros4h, zeros4h)                     # b_ih, b_hh (init_params -> 0)

    return {
        "embedding": xavier_normal(ks[0], (vocab, E)),
        "l0_fwd": lstm_dir(ks[1], ks[2], E),
        "l0_bwd": lstm_dir(ks[3], ks[4], E),
        "l1_fwd": lstm_dir(ks[5], ks[6], 2 * H),
        "l1_bwd": lstm_dir(ks[7], ks[8], 2 * H),
        "dense_w": xavier_normal(ks[9], (100, 2 * H)).T,      # (2H, 100)
        "dense_b": jnp.zeros((100,), jnp.float32),
        "out_w": xavier_normal(ks[10], (out_size, 100)).T,    # (100, out)
        "out_b": jnp.zeros((out_size,), jnp.float32),
    }


# --------------------------- pure-JAX reference ------------------------------

def _lstm_layer_ref(x, w_ih, w_hh, b_ih, b_hh):
    H = w_hh.shape[1]

    def step(carry, x_t):
        h, c = carry
        gates = x_t @ w_ih.T + h @ w_hh.T + b_ih + b_hh
        i, f, g, o = jnp.split(gates, 4)
        i, f, o = jax.nn.sigmoid(i), jax.nn.sigmoid(f), jax.nn.sigmoid(o)
        g = jnp.tanh(g)
        c = f * c + i * g
        h = o * jnp.tanh(c)
        return (h, c), h

    (_, _), hs = lax.scan(step, (jnp.zeros(H), jnp.zeros(H)), x)
    return hs


def net_forward_ref(words, p):
    emb = p["embedding"][words]
    f0 = _lstm_layer_ref(emb, *p["l0_fwd"])
    b0 = _lstm_layer_ref(emb[::-1], *p["l0_bwd"])[::-1]
    x1 = jnp.concatenate([f0, b0], axis=-1)
    f1 = _lstm_layer_ref(x1, *p["l1_fwd"])
    b1 = _lstm_layer_ref(x1[::-1], *p["l1_bwd"])[::-1]
    last = jnp.concatenate([f1[-1:], b1[-1:]], axis=-1)
    h = jnp.maximum(last @ p["dense_w"] + p["dense_b"], 0.0)
    return h @ p["out_w"] + p["out_b"]


# --------------------------------- main ---------------------------------------

if __name__ == "__main__":
    VOCAB, E, H, OUT, T = 50, 32, 32, 8, 8

    key = jax.random.PRNGKey(0)
    k_params, k_words = jax.random.split(key)
    params = make_params(k_params, VOCAB, E, H, OUT)
    words = jax.random.randint(k_words, (T,), 0, VOCAB, dtype=jnp.int32)

    packed = pack_params(params)          # one-time prep, outside the jitted path
    out = net_forward(words, packed)
    out = jax.block_until_ready(out)

    ref = net_forward_ref(words, params)
    assert out.shape == (1, OUT)
    if not np.allclose(np.asarray(out), np.asarray(ref), atol=1e-4, rtol=1e-4):
        raise AssertionError("Pallas output does not match JAX reference")

    print("KERNEL_OK")
</pallas_src>

<mosaic_0001>
module attributes {stable_mosaic.version = 11 : i64} {
  func.func @_net_kernel(%arg0: memref<8xi32, #tpu.memory_space<smem>>, %arg1: memref<50x32xf32, #tpu.memory_space<any>>, %arg2: memref<128x256xf32, #tpu.memory_space<vmem>>, %arg3: memref<352x128xf32, #tpu.memory_space<vmem>>, %arg4: memref<5x256xf32, #tpu.memory_space<vmem>>, %arg5: memref<1x8xf32, #tpu.memory_space<vmem>>, %arg6: memref<8x32xf32, #tpu.memory_space<vmem>>, %arg7: memref<8x64xf32, #tpu.memory_space<vmem>>, %arg8: memref<8x!tpu.dma_semaphore, #tpu.memory_space<semaphore_mem>>) attributes {dimension_semantics = [], scalar_prefetch = 0 : i64, scratch_operands = 3 : i64, tpu.core_type = #tpu.core_type<tc>} {
    %c0 = arith.constant 0 : index
    %0 = memref.load %arg0[%c0] : memref<8xi32, #tpu.memory_space<smem>>
    %c0_i32 = arith.constant 0 : i32
    %c0_i32_0 = arith.constant 0 : i32
    %1 = tpu.memref_slice %arg1[%0, %c0_i32_0] : memref<50x32xf32, #tpu.memory_space<any>> -> memref<1x32xf32, #tpu.memory_space<any>>
    %c0_i32_1 = arith.constant 0 : i32
    %c0_i32_2 = arith.constant 0 : i32
    %2 = tpu.memref_slice %arg6[%c0_i32_1, %c0_i32_2] : memref<8x32xf32, #tpu.memory_space<vmem>> -> memref<1x32xf32, #tpu.memory_space<vmem>>
    %3 = tpu.memref_slice %arg8[%c0_i32] : memref<8x!tpu.dma_semaphore, #tpu.memory_space<semaphore_mem>> -> memref<1x!tpu.dma_semaphore, #tpu.memory_space<semaphore_mem>>
    %4 = tpu.memref_squeeze %3 : memref<1x!tpu.dma_semaphore, #tpu.memory_space<semaphore_mem>> -> memref<!tpu.dma_semaphore, #tpu.memory_space<semaphore_mem>>
    tpu.enqueue_dma source(%1 : memref<1x32xf32, #tpu.memory_space<any>>) target(%2 : memref<1x32xf32, #tpu.memory_space<vmem>>) target_semaphore(%4 : memref<!tpu.dma_semaphore, #tpu.memory_space<semaphore_mem>>)
    %c1 = arith.constant 1 : index
    %5 = memref.load %arg0[%c1] : memref<8xi32, #tpu.memory_space<smem>>
    %c1_i32 = arith.constant 1 : i32
    %c0_i32_3 = arith.constant 0 : i32
    %6 = tpu.memref_slice %arg1[%5, %c0_i32_3] : memref<50x32xf32, #tpu.memory_space<any>> -> memref<1x32xf32, #tpu.memory_space<any>>
    %c1_i32_4 = arith.constant 1 : i32
    %c0_i32_5 = arith.constant 0 : i32
    %7 = tpu.memref_slice %arg6[%c1_i32_4, %c0_i32_5] : memref<8x32xf32, #tpu.memory_space<vmem>> -> memref<1x32xf32, #tpu.memory_space<vmem>>
    %8 = tpu.memref_slice %arg8[%c1_i32] : memref<8x!tpu.dma_semaphore, #tpu.memory_space<semaphore_mem>> -> memref<1x!tpu.dma_semaphore, #tpu.memory_space<semaphore_mem>>
    %9 = tpu.memref_squeeze %8 : memref<1x!tpu.dma_semaphore, #tpu.memory_space<semaphore_mem>> -> memref<!tpu.dma_semaphore, #tpu.memory_space<semaphore_mem>>
    tpu.enqueue_dma source(%6 : memref<1x32xf32, #tpu.memory_space<any>>) target(%7 : memref<1x32xf32, #tpu.memory_space<vmem>>) target_semaphore(%9 : memref<!tpu.dma_semaphore, #tpu.memory_space<semaphore_mem>>)
    %c2 = arith.constant 2 : index
    %10 = memref.load %arg0[%c2] : memref<8xi32, #tpu.memory_space<smem>>
    %c2_i32 = arith.constant 2 : i32
    %c0_i32_6 = arith.constant 0 : i32
    %11 = tpu.memref_slice %arg1[%10, %c0_i32_6] : memref<50x32xf32, #tpu.memory_space<any>> -> memref<1x32xf32, #tpu.memory_space<any>>
    %c2_i32_7 = arith.constant 2 : i32
    %c0_i32_8 = arith.constant 0 : i32
    %12 = tpu.memref_slice %arg6[%c2_i32_7, %c0_i32_8] : memref<8x32xf32, #tpu.memory_space<vmem>> -> memref<1x32xf32, #tpu.memory_space<vmem>>
    %13 = tpu.memref_slice %arg8[%c2_i32] : memref<8x!tpu.dma_semaphore, #tpu.memory_space<semaphore_mem>> -> memref<1x!tpu.dma_semaphore, #tpu.memory_space<semaphore_mem>>
    %14 = tpu.memref_squeeze %13 : memref<1x!tpu.dma_semaphore, #tpu.memory_space<semaphore_mem>> -> memref<!tpu.dma_semaphore, #tpu.memory_space<semaphore_mem>>
    tpu.enqueue_dma source(%11 : memref<1x32xf32, #tpu.memory_space<any>>) target(%12 : memref<1x32xf32, #tpu.memory_space<vmem>>) target_semaphore(%14 : memref<!tpu.dma_semaphore, #tpu.memory_space<semaphore_mem>>)
    %c3 = arith.constant 3 : index
    %15 = memref.load %arg0[%c3] : memref<8xi32, #tpu.memory_space<smem>>
    %c3_i32 = arith.constant 3 : i32
    %c0_i32_9 = arith.constant 0 : i32
    %16 = tpu.memref_slice %arg1[%15, %c0_i32_9] : memref<50x32xf32, #tpu.memory_space<any>> -> memref<1x32xf32, #tpu.memory_space<any>>
    %c3_i32_10 = arith.constant 3 : i32
    %c0_i32_11 = arith.constant 0 : i32
    %17 = tpu.memref_slice %arg6[%c3_i32_10, %c0_i32_11] : memref<8x32xf32, #tpu.memory_space<vmem>> -> memref<1x32xf32, #tpu.memory_space<vmem>>
    %18 = tpu.memref_slice %arg8[%c3_i32] : memref<8x!tpu.dma_semaphore, #tpu.memory_space<semaphore_mem>> -> memref<1x!tpu.dma_semaphore, #tpu.memory_space<semaphore_mem>>
    %19 = tpu.memref_squeeze %18 : memref<1x!tpu.dma_semaphore, #tpu.memory_space<semaphore_mem>> -> memref<!tpu.dma_semaphore, #tpu.memory_space<semaphore_mem>>
    tpu.enqueue_dma source(%16 : memref<1x32xf32, #tpu.memory_space<any>>) target(%17 : memref<1x32xf32, #tpu.memory_space<vmem>>) target_semaphore(%19 : memref<!tpu.dma_semaphore, #tpu.memory_space<semaphore_mem>>)
    %c4 = arith.constant 4 : index
    %20 = memref.load %arg0[%c4] : memref<8xi32, #tpu.memory_space<smem>>
    %c4_i32 = arith.constant 4 : i32
    %c0_i32_12 = arith.constant 0 : i32
    %21 = tpu.memref_slice %arg1[%20, %c0_i32_12] : memref<50x32xf32, #tpu.memory_space<any>> -> memref<1x32xf32, #tpu.memory_space<any>>
    %c4_i32_13 = arith.constant 4 : i32
    %c0_i32_14 = arith.constant 0 : i32
    %22 = tpu.memref_slice %arg6[%c4_i32_13, %c0_i32_14] : memref<8x32xf32, #tpu.memory_space<vmem>> -> memref<1x32xf32, #tpu.memory_space<vmem>>
    %23 = tpu.memref_slice %arg8[%c4_i32] : memref<8x!tpu.dma_semaphore, #tpu.memory_space<semaphore_mem>> -> memref<1x!tpu.dma_semaphore, #tpu.memory_space<semaphore_mem>>
    %24 = tpu.memref_squeeze %23 : memref<1x!tpu.dma_semaphore, #tpu.memory_space<semaphore_mem>> -> memref<!tpu.dma_semaphore, #tpu.memory_space<semaphore_mem>>
    tpu.enqueue_dma source(%21 : memref<1x32xf32, #tpu.memory_space<any>>) target(%22 : memref<1x32xf32, #tpu.memory_space<vmem>>) target_semaphore(%24 : memref<!tpu.dma_semaphore, #tpu.memory_space<semaphore_mem>>)
    %c5 = arith.constant 5 : index
    %25 = memref.load %arg0[%c5] : memref<8xi32, #tpu.memory_space<smem>>
    %c5_i32 = arith.constant 5 : i32
    %c0_i32_15 = arith.constant 0 : i32
    %26 = tpu.memref_slice %arg1[%25, %c0_i32_15] : memref<50x32xf32, #tpu.memory_space<any>> -> memref<1x32xf32, #tpu.memory_space<any>>
    %c5_i32_16 = arith.constant 5 : i32
    %c0_i32_17 = arith.constant 0 : i32
    %27 = tpu.memref_slice %arg6[%c5_i32_16, %c0_i32_17] : memref<8x32xf32, #tpu.memory_space<vmem>> -> memref<1x32xf32, #tpu.memory_space<vmem>>
    %28 = tpu.memref_slice %arg8[%c5_i32] : memref<8x!tpu.dma_semaphore, #tpu.memory_space<semaphore_mem>> -> memref<1x!tpu.dma_semaphore, #tpu.memory_space<semaphore_mem>>
    %29 = tpu.memref_squeeze %28 : memref<1x!tpu.dma_semaphore, #tpu.memory_space<semaphore_mem>> -> memref<!tpu.dma_semaphore, #tpu.memory_space<semaphore_mem>>
    tpu.enqueue_dma source(%26 : memref<1x32xf32, #tpu.memory_space<any>>) target(%27 : memref<1x32xf32, #tpu.memory_space<vmem>>) target_semaphore(%29 : memref<!tpu.dma_semaphore, #tpu.memory_space<semaphore_mem>>)
    %c6 = arith.constant 6 : index
    %30 = memref.load %arg0[%c6] : memref<8xi32, #tpu.memory_space<smem>>
    %c6_i32 = arith.constant 6 : i32
    %c0_i32_18 = arith.constant 0 : i32
    %31 = tpu.memref_slice %arg1[%30, %c0_i32_18] : memref<50x32xf32, #tpu.memory_space<any>> -> memref<1x32xf32, #tpu.memory_space<any>>
    %c6_i32_19 = arith.constant 6 : i32
    %c0_i32_20 = arith.constant 0 : i32
    %32 = tpu.memref_slice %arg6[%c6_i32_19, %c0_i32_20] : memref<8x32xf32, #tpu.memory_space<vmem>> -> memref<1x32xf32, #tpu.memory_space<vmem>>
    %33 = tpu.memref_slice %arg8[%c6_i32] : memref<8x!tpu.dma_semaphore, #tpu.memory_space<semaphore_mem>> -> memref<1x!tpu.dma_semaphore, #tpu.memory_space<semaphore_mem>>
    %34 = tpu.memref_squeeze %33 : memref<1x!tpu.dma_semaphore, #tpu.memory_space<semaphore_mem>> -> memref<!tpu.dma_semaphore, #tpu.memory_space<semaphore_mem>>
    tpu.enqueue_dma source(%31 : memref<1x32xf32, #tpu.memory_space<any>>) target(%32 : memref<1x32xf32, #tpu.memory_space<vmem>>) target_semaphore(%34 : memref<!tpu.dma_semaphore, #tpu.memory_space<semaphore_mem>>)
    %c7 = arith.constant 7 : index
    %35 = memref.load %arg0[%c7] : memref<8xi32, #tpu.memory_space<smem>>
    %c7_i32 = arith.constant 7 : i32
    %c0_i32_21 = arith.constant 0 : i32
    %36 = tpu.memref_slice %arg1[%35, %c0_i32_21] : memref<50x32xf32, #tpu.memory_space<any>> -> memref<1x32xf32, #tpu.memory_space<any>>
    %c7_i32_22 = arith.constant 7 : i32
    %c0_i32_23 = arith.constant 0 : i32
    %37 = tpu.memref_slice %arg6[%c7_i32_22, %c0_i32_23] : memref<8x32xf32, #tpu.memory_space<vmem>> -> memref<1x32xf32, #tpu.memory_space<vmem>>
    %38 = tpu.memref_slice %arg8[%c7_i32] : memref<8x!tpu.dma_semaphore, #tpu.memory_space<semaphore_mem>> -> memref<1x!tpu.dma_semaphore, #tpu.memory_space<semaphore_mem>>
    %39 = tpu.memref_squeeze %38 : memref<1x!tpu.dma_semaphore, #tpu.memory_space<semaphore_mem>> -> memref<!tpu.dma_semaphore, #tpu.memory_space<semaphore_mem>>
    tpu.enqueue_dma source(%36 : memref<1x32xf32, #tpu.memory_space<any>>) target(%37 : memref<1x32xf32, #tpu.memory_space<vmem>>) target_semaphore(%39 : memref<!tpu.dma_semaphore, #tpu.memory_space<semaphore_mem>>)
    %c0_i32_24 = arith.constant 0 : i32
    %c0_i32_25 = arith.constant 0 : i32
    %40 = tpu.memref_slice %arg1[%0, %c0_i32_25] : memref<50x32xf32, #tpu.memory_space<any>> -> memref<1x32xf32, #tpu.memory_space<any>>
    %c0_i32_26 = arith.constant 0 : i32
    %c0_i32_27 = arith.constant 0 : i32
    %41 = tpu.memref_slice %arg6[%c0_i32_26, %c0_i32_27] : memref<8x32xf32, #tpu.memory_space<vmem>> -> memref<1x32xf32, #tpu.memory_space<vmem>>
    %42 = tpu.memref_slice %arg8[%c0_i32_24] : memref<8x!tpu.dma_semaphore, #tpu.memory_space<semaphore_mem>> -> memref<1x!tpu.dma_semaphore, #tpu.memory_space<semaphore_mem>>
    %43 = tpu.memref_squeeze %42 : memref<1x!tpu.dma_semaphore, #tpu.memory_space<semaphore_mem>> -> memref<!tpu.dma_semaphore, #tpu.memory_space<semaphore_mem>>
    tpu.wait_dma2 semaphore(%43 : memref<!tpu.dma_semaphore, #tpu.memory_space<semaphore_mem>>) src(%40 : memref<1x32xf32, #tpu.memory_space<any>>) dst(%41 : memref<1x32xf32, #tpu.memory_space<vmem>>)
    %c1_i32_28 = arith.constant 1 : i32
    %c0_i32_29 = arith.constant 0 : i32
    %44 = tpu.memref_slice %arg1[%5, %c0_i32_29] : memref<50x32xf32, #tpu.memory_space<any>> -> memref<1x32xf32, #tpu.memory_space<any>>
    %c1_i32_30 = arith.constant 1 : i32
    %c0_i32_31 = arith.constant 0 : i32
    %45 = tpu.memref_slice %arg6[%c1_i32_30, %c0_i32_31] : memref<8x32xf32, #tpu.memory_space<vmem>> -> memref<1x32xf32, #tpu.memory_space<vmem>>
    %46 = tpu.memref_slice %arg8[%c1_i32_28] : memref<8x!tpu.dma_semaphore, #tpu.memory_space<semaphore_mem>> -> memref<1x!tpu.dma_semaphore, #tpu.memory_space<semaphore_mem>>
    %47 = tpu.memref_squeeze %46 : memref<1x!tpu.dma_semaphore, #tpu.memory_space<semaphore_mem>> -> memref<!tpu.dma_semaphore, #tpu.memory_space<semaphore_mem>>
    tpu.wait_dma2 semaphore(%47 : memref<!tpu.dma_semaphore, #tpu.memory_space<semaphore_mem>>) src(%44 : memref<1x32xf32, #tpu.memory_space<any>>) dst(%45 : memref<1x32xf32, #tpu.memory_space<vmem>>)
    %c2_i32_32 = arith.constant 2 : i32
    %c0_i32_33 = arith.constant 0 : i32
    %48 = tpu.memref_slice %arg1[%10, %c0_i32_33] : memref<50x32xf32, #tpu.memory_space<any>> -> memref<1x32xf32, #tpu.memory_space<any>>
    %c2_i32_34 = arith.constant 2 : i32
    %c0_i32_35 = arith.constant 0 : i32
    %49 = tpu.memref_slice %arg6[%c2_i32_34, %c0_i32_35] : memref<8x32xf32, #tpu.memory_space<vmem>> -> memref<1x32xf32, #tpu.memory_space<vmem>>
    %50 = tpu.memref_slice %arg8[%c2_i32_32] : memref<8x!tpu.dma_semaphore, #tpu.memory_space<semaphore_mem>> -> memref<1x!tpu.dma_semaphore, #tpu.memory_space<semaphore_mem>>
    %51 = tpu.memref_squeeze %50 : memref<1x!tpu.dma_semaphore, #tpu.memory_space<semaphore_mem>> -> memref<!tpu.dma_semaphore, #tpu.memory_space<semaphore_mem>>
    tpu.wait_dma2 semaphore(%51 : memref<!tpu.dma_semaphore, #tpu.memory_space<semaphore_mem>>) src(%48 : memref<1x32xf32, #tpu.memory_space<any>>) dst(%49 : memref<1x32xf32, #tpu.memory_space<vmem>>)
    %c3_i32_36 = arith.constant 3 : i32
    %c0_i32_37 = arith.constant 0 : i32
    %52 = tpu.memref_slice %arg1[%15, %c0_i32_37] : memref<50x32xf32, #tpu.memory_space<any>> -> memref<1x32xf32, #tpu.memory_space<any>>
    %c3_i32_38 = arith.constant 3 : i32
    %c0_i32_39 = arith.constant 0 : i32
    %53 = tpu.memref_slice %arg6[%c3_i32_38, %c0_i32_39] : memref<8x32xf32, #tpu.memory_space<vmem>> -> memref<1x32xf32, #tpu.memory_space<vmem>>
    %54 = tpu.memref_slice %arg8[%c3_i32_36] : memref<8x!tpu.dma_semaphore, #tpu.memory_space<semaphore_mem>> -> memref<1x!tpu.dma_semaphore, #tpu.memory_space<semaphore_mem>>
    %55 = tpu.memref_squeeze %54 : memref<1x!tpu.dma_semaphore, #tpu.memory_space<semaphore_mem>> -> memref<!tpu.dma_semaphore, #tpu.memory_space<semaphore_mem>>
    tpu.wait_dma2 semaphore(%55 : memref<!tpu.dma_semaphore, #tpu.memory_space<semaphore_mem>>) src(%52 : memref<1x32xf32, #tpu.memory_space<any>>) dst(%53 : memref<1x32xf32, #tpu.memory_space<vmem>>)
    %c4_i32_40 = arith.constant 4 : i32
    %c0_i32_41 = arith.constant 0 : i32
    %56 = tpu.memref_slice %arg1[%20, %c0_i32_41] : memref<50x32xf32, #tpu.memory_space<any>> -> memref<1x32xf32, #tpu.memory_space<any>>
    %c4_i32_42 = arith.constant 4 : i32
    %c0_i32_43 = arith.constant 0 : i32
    %57 = tpu.memref_slice %arg6[%c4_i32_42, %c0_i32_43] : memref<8x32xf32, #tpu.memory_space<vmem>> -> memref<1x32xf32, #tpu.memory_space<vmem>>
    %58 = tpu.memref_slice %arg8[%c4_i32_40] : memref<8x!tpu.dma_semaphore, #tpu.memory_space<semaphore_mem>> -> memref<1x!tpu.dma_semaphore, #tpu.memory_space<semaphore_mem>>
    %59 = tpu.memref_squeeze %58 : memref<1x!tpu.dma_semaphore, #tpu.memory_space<semaphore_mem>> -> memref<!tpu.dma_semaphore, #tpu.memory_space<semaphore_mem>>
    tpu.wait_dma2 semaphore(%59 : memref<!tpu.dma_semaphore, #tpu.memory_space<semaphore_mem>>) src(%56 : memref<1x32xf32, #tpu.memory_space<any>>) dst(%57 : memref<1x32xf32, #tpu.memory_space<vmem>>)
    %c5_i32_44 = arith.constant 5 : i32
    %c0_i32_45 = arith.constant 0 : i32
    %60 = tpu.memref_slice %arg1[%25, %c0_i32_45] : memref<50x32xf32, #tpu.memory_space<any>> -> memref<1x32xf32, #tpu.memory_space<any>>
    %c5_i32_46 = arith.constant 5 : i32
    %c0_i32_47 = arith.constant 0 : i32
    %61 = tpu.memref_slice %arg6[%c5_i32_46, %c0_i32_47] : memref<8x32xf32, #tpu.memory_space<vmem>> -> memref<1x32xf32, #tpu.memory_space<vmem>>
    %62 = tpu.memref_slice %arg8[%c5_i32_44] : memref<8x!tpu.dma_semaphore, #tpu.memory_space<semaphore_mem>> -> memref<1x!tpu.dma_semaphore, #tpu.memory_space<semaphore_mem>>
    %63 = tpu.memref_squeeze %62 : memref<1x!tpu.dma_semaphore, #tpu.memory_space<semaphore_mem>> -> memref<!tpu.dma_semaphore, #tpu.memory_space<semaphore_mem>>
    tpu.wait_dma2 semaphore(%63 : memref<!tpu.dma_semaphore, #tpu.memory_space<semaphore_mem>>) src(%60 : memref<1x32xf32, #tpu.memory_space<any>>) dst(%61 : memref<1x32xf32, #tpu.memory_space<vmem>>)
    %c6_i32_48 = arith.constant 6 : i32
    %c0_i32_49 = arith.constant 0 : i32
    %64 = tpu.memref_slice %arg1[%30, %c0_i32_49] : memref<50x32xf32, #tpu.memory_space<any>> -> memref<1x32xf32, #tpu.memory_space<any>>
    %c6_i32_50 = arith.constant 6 : i32
    %c0_i32_51 = arith.constant 0 : i32
    %65 = tpu.memref_slice %arg6[%c6_i32_50, %c0_i32_51] : memref<8x32xf32, #tpu.memory_space<vmem>> -> memref<1x32xf32, #tpu.memory_space<vmem>>
    %66 = tpu.memref_slice %arg8[%c6_i32_48] : memref<8x!tpu.dma_semaphore, #tpu.memory_space<semaphore_mem>> -> memref<1x!tpu.dma_semaphore, #tpu.memory_space<semaphore_mem>>
    %67 = tpu.memref_squeeze %66 : memref<1x!tpu.dma_semaphore, #tpu.memory_space<semaphore_mem>> -> memref<!tpu.dma_semaphore, #tpu.memory_space<semaphore_mem>>
    tpu.wait_dma2 semaphore(%67 : memref<!tpu.dma_semaphore, #tpu.memory_space<semaphore_mem>>) src(%64 : memref<1x32xf32, #tpu.memory_space<any>>) dst(%65 : memref<1x32xf32, #tpu.memory_space<vmem>>)
    %c7_i32_52 = arith.constant 7 : i32
    %c0_i32_53 = arith.constant 0 : i32
    %68 = tpu.memref_slice %arg1[%35, %c0_i32_53] : memref<50x32xf32, #tpu.memory_space<any>> -> memref<1x32xf32, #tpu.memory_space<any>>
    %c7_i32_54 = arith.constant 7 : i32
    %c0_i32_55 = arith.constant 0 : i32
    %69 = tpu.memref_slice %arg6[%c7_i32_54, %c0_i32_55] : memref<8x32xf32, #tpu.memory_space<vmem>> -> memref<1x32xf32, #tpu.memory_space<vmem>>
    %70 = tpu.memref_slice %arg8[%c7_i32_52] : memref<8x!tpu.dma_semaphore, #tpu.memory_space<semaphore_mem>> -> memref<1x!tpu.dma_semaphore, #tpu.memory_space<semaphore_mem>>
    %71 = tpu.memref_squeeze %70 : memref<1x!tpu.dma_semaphore, #tpu.memory_space<semaphore_mem>> -> memref<!tpu.dma_semaphore, #tpu.memory_space<semaphore_mem>>
    tpu.wait_dma2 semaphore(%71 : memref<!tpu.dma_semaphore, #tpu.memory_space<semaphore_mem>>) src(%68 : memref<1x32xf32, #tpu.memory_space<any>>) dst(%69 : memref<1x32xf32, #tpu.memory_space<vmem>>)
    %c0_56 = arith.constant 0 : index
    %c0_57 = arith.constant 0 : index
    %72 = vector.load %arg6[%c0_56, %c0_57] : memref<8x32xf32, #tpu.memory_space<vmem>>, vector<8x32xf32>
    %73 = vector.extract_strided_slice %72 {offsets = [7, 0], sizes = [1, 32], strides = [1, 1]} : vector<8x32xf32> to vector<1x32xf32>
    %74 = vector.extract_strided_slice %72 {offsets = [6, 0], sizes = [1, 32], strides = [1, 1]} : vector<8x32xf32> to vector<1x32xf32>
    %75 = vector.extract_strided_slice %72 {offsets = [5, 0], sizes = [1, 32], strides = [1, 1]} : vector<8x32xf32> to vector<1x32xf32>
    %76 = vector.extract_strided_slice %72 {offsets = [4, 0], sizes = [1, 32], strides = [1, 1]} : vector<8x32xf32> to vector<1x32xf32>
    %77 = vector.extract_strided_slice %72 {offsets = [3, 0], sizes = [1, 32], strides = [1, 1]} : vector<8x32xf32> to vector<1x32xf32>
    %78 = vector.extract_strided_slice %72 {offsets = [2, 0], sizes = [1, 32], strides = [1, 1]} : vector<8x32xf32> to vector<1x32xf32>
    %79 = vector.extract_strided_slice %72 {offsets = [1, 0], sizes = [1, 32], strides = [1, 1]} : vector<8x32xf32> to vector<1x32xf32>
    %80 = vector.extract_strided_slice %72 {offsets = [0, 0], sizes = [1, 32], strides = [1, 1]} : vector<8x32xf32> to vector<1x32xf32>
    %81 = tpu.concatenate %73, %74, %75, %76, %77, %78, %79, %80 in 0 : vector<1x32xf32>, vector<1x32xf32>, vector<1x32xf32>, vector<1x32xf32>, vector<1x32xf32>, vector<1x32xf32>, vector<1x32xf32>, vector<1x32xf32> -> vector<8x32xf32>
    %82 = tpu.concatenate %72, %81 in 1 : vector<8x32xf32>, vector<8x32xf32> -> vector<8x64xf32>
    %83 = tpu.iota {dimensions = array<i32: 1>} : vector<1x256xi32>
    %c128_i32 = arith.constant 128 : i32
    %84 = vector.broadcast %c128_i32 : i32 to vector<1x256xi32>
    %85 = arith.cmpi sge, %83, %84 : vector<1x256xi32>
    %c192_i32 = arith.constant 192 : i32
    %86 = vector.broadcast %c192_i32 : i32 to vector<1x256xi32>
    %87 = arith.cmpi slt, %83, %86 : vector<1x256xi32>
    %88 = arith.andi %85, %87 : vector<1x256xi1>
    %cst = arith.constant 2.000000e+00 : f32
    %cst_58 = arith.constant 1.000000e+00 : f32
    %89 = vector.broadcast %cst : f32 to vector<1x256xf32>
    %90 = vector.broadcast %cst_58 : f32 to vector<1x256xf32>
    %91 = arith.select %88, %89, %90 : vector<1x256xi1>, vector<1x256xf32>
    %92 = tpu.iota {dimensions = array<i32: 1>} : vector<1x128xi32>
    %c64_i32 = arith.constant 64 : i32
    %93 = vector.broadcast %c64_i32 : i32 to vector<1x128xi32>
    %94 = arith.cmpi sge, %92, %93 : vector<1x128xi32>
    %c96_i32 = arith.constant 96 : i32
    %95 = vector.broadcast %c96_i32 : i32 to vector<1x128xi32>
    %96 = arith.cmpi slt, %92, %95 : vector<1x128xi32>
    %97 = arith.andi %94, %96 : vector<1x128xi1>
    %cst_59 = arith.constant 2.000000e+00 : f32
    %cst_60 = arith.constant 1.000000e+00 : f32
    %98 = vector.broadcast %cst_59 : f32 to vector<1x128xf32>
    %99 = vector.broadcast %cst_60 : f32 to vector<1x128xf32>
    %100 = arith.select %97, %98, %99 : vector<1x128xi1>, vector<1x128xf32>
    %c0_61 = arith.constant 0 : index
    %c0_62 = arith.constant 0 : index
    %101 = vector.load %arg4[%c0_61, %c0_62] : memref<5x256xf32, #tpu.memory_space<vmem>>, vector<5x256xf32>
    %102 = vector.extract_strided_slice %101 {offsets = [0, 0], sizes = [1, 256], strides = [1, 1]} : vector<5x256xf32> to vector<1x256xf32>
    %103 = vector.extract_strided_slice %101 {offsets = [1, 0], sizes = [1, 128], strides = [1, 1]} : vector<5x256xf32> to vector<1x128xf32>
    %104 = vector.extract_strided_slice %101 {offsets = [2, 0], sizes = [1, 128], strides = [1, 1]} : vector<5x256xf32> to vector<1x128xf32>
    %105 = vector.extract_strided_slice %101 {offsets = [3, 0], sizes = [1, 128], strides = [1, 1]} : vector<5x256xf32> to vector<1x128xf32>
    %106 = vector.extract_strided_slice %101 {offsets = [4, 0], sizes = [1, 8], strides = [1, 1]} : vector<5x256xf32> to vector<1x8xf32>
    %c0_63 = arith.constant 0 : index
    %c0_64 = arith.constant 0 : index
    %107 = vector.load %arg2[%c0_63, %c0_64] : memref<128x256xf32, #tpu.memory_space<vmem>>, vector<64x256xf32>
    %c64 = arith.constant 64 : index
    %c0_65 = arith.constant 0 : index
    %108 = vector.load %arg2[%c64, %c0_65] : memref<128x256xf32, #tpu.memory_space<vmem>>, vector<64x256xf32>
    %cst_66 = arith.constant dense<0.000000e+00> : vector<8x256xf32>
    %109 = tpu.matmul %82, %107, %cst_66 {dimension_numbers = #tpu.dot_dimension_numbers<[1], [0], [0], [1], [0, 0, 1, 1], [], []>} : vector<8x64xf32>, vector<64x256xf32>, vector<8x256xf32> -> vector<8x256xf32>
    %110 = vector.broadcast %102 : vector<1x256xf32> to vector<8x256xf32>
    %111 = arith.addf %109, %110 : vector<8x256xf32>
    %cst_67 = arith.constant 0.000000e+00 : f32
    %112 = vector.broadcast %cst_67 : f32 to vector<1x64xf32>
    %cst_68 = arith.constant 0.000000e+00 : f32
    %113 = vector.broadcast %cst_68 : f32 to vector<1x64xf32>
    %114 = vector.extract_strided_slice %111 {offsets = [0, 0], sizes = [1, 256], strides = [1, 1]} : vector<8x256xf32> to vector<1x256xf32>
    %cst_69 = arith.constant dense<0.000000e+00> : vector<1x256xf32>
    %115 = tpu.matmul %112, %108, %cst_69 {dimension_numbers = #tpu.dot_dimension_numbers<[1], [0], [0], [1], [0, 0, 1, 1], [], []>} : vector<1x64xf32>, vector<64x256xf32>, vector<1x256xf32> -> vector<1x256xf32>
    %116 = arith.addf %114, %115 : vector<1x256xf32>
    %117 = arith.mulf %116, %91 : vector<1x256xf32>
    %118 = arith.negf %117 : vector<1x256xf32>
    %119 = math.exp %118 : vector<1x256xf32>
    %cst_70 = arith.constant 1.000000e+00 : f32
    %120 = vector.broadcast %cst_70 : f32 to vector<1x256xf32>
    %121 = arith.addf %120, %119 : vector<1x256xf32>
    %122 = arith.divf %120, %121 : vector<1x256xf32>
    %123 = vector.extract_strided_slice %122 {offsets = [0, 0], sizes = [1, 64], strides = [1, 1]} : vector<1x256xf32> to vector<1x64xf32>
    %124 = vector.extract_strided_slice %122 {offsets = [0, 64], sizes = [1, 64], strides = [1, 1]} : vector<1x256xf32> to vector<1x64xf32>
    %125 = vector.extract_strided_slice %122 {offsets = [0, 128], sizes = [1, 64], strides = [1, 1]} : vector<1x256xf32> to vector<1x64xf32>
    %cst_71 = arith.constant 2.000000e+00 : f32
    %126 = vector.broadcast %cst_71 : f32 to vector<1x64xf32>
    %127 = arith.mulf %126, %125 : vector<1x64xf32>
    %cst_72 = arith.constant 1.000000e+00 : f32
    %128 = vector.broadcast %cst_72 : f32 to vector<1x64xf32>
    %129 = arith.subf %127, %128 : vector<1x64xf32>
    %130 = vector.extract_strided_slice %122 {offsets = [0, 192], sizes = [1, 64], strides = [1, 1]} : vector<1x256xf32> to vector<1x64xf32>
    %131 = arith.mulf %124, %113 : vector<1x64xf32>
    %132 = arith.mulf %123, %129 : vector<1x64xf32>
    %133 = arith.addf %131, %132 : vector<1x64xf32>
    %134 = math.tanh %133 : vector<1x64xf32>
    %135 = arith.mulf %130, %134 : vector<1x64xf32>
    %136 = vector.extract_strided_slice %135 {offsets = [0, 0], sizes = [1, 32], strides = [1, 1]} : vector<1x64xf32> to vector<1x32xf32>
    %c0_73 = arith.constant 0 : index
    %c0_74 = arith.constant 0 : index
    %137 = vector.load %arg7[%c0_73, %c0_74] : memref<8x64xf32, #tpu.memory_space<vmem>>, vector<1x32xf32>
    tpu.vector_store %arg7[%c0_73, %c0_74], %136 {strides = array<i32>} : memref<8x64xf32, #tpu.memory_space<vmem>>, vector<1x32xf32>,
    %138 = vector.extract_strided_slice %135 {offsets = [0, 32], sizes = [1, 32], strides = [1, 1]} : vector<1x64xf32> to vector<1x32xf32>
    %c7_75 = arith.constant 7 : index
    %c32 = arith.constant 32 : index
    %139 = vector.load %arg7[%c7_75, %c32] : memref<8x64xf32, #tpu.memory_space<vmem>>, vector<1x32xf32>
    tpu.vector_store %arg7[%c7_75, %c32], %138 {strides = array<i32>} : memref<8x64xf32, #tpu.memory_space<vmem>>, vector<1x32xf32>,
    %140 = vector.extract_strided_slice %111 {offsets = [1, 0], sizes = [1, 256], strides = [1, 1]} : vector<8x256xf32> to vector<1x256xf32>
    %cst_76 = arith.constant dense<0.000000e+00> : vector<1x256xf32>
    %141 = tpu.matmul %135, %108, %cst_76 {dimension_numbers = #tpu.dot_dimension_numbers<[1], [0], [0], [1], [0, 0, 1, 1], [], []>} : vector<1x64xf32>, vector<64x256xf32>, vector<1x256xf32> -> vector<1x256xf32>
    %142 = arith.addf %140, %141 : vector<1x256xf32>
    %143 = arith.mulf %142, %91 : vector<1x256xf32>
    %144 = arith.negf %143 : vector<1x256xf32>
    %145 = math.exp %144 : vector<1x256xf32>
    %cst_77 = arith.constant 1.000000e+00 : f32
    %146 = vector.broadcast %cst_77 : f32 to vector<1x256xf32>
    %147 = arith.addf %146, %145 : vector<1x256xf32>
    %148 = arith.divf %146, %147 : vector<1x256xf32>
    %149 = vector.extract_strided_slice %148 {offsets = [0, 0], sizes = [1, 64], strides = [1, 1]} : vector<1x256xf32> to vector<1x64xf32>
    %150 = vector.extract_strided_slice %148 {offsets = [0, 64], sizes = [1, 64], strides = [1, 1]} : vector<1x256xf32> to vector<1x64xf32>
    %151 = vector.extract_strided_slice %148 {offsets = [0, 128], sizes = [1, 64], strides = [1, 1]} : vector<1x256xf32> to vector<1x64xf32>
    %cst_78 = arith.constant 2.000000e+00 : f32
    %152 = vector.broadcast %cst_78 : f32 to vector<1x64xf32>
    %153 = arith.mulf %152, %151 : vector<1x64xf32>
    %cst_79 = arith.constant 1.000000e+00 : f32
    %154 = vector.broadcast %cst_79 : f32 to vector<1x64xf32>
    %155 = arith.subf %153, %154 : vector<1x64xf32>
    %156 = vector.extract_strided_slice %148 {offsets = [0, 192], sizes = [1, 64], strides = [1, 1]} : vector<1x256xf32> to vector<1x64xf32>
    %157 = arith.mulf %150, %133 : vector<1x64xf32>
    %158 = arith.mulf %149, %155 : vector<1x64xf32>
    %159 = arith.addf %157, %158 : vector<1x64xf32>
    %160 = math.tanh %159 : vector<1x64xf32>
    %161 = arith.mulf %156, %160 : vector<1x64xf32>
    %162 = vector.extract_strided_slice %161 {offsets = [0, 0], sizes = [1, 32], strides = [1, 1]} : vector<1x64xf32> to vector<1x32xf32>
    %c1_80 = arith.constant 1 : index
    %c0_81 = arith.constant 0 : index
    %163 = vector.load %arg7[%c1_80, %c0_81] : memref<8x64xf32, #tpu.memory_space<vmem>>, vector<1x32xf32>
    tpu.vector_store %arg7[%c1_80, %c0_81], %162 {strides = array<i32>} : memref<8x64xf32, #tpu.memory_space<vmem>>, vector<1x32xf32>,
    %164 = vector.extract_strided_slice %161 {offsets = [0, 32], sizes = [1, 32], strides = [1, 1]} : vector<1x64xf32> to vector<1x32xf32>
    %c6_82 = arith.constant 6 : index
    %c32_83 = arith.constant 32 : index
    %165 = vector.load %arg7[%c6_82, %c32_83] : memref<8x64xf32, #tpu.memory_space<vmem>>, vector<1x32xf32>
    tpu.vector_store %arg7[%c6_82, %c32_83], %164 {strides = array<i32>} : memref<8x64xf32, #tpu.memory_space<vmem>>, vector<1x32xf32>,
    %166 = vector.extract_strided_slice %111 {offsets = [2, 0], sizes = [1, 256], strides = [1, 1]} : vector<8x256xf32> to vector<1x256xf32>
    %cst_84 = arith.constant dense<0.000000e+00> : vector<1x256xf32>
    %167 = tpu.matmul %161, %108, %cst_84 {dimension_numbers = #tpu.dot_dimension_numbers<[1], [0], [0], [1], [0, 0, 1, 1], [], []>} : vector<1x64xf32>, vector<64x256xf32>, vector<1x256xf32> -> vector<1x256xf32>
    %168 = arith.addf %166, %167 : vector<1x256xf32>
    %169 = arith.mulf %168, %91 : vector<1x256xf32>
    %170 = arith.negf %169 : vector<1x256xf32>
    %171 = math.exp %170 : vector<1x256xf32>
    %cst_85 = arith.constant 1.000000e+00 : f32
    %172 = vector.broadcast %cst_85 : f32 to vector<1x256xf32>
    %173 = arith.addf %172, %171 : vector<1x256xf32>
    %174 = arith.divf %172, %173 : vector<1x256xf32>
    %175 = vector.extract_strided_slice %174 {offsets = [0, 0], sizes = [1, 64], strides = [1, 1]} : vector<1x256xf32> to vector<1x64xf32>
    %176 = vector.extract_strided_slice %174 {offsets = [0, 64], sizes = [1, 64], strides = [1, 1]} : vector<1x256xf32> to vector<1x64xf32>
    %177 = vector.extract_strided_slice %174 {offsets = [0, 128], sizes = [1, 64], strides = [1, 1]} : vector<1x256xf32> to vector<1x64xf32>
    %cst_86 = arith.constant 2.000000e+00 : f32
    %178 = vector.broadcast %cst_86 : f32 to vector<1x64xf32>
    %179 = arith.mulf %178, %177 : vector<1x64xf32>
    %cst_87 = arith.constant 1.000000e+00 : f32
    %180 = vector.broadcast %cst_87 : f32 to vector<1x64xf32>
    %181 = arith.subf %179, %180 : vector<1x64xf32>
    %182 = vector.extract_strided_slice %174 {offsets = [0, 192], sizes = [1, 64], strides = [1, 1]} : vector<1x256xf32> to vector<1x64xf32>
    %183 = arith.mulf %176, %159 : vector<1x64xf32>
    %184 = arith.mulf %175, %181 : vector<1x64xf32>
    %185 = arith.addf %183, %184 : vector<1x64xf32>
    %186 = math.tanh %185 : vector<1x64xf32>
    %187 = arith.mulf %182, %186 : vector<1x64xf32>
    %188 = vector.extract_strided_slice %187 {offsets = [0, 0], sizes = [1, 32], strides = [1, 1]} : vector<1x64xf32> to vector<1x32xf32>
    %c2_88 = arith.constant 2 : index
    %c0_89 = arith.constant 0 : index
    %189 = vector.load %arg7[%c2_88, %c0_89] : memref<8x64xf32, #tpu.memory_space<vmem>>, vector<1x32xf32>
    tpu.vector_store %arg7[%c2_88, %c0_89], %188 {strides = array<i32>} : memref<8x64xf32, #tpu.memory_space<vmem>>, vector<1x32xf32>,
    %190 = vector.extract_strided_slice %187 {offsets = [0, 32], sizes = [1, 32], strides = [1, 1]} : vector<1x64xf32> to vector<1x32xf32>
    %c5_90 = arith.constant 5 : index
    %c32_91 = arith.constant 32 : index
    %191 = vector.load %arg7[%c5_90, %c32_91] : memref<8x64xf32, #tpu.memory_space<vmem>>, vector<1x32xf32>
    tpu.vector_store %arg7[%c5_90, %c32_91], %190 {strides = array<i32>} : memref<8x64xf32, #tpu.memory_space<vmem>>, vector<1x32xf32>,
    %192 = vector.extract_strided_slice %111 {offsets = [3, 0], sizes = [1, 256], strides = [1, 1]} : vector<8x256xf32> to vector<1x256xf32>
    %cst_92 = arith.constant dense<0.000000e+00> : vector<1x256xf32>
    %193 = tpu.matmul %187, %108, %cst_92 {dimension_numbers = #tpu.dot_dimension_numbers<[1], [0], [0], [1], [0, 0, 1, 1], [], []>} : vector<1x64xf32>, vector<64x256xf32>, vector<1x256xf32> -> vector<1x256xf32>
    %194 = arith.addf %192, %193 : vector<1x256xf32>
    %195 = arith.mulf %194, %91 : vector<1x256xf32>
    %196 = arith.negf %195 : vector<1x256xf32>
    %197 = math.exp %196 : vector<1x256xf32>
    %cst_93 = arith.constant 1.000000e+00 : f32
    %198 = vector.broadcast %cst_93 : f32 to vector<1x256xf32>
    %199 = arith.addf %198, %197 : vector<1x256xf32>
    %200 = arith.divf %198, %199 : vector<1x256xf32>
    %201 = vector.extract_strided_slice %200 {offsets = [0, 0], sizes = [1, 64], strides = [1, 1]} : vector<1x256xf32> to vector<1x64xf32>
    %202 = vector.extract_strided_slice %200 {offsets = [0, 64], sizes = [1, 64], strides = [1, 1]} : vector<1x256xf32> to vector<1x64xf32>
    %203 = vector.extract_strided_slice %200 {offsets = [0, 128], sizes = [1, 64], strides = [1, 1]} : vector<1x256xf32> to vector<1x64xf32>
    %cst_94 = arith.constant 2.000000e+00 : f32
    %204 = vector.broadcast %cst_94 : f32 to vector<1x64xf32>
    %205 = arith.mulf %204, %203 : vector<1x64xf32>
    %cst_95 = arith.constant 1.000000e+00 : f32
    %206 = vector.broadcast %cst_95 : f32 to vector<1x64xf32>
    %207 = arith.subf %205, %206 : vector<1x64xf32>
    %208 = vector.extract_strided_slice %200 {offsets = [0, 192], sizes = [1, 64], strides = [1, 1]} : vector<1x256xf32> to vector<1x64xf32>
    %209 = arith.mulf %202, %185 : vector<1x64xf32>
    %210 = arith.mulf %201, %207 : vector<1x64xf32>
    %211 = arith.addf %209, %210 : vector<1x64xf32>
    %212 = math.tanh %211 : vector<1x64xf32>
    %213 = arith.mulf %208, %212 : vector<1x64xf32>
    %214 = vector.extract_strided_slice %213 {offsets = [0, 0], sizes = [1, 32], strides = [1, 1]} : vector<1x64xf32> to vector<1x32xf32>
    %c3_96 = arith.constant 3 : index
    %c0_97 = arith.constant 0 : index
    %215 = vector.load %arg7[%c3_96, %c0_97] : memref<8x64xf32, #tpu.memory_space<vmem>>, vector<1x32xf32>
    tpu.vector_store %arg7[%c3_96, %c0_97], %214 {strides = array<i32>} : memref<8x64xf32, #tpu.memory_space<vmem>>, vector<1x32xf32>,
    %216 = vector.extract_strided_slice %213 {offsets = [0, 32], sizes = [1, 32], strides = [1, 1]} : vector<1x64xf32> to vector<1x32xf32>
    %c4_98 = arith.constant 4 : index
    %c32_99 = arith.constant 32 : index
    %217 = vector.load %arg7[%c4_98, %c32_99] : memref<8x64xf32, #tpu.memory_space<vmem>>, vector<1x32xf32>
    tpu.vector_store %arg7[%c4_98, %c32_99], %216 {strides = array<i32>} : memref<8x64xf32, #tpu.memory_space<vmem>>, vector<1x32xf32>,
    %218 = vector.extract_strided_slice %111 {offsets = [4, 0], sizes = [1, 256], strides = [1, 1]} : vector<8x256xf32> to vector<1x256xf32>
    %cst_100 = arith.constant dense<0.000000e+00> : vector<1x256xf32>
    %219 = tpu.matmul %213, %108, %cst_100 {dimension_numbers = #tpu.dot_dimension_numbers<[1], [0], [0], [1], [0, 0, 1, 1], [], []>} : vector<1x64xf32>, vector<64x256xf32>, vector<1x256xf32> -> vector<1x256xf32>
    %220 = arith.addf %218, %219 : vector<1x256xf32>
    %221 = arith.mulf %220, %91 : vector<1x256xf32>
    %222 = arith.negf %221 : vector<1x256xf32>
    %223 = math.exp %222 : vector<1x256xf32>
    %cst_101 = arith.constant 1.000000e+00 : f32
    %224 = vector.broadcast %cst_101 : f32 to vector<1x256xf32>
    %225 = arith.addf %224, %223 : vector<1x256xf32>
    %226 = arith.divf %224, %225 : vector<1x256xf32>
    %227 = vector.extract_strided_slice %226 {offsets = [0, 0], sizes = [1, 64], strides = [1, 1]} : vector<1x256xf32> to vector<1x64xf32>
    %228 = vector.extract_strided_slice %226 {offsets = [0, 64], sizes = [1, 64], strides = [1, 1]} : vector<1x256xf32> to vector<1x64xf32>
    %229 = vector.extract_strided_slice %226 {offsets = [0, 128], sizes = [1, 64], strides = [1, 1]} : vector<1x256xf32> to vector<1x64xf32>
    %cst_102 = arith.constant 2.000000e+00 : f32
    %230 = vector.broadcast %cst_102 : f32 to vector<1x64xf32>
    %231 = arith.mulf %230, %229 : vector<1x64xf32>
    %cst_103 = arith.constant 1.000000e+00 : f32
    %232 = vector.broadcast %cst_103 : f32 to vector<1x64xf32>
    %233 = arith.subf %231, %232 : vector<1x64xf32>
    %234 = vector.extract_strided_slice %226 {offsets = [0, 192], sizes = [1, 64], strides = [1, 1]} : vector<1x256xf32> to vector<1x64xf32>
    %235 = arith.mulf %228, %211 : vector<1x64xf32>
    %236 = arith.mulf %227, %233 : vector<1x64xf32>
    %237 = arith.addf %235, %236 : vector<1x64xf32>
    %238 = math.tanh %237 : vector<1x64xf32>
    %239 = arith.mulf %234, %238 : vector<1x64xf32>
    %240 = vector.extract_strided_slice %239 {offsets = [0, 0], sizes = [1, 32], strides = [1, 1]} : vector<1x64xf32> to vector<1x32xf32>
    %c4_104 = arith.constant 4 : index
    %c0_105 = arith.constant 0 : index
    %241 = vector.load %arg7[%c4_104, %c0_105] : memref<8x64xf32, #tpu.memory_space<vmem>>, vector<1x32xf32>
    tpu.vector_store %arg7[%c4_104, %c0_105], %240 {strides = array<i32>} : memref<8x64xf32, #tpu.memory_space<vmem>>, vector<1x32xf32>,
    %242 = vector.extract_strided_slice %239 {offsets = [0, 32], sizes = [1, 32], strides = [1, 1]} : vector<1x64xf32> to vector<1x32xf32>
    %c3_106 = arith.constant 3 : index
    %c32_107 = arith.constant 32 : index
    %243 = vector.load %arg7[%c3_106, %c32_107] : memref<8x64xf32, #tpu.memory_space<vmem>>, vector<1x32xf32>
    tpu.vector_store %arg7[%c3_106, %c32_107], %242 {strides = array<i32>} : memref<8x64xf32, #tpu.memory_space<vmem>>, vector<1x32xf32>,
    %244 = vector.extract_strided_slice %111 {offsets = [5, 0], sizes = [1, 256], strides = [1, 1]} : vector<8x256xf32> to vector<1x256xf32>
    %cst_108 = arith.constant dense<0.000000e+00> : vector<1x256xf32>
    %245 = tpu.matmul %239, %108, %cst_108 {dimension_numbers = #tpu.dot_dimension_numbers<[1], [0], [0], [1], [0, 0, 1, 1], [], []>} : vector<1x64xf32>, vector<64x256xf32>, vector<1x256xf32> -> vector<1x256xf32>
    %246 = arith.addf %244, %245 : vector<1x256xf32>
    %247 = arith.mulf %246, %91 : vector<1x256xf32>
    %248 = arith.negf %247 : vector<1x256xf32>
    %249 = math.exp %248 : vector<1x256xf32>
    %cst_109 = arith.constant 1.000000e+00 : f32
    %250 = vector.broadcast %cst_109 : f32 to vector<1x256xf32>
    %251 = arith.addf %250, %249 : vector<1x256xf32>
    %252 = arith.divf %250, %251 : vector<1x256xf32>
    %253 = vector.extract_strided_slice %252 {offsets = [0, 0], sizes = [1, 64], strides = [1, 1]} : vector<1x256xf32> to vector<1x64xf32>
    %254 = vector.extract_strided_slice %252 {offsets = [0, 64], sizes = [1, 64], strides = [1, 1]} : vector<1x256xf32> to vector<1x64xf32>
    %255 = vector.extract_strided_slice %252 {offsets = [0, 128], sizes = [1, 64], strides = [1, 1]} : vector<1x256xf32> to vector<1x64xf32>
    %cst_110 = arith.constant 2.000000e+00 : f32
    %256 = vector.broadcast %cst_110 : f32 to vector<1x64xf32>
    %257 = arith.mulf %256, %255 : vector<1x64xf32>
    %cst_111 = arith.constant 1.000000e+00 : f32
    %258 = vector.broadcast %cst_111 : f32 to vector<1x64xf32>
    %259 = arith.subf %257, %258 : vector<1x64xf32>
    %260 = vector.extract_strided_slice %252 {offsets = [0, 192], sizes = [1, 64], strides = [1, 1]} : vector<1x256xf32> to vector<1x64xf32>
    %261 = arith.mulf %254, %237 : vector<1x64xf32>
    %262 = arith.mulf %253, %259 : vector<1x64xf32>
    %263 = arith.addf %261, %262 : vector<1x64xf32>
    %264 = math.tanh %263 : vector<1x64xf32>
    %265 = arith.mulf %260, %264 : vector<1x64xf32>
    %266 = vector.extract_strided_slice %265 {offsets = [0, 0], sizes = [1, 32], strides = [1, 1]} : vector<1x64xf32> to vector<1x32xf32>
    %c5_112 = arith.constant 5 : index
    %c0_113 = arith.constant 0 : index
    %267 = vector.load %arg7[%c5_112, %c0_113] : memref<8x64xf32, #tpu.memory_space<vmem>>, vector<1x32xf32>
    tpu.vector_store %arg7[%c5_112, %c0_113], %266 {strides = array<i32>} : memref<8x64xf32, #tpu.memory_space<vmem>>, vector<1x32xf32>,
    %268 = vector.extract_strided_slice %265 {offsets = [0, 32], sizes = [1, 32], strides = [1, 1]} : vector<1x64xf32> to vector<1x32xf32>
    %c2_114 = arith.constant 2 : index
    %c32_115 = arith.constant 32 : index
    %269 = vector.load %arg7[%c2_114, %c32_115] : memref<8x64xf32, #tpu.memory_space<vmem>>, vector<1x32xf32>
    tpu.vector_store %arg7[%c2_114, %c32_115], %268 {strides = array<i32>} : memref<8x64xf32, #tpu.memory_space<vmem>>, vector<1x32xf32>,
    %270 = vector.extract_strided_slice %111 {offsets = [6, 0], sizes = [1, 256], strides = [1, 1]} : vector<8x256xf32> to vector<1x256xf32>
    %cst_116 = arith.constant dense<0.000000e+00> : vector<1x256xf32>
    %271 = tpu.matmul %265, %108, %cst_116 {dimension_numbers = #tpu.dot_dimension_numbers<[1], [0], [0], [1], [0, 0, 1, 1], [], []>} : vector<1x64xf32>, vector<64x256xf32>, vector<1x256xf32> -> vector<1x256xf32>
    %272 = arith.addf %270, %271 : vector<1x256xf32>
    %273 = arith.mulf %272, %91 : vector<1x256xf32>
    %274 = arith.negf %273 : vector<1x256xf32>
    %275 = math.exp %274 : vector<1x256xf32>
    %cst_117 = arith.constant 1.000000e+00 : f32
    %276 = vector.broadcast %cst_117 : f32 to vector<1x256xf32>
    %277 = arith.addf %276, %275 : vector<1x256xf32>
    %278 = arith.divf %276, %277 : vector<1x256xf32>
    %279 = vector.extract_strided_slice %278 {offsets = [0, 0], sizes = [1, 64], strides = [1, 1]} : vector<1x256xf32> to vector<1x64xf32>
    %280 = vector.extract_strided_slice %278 {offsets = [0, 64], sizes = [1, 64], strides = [1, 1]} : vector<1x256xf32> to vector<1x64xf32>
    %281 = vector.extract_strided_slice %278 {offsets = [0, 128], sizes = [1, 64], strides = [1, 1]} : vector<1x256xf32> to vector<1x64xf32>
    %cst_118 = arith.constant 2.000000e+00 : f32
    %282 = vector.broadcast %cst_118 : f32 to vector<1x64xf32>
    %283 = arith.mulf %282, %281 : vector<1x64xf32>
    %cst_119 = arith.constant 1.000000e+00 : f32
    %284 = vector.broadcast %cst_119 : f32 to vector<1x64xf32>
    %285 = arith.subf %283, %284 : vector<1x64xf32>
    %286 = vector.extract_strided_slice %278 {offsets = [0, 192], sizes = [1, 64], strides = [1, 1]} : vector<1x256xf32> to vector<1x64xf32>
    %287 = arith.mulf %280, %263 : vector<1x64xf32>
    %288 = arith.mulf %279, %285 : vector<1x64xf32>
    %289 = arith.addf %287, %288 : vector<1x64xf32>
    %290 = math.tanh %289 : vector<1x64xf32>
    %291 = arith.mulf %286, %290 : vector<1x64xf32>
    %292 = vector.extract_strided_slice %291 {offsets = [0, 0], sizes = [1, 32], strides = [1, 1]} : vector<1x64xf32> to vector<1x32xf32>
    %c6_120 = arith.constant 6 : index
    %c0_121 = arith.constant 0 : index
    %293 = vector.load %arg7[%c6_120, %c0_121] : memref<8x64xf32, #tpu.memory_space<vmem>>, vector<1x32xf32>
    tpu.vector_store %arg7[%c6_120, %c0_121], %292 {strides = array<i32>} : memref<8x64xf32, #tpu.memory_space<vmem>>, vector<1x32xf32>,
    %294 = vector.extract_strided_slice %291 {offsets = [0, 32], sizes = [1, 32], strides = [1, 1]} : vector<1x64xf32> to vector<1x32xf32>
    %c1_122 = arith.constant 1 : index
    %c32_123 = arith.constant 32 : index
    %295 = vector.load %arg7[%c1_122, %c32_123] : memref<8x64xf32, #tpu.memory_space<vmem>>, vector<1x32xf32>
    tpu.vector_store %arg7[%c1_122, %c32_123], %294 {strides = array<i32>} : memref<8x64xf32, #tpu.memory_space<vmem>>, vector<1x32xf32>,
    %296 = vector.extract_strided_slice %111 {offsets = [7, 0], sizes = [1, 256], strides = [1, 1]} : vector<8x256xf32> to vector<1x256xf32>
    %cst_124 = arith.constant dense<0.000000e+00> : vector<1x256xf32>
    %297 = tpu.matmul %291, %108, %cst_124 {dimension_numbers = #tpu.dot_dimension_numbers<[1], [0], [0], [1], [0, 0, 1, 1], [], []>} : vector<1x64xf32>, vector<64x256xf32>, vector<1x256xf32> -> vector<1x256xf32>
    %298 = arith.addf %296, %297 : vector<1x256xf32>
    %299 = arith.mulf %298, %91 : vector<1x256xf32>
    %300 = arith.negf %299 : vector<1x256xf32>
    %301 = math.exp %300 : vector<1x256xf32>
    %cst_125 = arith.constant 1.000000e+00 : f32
    %302 = vector.broadcast %cst_125 : f32 to vector<1x256xf32>
    %303 = arith.addf %302, %301 : vector<1x256xf32>
    %304 = arith.divf %302, %303 : vector<1x256xf32>
    %305 = vector.extract_strided_slice %304 {offsets = [0, 0], sizes = [1, 64], strides = [1, 1]} : vector<1x256xf32> to vector<1x64xf32>
    %306 = vector.extract_strided_slice %304 {offsets = [0, 64], sizes = [1, 64], strides = [1, 1]} : vector<1x256xf32> to vector<1x64xf32>
    %307 = vector.extract_strided_slice %304 {offsets = [0, 128], sizes = [1, 64], strides = [1, 1]} : vector<1x256xf32> to vector<1x64xf32>
    %cst_126 = arith.constant 2.000000e+00 : f32
    %308 = vector.broadcast %cst_126 : f32 to vector<1x64xf32>
    %309 = arith.mulf %308, %307 : vector<1x64xf32>
    %cst_127 = arith.constant 1.000000e+00 : f32
    %310 = vector.broadcast %cst_127 : f32 to vector<1x64xf32>
    %311 = arith.subf %309, %310 : vector<1x64xf32>
    %312 = vector.extract_strided_slice %304 {offsets = [0, 192], sizes = [1, 64], strides = [1, 1]} : vector<1x256xf32> to vector<1x64xf32>
    %313 = arith.mulf %306, %289 : vector<1x64xf32>
    %314 = arith.mulf %305, %311 : vector<1x64xf32>
    %315 = arith.addf %313, %314 : vector<1x64xf32>
    %316 = math.tanh %315 : vector<1x64xf32>
    %317 = arith.mulf %312, %316 : vector<1x64xf32>
    %318 = vector.extract_strided_slice %317 {offsets = [0, 0], sizes = [1, 32], strides = [1, 1]} : vector<1x64xf32> to vector<1x32xf32>
    %c7_128 = arith.constant 7 : index
    %c0_129 = arith.constant 0 : index
    %319 = vector.load %arg7[%c7_128, %c0_129] : memref<8x64xf32, #tpu.memory_space<vmem>>, vector<1x32xf32>
    tpu.vector_store %arg7[%c7_128, %c0_129], %318 {strides = array<i32>} : memref<8x64xf32, #tpu.memory_space<vmem>>, vector<1x32xf32>,
    %320 = vector.extract_strided_slice %317 {offsets = [0, 32], sizes = [1, 32], strides = [1, 1]} : vector<1x64xf32> to vector<1x32xf32>
    %c0_130 = arith.constant 0 : index
    %c32_131 = arith.constant 32 : index
    %321 = vector.load %arg7[%c0_130, %c32_131] : memref<8x64xf32, #tpu.memory_space<vmem>>, vector<1x32xf32>
    tpu.vector_store %arg7[%c0_130, %c32_131], %320 {strides = array<i32>} : memref<8x64xf32, #tpu.memory_space<vmem>>, vector<1x32xf32>,
    %c0_132 = arith.constant 0 : index
    %c0_133 = arith.constant 0 : index
    %322 = vector.load %arg7[%c0_132, %c0_133] : memref<8x64xf32, #tpu.memory_space<vmem>>, vector<8x64xf32>
    %c0_134 = arith.constant 0 : index
    %c0_135 = arith.constant 0 : index
    %323 = vector.load %arg3[%c0_134, %c0_135] : memref<352x128xf32, #tpu.memory_space<vmem>>, vector<64x128xf32>
    %c64_136 = arith.constant 64 : index
    %c0_137 = arith.constant 0 : index
    %324 = vector.load %arg3[%c64_136, %c0_137] : memref<352x128xf32, #tpu.memory_space<vmem>>, vector<32x128xf32>
    %cst_138 = arith.constant dense<0.000000e+00> : vector<8x128xf32>
    %325 = tpu.matmul %322, %323, %cst_138 {dimension_numbers = #tpu.dot_dimension_numbers<[1], [0], [0], [1], [0, 0, 1, 1], [], []>} : vector<8x64xf32>, vector<64x128xf32>, vector<8x128xf32> -> vector<8x128xf32>
    %326 = vector.broadcast %103 : vector<1x128xf32> to vector<8x128xf32>
    %327 = arith.addf %325, %326 : vector<8x128xf32>
    %cst_139 = arith.constant 0.000000e+00 : f32
    %328 = vector.broadcast %cst_139 : f32 to vector<1x32xf32>
    %cst_140 = arith.constant 0.000000e+00 : f32
    %329 = vector.broadcast %cst_140 : f32 to vector<1x32xf32>
    %330 = vector.extract_strided_slice %327 {offsets = [0, 0], sizes = [1, 128], strides = [1, 1]} : vector<8x128xf32> to vector<1x128xf32>
    %cst_141 = arith.constant dense<0.000000e+00> : vector<1x128xf32>
    %331 = tpu.matmul %328, %324, %cst_141 {dimension_numbers = #tpu.dot_dimension_numbers<[1], [0], [0], [1], [0, 0, 1, 1], [], []>} : vector<1x32xf32>, vector<32x128xf32>, vector<1x128xf32> -> vector<1x128xf32>
    %332 = arith.addf %330, %331 : vector<1x128xf32>
    %333 = arith.mulf %332, %100 : vector<1x128xf32>
    %334 = arith.negf %333 : vector<1x128xf32>
    %335 = math.exp %334 : vector<1x128xf32>
    %cst_142 = arith.constant 1.000000e+00 : f32
    %336 = vector.broadcast %cst_142 : f32 to vector<1x128xf32>
    %337 = arith.addf %336, %335 : vector<1x128xf32>
    %338 = arith.divf %336, %337 : vector<1x128xf32>
    %339 = vector.extract_strided_slice %338 {offsets = [0, 0], sizes = [1, 32], strides = [1, 1]} : vector<1x128xf32> to vector<1x32xf32>
    %340 = vector.extract_strided_slice %338 {offsets = [0, 32], sizes = [1, 32], strides = [1, 1]} : vector<1x128xf32> to vector<1x32xf32>
    %341 = vector.extract_strided_slice %338 {offsets = [0, 64], sizes = [1, 32], strides = [1, 1]} : vector<1x128xf32> to vector<1x32xf32>
    %cst_143 = arith.constant 2.000000e+00 : f32
    %342 = vector.broadcast %cst_143 : f32 to vector<1x32xf32>
    %343 = arith.mulf %342, %341 : vector<1x32xf32>
    %cst_144 = arith.constant 1.000000e+00 : f32
    %344 = vector.broadcast %cst_144 : f32 to vector<1x32xf32>
    %345 = arith.subf %343, %344 : vector<1x32xf32>
    %346 = vector.extract_strided_slice %338 {offsets = [0, 96], sizes = [1, 32], strides = [1, 1]} : vector<1x128xf32> to vector<1x32xf32>
    %347 = arith.mulf %340, %329 : vector<1x32xf32>
    %348 = arith.mulf %339, %345 : vector<1x32xf32>
    %349 = arith.addf %347, %348 : vector<1x32xf32>
    %350 = math.tanh %349 : vector<1x32xf32>
    %351 = arith.mulf %346, %350 : vector<1x32xf32>
    %352 = vector.extract_strided_slice %327 {offsets = [1, 0], sizes = [1, 128], strides = [1, 1]} : vector<8x128xf32> to vector<1x128xf32>
    %cst_145 = arith.constant dense<0.000000e+00> : vector<1x128xf32>
    %353 = tpu.matmul %351, %324, %cst_145 {dimension_numbers = #tpu.dot_dimension_numbers<[1], [0], [0], [1], [0, 0, 1, 1], [], []>} : vector<1x32xf32>, vector<32x128xf32>, vector<1x128xf32> -> vector<1x128xf32>
    %354 = arith.addf %352, %353 : vector<1x128xf32>
    %355 = arith.mulf %354, %100 : vector<1x128xf32>
    %356 = arith.negf %355 : vector<1x128xf32>
    %357 = math.exp %356 : vector<1x128xf32>
    %cst_146 = arith.constant 1.000000e+00 : f32
    %358 = vector.broadcast %cst_146 : f32 to vector<1x128xf32>
    %359 = arith.addf %358, %357 : vector<1x128xf32>
    %360 = arith.divf %358, %359 : vector<1x128xf32>
    %361 = vector.extract_strided_slice %360 {offsets = [0, 0], sizes = [1, 32], strides = [1, 1]} : vector<1x128xf32> to vector<1x32xf32>
    %362 = vector.extract_strided_slice %360 {offsets = [0, 32], sizes = [1, 32], strides = [1, 1]} : vector<1x128xf32> to vector<1x32xf32>
    %363 = vector.extract_strided_slice %360 {offsets = [0, 64], sizes = [1, 32], strides = [1, 1]} : vector<1x128xf32> to vector<1x32xf32>
    %cst_147 = arith.constant 2.000000e+00 : f32
    %364 = vector.broadcast %cst_147 : f32 to vector<1x32xf32>
    %365 = arith.mulf %364, %363 : vector<1x32xf32>
    %cst_148 = arith.constant 1.000000e+00 : f32
    %366 = vector.broadcast %cst_148 : f32 to vector<1x32xf32>
    %367 = arith.subf %365, %366 : vector<1x32xf32>
    %368 = vector.extract_strided_slice %360 {offsets = [0, 96], sizes = [1, 32], strides = [1, 1]} : vector<1x128xf32> to vector<1x32xf32>
    %369 = arith.mulf %362, %349 : vector<1x32xf32>
    %370 = arith.mulf %361, %367 : vector<1x32xf32>
    %371 = arith.addf %369, %370 : vector<1x32xf32>
    %372 = math.tanh %371 : vector<1x32xf32>
    %373 = arith.mulf %368, %372 : vector<1x32xf32>
    %374 = vector.extract_strided_slice %327 {offsets = [2, 0], sizes = [1, 128], strides = [1, 1]} : vector<8x128xf32> to vector<1x128xf32>
    %cst_149 = arith.constant dense<0.000000e+00> : vector<1x128xf32>
    %375 = tpu.matmul %373, %324, %cst_149 {dimension_numbers = #tpu.dot_dimension_numbers<[1], [0], [0], [1], [0, 0, 1, 1], [], []>} : vector<1x32xf32>, vector<32x128xf32>, vector<1x128xf32> -> vector<1x128xf32>
    %376 = arith.addf %374, %375 : vector<1x128xf32>
    %377 = arith.mulf %376, %100 : vector<1x128xf32>
    %378 = arith.negf %377 : vector<1x128xf32>
    %379 = math.exp %378 : vector<1x128xf32>
    %cst_150 = arith.constant 1.000000e+00 : f32
    %380 = vector.broadcast %cst_150 : f32 to vector<1x128xf32>
    %381 = arith.addf %380, %379 : vector<1x128xf32>
    %382 = arith.divf %380, %381 : vector<1x128xf32>
    %383 = vector.extract_strided_slice %382 {offsets = [0, 0], sizes = [1, 32], strides = [1, 1]} : vector<1x128xf32> to vector<1x32xf32>
    %384 = vector.extract_strided_slice %382 {offsets = [0, 32], sizes = [1, 32], strides = [1, 1]} : vector<1x128xf32> to vector<1x32xf32>
    %385 = vector.extract_strided_slice %382 {offsets = [0, 64], sizes = [1, 32], strides = [1, 1]} : vector<1x128xf32> to vector<1x32xf32>
    %cst_151 = arith.constant 2.000000e+00 : f32
    %386 = vector.broadcast %cst_151 : f32 to vector<1x32xf32>
    %387 = arith.mulf %386, %385 : vector<1x32xf32>
    %cst_152 = arith.constant 1.000000e+00 : f32
    %388 = vector.broadcast %cst_152 : f32 to vector<1x32xf32>
    %389 = arith.subf %387, %388 : vector<1x32xf32>
    %390 = vector.extract_strided_slice %382 {offsets = [0, 96], sizes = [1, 32], strides = [1, 1]} : vector<1x128xf32> to vector<1x32xf32>
    %391 = arith.mulf %384, %371 : vector<1x32xf32>
    %392 = arith.mulf %383, %389 : vector<1x32xf32>
    %393 = arith.addf %391, %392 : vector<1x32xf32>
    %394 = math.tanh %393 : vector<1x32xf32>
    %395 = arith.mulf %390, %394 : vector<1x32xf32>
    %396 = vector.extract_strided_slice %327 {offsets = [3, 0], sizes = [1, 128], strides = [1, 1]} : vector<8x128xf32> to vector<1x128xf32>
    %cst_153 = arith.constant dense<0.000000e+00> : vector<1x128xf32>
    %397 = tpu.matmul %395, %324, %cst_153 {dimension_numbers = #tpu.dot_dimension_numbers<[1], [0], [0], [1], [0, 0, 1, 1], [], []>} : vector<1x32xf32>, vector<32x128xf32>, vector<1x128xf32> -> vector<1x128xf32>
    %398 = arith.addf %396, %397 : vector<1x128xf32>
    %399 = arith.mulf %398, %100 : vector<1x128xf32>
    %400 = arith.negf %399 : vector<1x128xf32>
    %401 = math.exp %400 : vector<1x128xf32>
    %cst_154 = arith.constant 1.000000e+00 : f32
    %402 = vector.broadcast %cst_154 : f32 to vector<1x128xf32>
    %403 = arith.addf %402, %401 : vector<1x128xf32>
    %404 = arith.divf %402, %403 : vector<1x128xf32>
    %405 = vector.extract_strided_slice %404 {offsets = [0, 0], sizes = [1, 32], strides = [1, 1]} : vector<1x128xf32> to vector<1x32xf32>
    %406 = vector.extract_strided_slice %404 {offsets = [0, 32], sizes = [1, 32], strides = [1, 1]} : vector<1x128xf32> to vector<1x32xf32>
    %407 = vector.extract_strided_slice %404 {offsets = [0, 64], sizes = [1, 32], strides = [1, 1]} : vector<1x128xf32> to vector<1x32xf32>
    %cst_155 = arith.constant 2.000000e+00 : f32
    %408 = vector.broadcast %cst_155 : f32 to vector<1x32xf32>
    %409 = arith.mulf %408, %407 : vector<1x32xf32>
    %cst_156 = arith.constant 1.000000e+00 : f32
    %410 = vector.broadcast %cst_156 : f32 to vector<1x32xf32>
    %411 = arith.subf %409, %410 : vector<1x32xf32>
    %412 = vector.extract_strided_slice %404 {offsets = [0, 96], sizes = [1, 32], strides = [1, 1]} : vector<1x128xf32> to vector<1x32xf32>
    %413 = arith.mulf %406, %393 : vector<1x32xf32>
    %414 = arith.mulf %405, %411 : vector<1x32xf32>
    %415 = arith.addf %413, %414 : vector<1x32xf32>
    %416 = math.tanh %415 : vector<1x32xf32>
    %417 = arith.mulf %412, %416 : vector<1x32xf32>
    %418 = vector.extract_strided_slice %327 {offsets = [4, 0], sizes = [1, 128], strides = [1, 1]} : vector<8x128xf32> to vector<1x128xf32>
    %cst_157 = arith.constant dense<0.000000e+00> : vector<1x128xf32>
    %419 = tpu.matmul %417, %324, %cst_157 {dimension_numbers = #tpu.dot_dimension_numbers<[1], [0], [0], [1], [0, 0, 1, 1], [], []>} : vector<1x32xf32>, vector<32x128xf32>, vector<1x128xf32> -> vector<1x128xf32>
    %420 = arith.addf %418, %419 : vector<1x128xf32>
    %421 = arith.mulf %420, %100 : vector<1x128xf32>
    %422 = arith.negf %421 : vector<1x128xf32>
    %423 = math.exp %422 : vector<1x128xf32>
    %cst_158 = arith.constant 1.000000e+00 : f32
    %424 = vector.broadcast %cst_158 : f32 to vector<1x128xf32>
    %425 = arith.addf %424, %423 : vector<1x128xf32>
    %426 = arith.divf %424, %425 : vector<1x128xf32>
    %427 = vector.extract_strided_slice %426 {offsets = [0, 0], sizes = [1, 32], strides = [1, 1]} : vector<1x128xf32> to vector<1x32xf32>
    %428 = vector.extract_strided_slice %426 {offsets = [0, 32], sizes = [1, 32], strides = [1, 1]} : vector<1x128xf32> to vector<1x32xf32>
    %429 = vector.extract_strided_slice %426 {offsets = [0, 64], sizes = [1, 32], strides = [1, 1]} : vector<1x128xf32> to vector<1x32xf32>
    %cst_159 = arith.constant 2.000000e+00 : f32
    %430 = vector.broadcast %cst_159 : f32 to vector<1x32xf32>
    %431 = arith.mulf %430, %429 : vector<1x32xf32>
    %cst_160 = arith.constant 1.000000e+00 : f32
    %432 = vector.broadcast %cst_160 : f32 to vector<1x32xf32>
    %433 = arith.subf %431, %432 : vector<1x32xf32>
    %434 = vector.extract_strided_slice %426 {offsets = [0, 96], sizes = [1, 32], strides = [1, 1]} : vector<1x128xf32> to vector<1x32xf32>
    %435 = arith.mulf %428, %415 : vector<1x32xf32>
    %436 = arith.mulf %427, %433 : vector<1x32xf32>
    %437 = arith.addf %435, %436 : vector<1x32xf32>
    %438 = math.tanh %437 : vector<1x32xf32>
    %439 = arith.mulf %434, %438 : vector<1x32xf32>
    %440 = vector.extract_strided_slice %327 {offsets = [5, 0], sizes = [1, 128], strides = [1, 1]} : vector<8x128xf32> to vector<1x128xf32>
    %cst_161 = arith.constant dense<0.000000e+00> : vector<1x128xf32>
    %441 = tpu.matmul %439, %324, %cst_161 {dimension_numbers = #tpu.dot_dimension_numbers<[1], [0], [0], [1], [0, 0, 1, 1], [], []>} : vector<1x32xf32>, vector<32x128xf32>, vector<1x128xf32> -> vector<1x128xf32>
    %442 = arith.addf %440, %441 : vector<1x128xf32>
    %443 = arith.mulf %442, %100 : vector<1x128xf32>
    %444 = arith.negf %443 : vector<1x128xf32>
    %445 = math.exp %444 : vector<1x128xf32>
    %cst_162 = arith.constant 1.000000e+00 : f32
    %446 = vector.broadcast %cst_162 : f32 to vector<1x128xf32>
    %447 = arith.addf %446, %445 : vector<1x128xf32>
    %448 = arith.divf %446, %447 : vector<1x128xf32>
    %449 = vector.extract_strided_slice %448 {offsets = [0, 0], sizes = [1, 32], strides = [1, 1]} : vector<1x128xf32> to vector<1x32xf32>
    %450 = vector.extract_strided_slice %448 {offsets = [0, 32], sizes = [1, 32], strides = [1, 1]} : vector<1x128xf32> to vector<1x32xf32>
    %451 = vector.extract_strided_slice %448 {offsets = [0, 64], sizes = [1, 32], strides = [1, 1]} : vector<1x128xf32> to vector<1x32xf32>
    %cst_163 = arith.constant 2.000000e+00 : f32
    %452 = vector.broadcast %cst_163 : f32 to vector<1x32xf32>
    %453 = arith.mulf %452, %451 : vector<1x32xf32>
    %cst_164 = arith.constant 1.000000e+00 : f32
    %454 = vector.broadcast %cst_164 : f32 to vector<1x32xf32>
    %455 = arith.subf %453, %454 : vector<1x32xf32>
    %456 = vector.extract_strided_slice %448 {offsets = [0, 96], sizes = [1, 32], strides = [1, 1]} : vector<1x128xf32> to vector<1x32xf32>
    %457 = arith.mulf %450, %437 : vector<1x32xf32>
    %458 = arith.mulf %449, %455 : vector<1x32xf32>
    %459 = arith.addf %457, %458 : vector<1x32xf32>
    %460 = math.tanh %459 : vector<1x32xf32>
    %461 = arith.mulf %456, %460 : vector<1x32xf32>
    %462 = vector.extract_strided_slice %327 {offsets = [6, 0], sizes = [1, 128], strides = [1, 1]} : vector<8x128xf32> to vector<1x128xf32>
    %cst_165 = arith.constant dense<0.000000e+00> : vector<1x128xf32>
    %463 = tpu.matmul %461, %324, %cst_165 {dimension_numbers = #tpu.dot_dimension_numbers<[1], [0], [0], [1], [0, 0, 1, 1], [], []>} : vector<1x32xf32>, vector<32x128xf32>, vector<1x128xf32> -> vector<1x128xf32>
    %464 = arith.addf %462, %463 : vector<1x128xf32>
    %465 = arith.mulf %464, %100 : vector<1x128xf32>
    %466 = arith.negf %465 : vector<1x128xf32>
    %467 = math.exp %466 : vector<1x128xf32>
    %cst_166 = arith.constant 1.000000e+00 : f32
    %468 = vector.broadcast %cst_166 : f32 to vector<1x128xf32>
    %469 = arith.addf %468, %467 : vector<1x128xf32>
    %470 = arith.divf %468, %469 : vector<1x128xf32>
    %471 = vector.extract_strided_slice %470 {offsets = [0, 0], sizes = [1, 32], strides = [1, 1]} : vector<1x128xf32> to vector<1x32xf32>
    %472 = vector.extract_strided_slice %470 {offsets = [0, 32], sizes = [1, 32], strides = [1, 1]} : vector<1x128xf32> to vector<1x32xf32>
    %473 = vector.extract_strided_slice %470 {offsets = [0, 64], sizes = [1, 32], strides = [1, 1]} : vector<1x128xf32> to vector<1x32xf32>
    %cst_167 = arith.constant 2.000000e+00 : f32
    %474 = vector.broadcast %cst_167 : f32 to vector<1x32xf32>
    %475 = arith.mulf %474, %473 : vector<1x32xf32>
    %cst_168 = arith.constant 1.000000e+00 : f32
    %476 = vector.broadcast %cst_168 : f32 to vector<1x32xf32>
    %477 = arith.subf %475, %476 : vector<1x32xf32>
    %478 = vector.extract_strided_slice %470 {offsets = [0, 96], sizes = [1, 32], strides = [1, 1]} : vector<1x128xf32> to vector<1x32xf32>
    %479 = arith.mulf %472, %459 : vector<1x32xf32>
    %480 = arith.mulf %471, %477 : vector<1x32xf32>
    %481 = arith.addf %479, %480 : vector<1x32xf32>
    %482 = math.tanh %481 : vector<1x32xf32>
    %483 = arith.mulf %478, %482 : vector<1x32xf32>
    %484 = vector.extract_strided_slice %327 {offsets = [7, 0], sizes = [1, 128], strides = [1, 1]} : vector<8x128xf32> to vector<1x128xf32>
    %cst_169 = arith.constant dense<0.000000e+00> : vector<1x128xf32>
    %485 = tpu.matmul %483, %324, %cst_169 {dimension_numbers = #tpu.dot_dimension_numbers<[1], [0], [0], [1], [0, 0, 1, 1], [], []>} : vector<1x32xf32>, vector<32x128xf32>, vector<1x128xf32> -> vector<1x128xf32>
    %486 = arith.addf %484, %485 : vector<1x128xf32>
    %487 = arith.mulf %486, %100 : vector<1x128xf32>
    %488 = arith.negf %487 : vector<1x128xf32>
    %489 = math.exp %488 : vector<1x128xf32>
    %cst_170 = arith.constant 1.000000e+00 : f32
    %490 = vector.broadcast %cst_170 : f32 to vector<1x128xf32>
    %491 = arith.addf %490, %489 : vector<1x128xf32>
    %492 = arith.divf %490, %491 : vector<1x128xf32>
    %493 = vector.extract_strided_slice %492 {offsets = [0, 0], sizes = [1, 32], strides = [1, 1]} : vector<1x128xf32> to vector<1x32xf32>
    %494 = vector.extract_strided_slice %492 {offsets = [0, 32], sizes = [1, 32], strides = [1, 1]} : vector<1x128xf32> to vector<1x32xf32>
    %495 = vector.extract_strided_slice %492 {offsets = [0, 64], sizes = [1, 32], strides = [1, 1]} : vector<1x128xf32> to vector<1x32xf32>
    %cst_171 = arith.constant 2.000000e+00 : f32
    %496 = vector.broadcast %cst_171 : f32 to vector<1x32xf32>
    %497 = arith.mulf %496, %495 : vector<1x32xf32>
    %cst_172 = arith.constant 1.000000e+00 : f32
    %498 = vector.broadcast %cst_172 : f32 to vector<1x32xf32>
    %499 = arith.subf %497, %498 : vector<1x32xf32>
    %500 = vector.extract_strided_slice %492 {offsets = [0, 96], sizes = [1, 32], strides = [1, 1]} : vector<1x128xf32> to vector<1x32xf32>
    %501 = arith.mulf %494, %481 : vector<1x32xf32>
    %502 = arith.mulf %493, %499 : vector<1x32xf32>
    %503 = arith.addf %501, %502 : vector<1x32xf32>
    %504 = math.tanh %503 : vector<1x32xf32>
    %505 = arith.mulf %500, %504 : vector<1x32xf32>
    %c96 = arith.constant 96 : index
    %c0_173 = arith.constant 0 : index
    %506 = vector.load %arg3[%c96, %c0_173] : memref<352x128xf32, #tpu.memory_space<vmem>>, vector<64x128xf32>
    %507 = vector.extract_strided_slice %322 {offsets = [7, 0], sizes = [1, 64], strides = [1, 1]} : vector<8x64xf32> to vector<1x64xf32>
    %cst_174 = arith.constant dense<0.000000e+00> : vector<1x128xf32>
    %508 = tpu.matmul %507, %506, %cst_174 {dimension_numbers = #tpu.dot_dimension_numbers<[1], [0], [0], [1], [0, 0, 1, 1], [], []>} : vector<1x64xf32>, vector<64x128xf32>, vector<1x128xf32> -> vector<1x128xf32>
    %509 = arith.addf %508, %104 : vector<1x128xf32>
    %cst_175 = arith.constant 0.000000e+00 : f32
    %510 = vector.broadcast %cst_175 : f32 to vector<1x32xf32>
    %511 = arith.mulf %509, %100 : vector<1x128xf32>
    %512 = arith.negf %511 : vector<1x128xf32>
    %513 = math.exp %512 : vector<1x128xf32>
    %cst_176 = arith.constant 1.000000e+00 : f32
    %514 = vector.broadcast %cst_176 : f32 to vector<1x128xf32>
    %515 = arith.addf %514, %513 : vector<1x128xf32>
    %516 = arith.divf %514, %515 : vector<1x128xf32>
    %517 = vector.extract_strided_slice %516 {offsets = [0, 0], sizes = [1, 32], strides = [1, 1]} : vector<1x128xf32> to vector<1x32xf32>
    %518 = vector.extract_strided_slice %516 {offsets = [0, 32], sizes = [1, 32], strides = [1, 1]} : vector<1x128xf32> to vector<1x32xf32>
    %519 = vector.extract_strided_slice %516 {offsets = [0, 64], sizes = [1, 32], strides = [1, 1]} : vector<1x128xf32> to vector<1x32xf32>
    %cst_177 = arith.constant 2.000000e+00 : f32
    %520 = vector.broadcast %cst_177 : f32 to vector<1x32xf32>
    %521 = arith.mulf %520, %519 : vector<1x32xf32>
    %cst_178 = arith.constant 1.000000e+00 : f32
    %522 = vector.broadcast %cst_178 : f32 to vector<1x32xf32>
    %523 = arith.subf %521, %522 : vector<1x32xf32>
    %524 = vector.extract_strided_slice %516 {offsets = [0, 96], sizes = [1, 32], strides = [1, 1]} : vector<1x128xf32> to vector<1x32xf32>
    %525 = arith.mulf %518, %510 : vector<1x32xf32>
    %526 = arith.mulf %517, %523 : vector<1x32xf32>
    %527 = arith.addf %525, %526 : vector<1x32xf32>
    %528 = math.tanh %527 : vector<1x32xf32>
    %529 = arith.mulf %524, %528 : vector<1x32xf32>
    %c160 = arith.constant 160 : index
    %c0_179 = arith.constant 0 : index
    %530 = vector.load %arg3[%c160, %c0_179] : memref<352x128xf32, #tpu.memory_space<vmem>>, vector<64x128xf32>
    %c224 = arith.constant 224 : index
    %c0_180 = arith.constant 0 : index
    %531 = vector.load %arg3[%c224, %c0_180] : memref<352x128xf32, #tpu.memory_space<vmem>>, vector<128x128xf32>
    %532 = tpu.concatenate %505, %529 in 1 : vector<1x32xf32>, vector<1x32xf32> -> vector<1x64xf32>
    %cst_181 = arith.constant dense<0.000000e+00> : vector<1x128xf32>
    %533 = tpu.matmul %532, %530, %cst_181 {dimension_numbers = #tpu.dot_dimension_numbers<[1], [0], [0], [1], [0, 0, 1, 1], [], []>} : vector<1x64xf32>, vector<64x128xf32>, vector<1x128xf32> -> vector<1x128xf32>
    %534 = arith.addf %533, %105 : vector<1x128xf32>
    %cst_182 = arith.constant 0.000000e+00 : f32
    %535 = vector.broadcast %cst_182 : f32 to vector<1x128xf32>
    %536 = arith.maximumf %534, %535 : vector<1x128xf32>
    %cst_183 = arith.constant dense<0.000000e+00> : vector<1x128xf32>
    %537 = tpu.matmul %536, %531, %cst_183 {dimension_numbers = #tpu.dot_dimension_numbers<[1], [0], [0], [1], [0, 0, 1, 1], [], []>} : vector<1x128xf32>, vector<128x128xf32>, vector<1x128xf32> -> vector<1x128xf32>
    %538 = vector.extract_strided_slice %537 {offsets = [0, 0], sizes = [1, 8], strides = [1, 1]} : vector<1x128xf32> to vector<1x8xf32>
    %539 = arith.addf %538, %106 : vector<1x8xf32>
    %c0_184 = arith.constant 0 : index
    %c0_185 = arith.constant 0 : index
    %540 = vector.load %arg5[%c0_184, %c0_185] : memref<1x8xf32, #tpu.memory_space<vmem>>, vector<1x8xf32>
    tpu.vector_store %arg5[%c0_184, %c0_185], %539 {strides = array<i32>} : memref<1x8xf32, #tpu.memory_space<vmem>>, vector<1x8xf32>,
    return
  }
}

</mosaic_0001>

<llo_original>
// kernel: _net_forward_packed.1
$region0: #{_net_forward_packed.1}
  #allocation0 [shape = 'u32[]', space=smem, size = 0x4, offset = 0x4, fixed_abs, tag = 'smem constant byte address 0x4 - core index']
  #allocation1 [shape = 'u32[144,128]{1,0:T(1,128)}', space=vmem, size = 0x12000, scoped, tag = 'internal scratch']
  #allocation2 [shape = 'f32[8,32]{1,0:T(8,128)}', space=vmem, size = 0x1000, scoped, tag = 'scratch operand']
  #allocation3 [shape = 'f32[8,64]{1,0:T(8,128)}', space=vmem, size = 0x1000, scoped, tag = 'scratch operand']
  #allocation4 [shape = 's32[8]{0}', space=sflag, size = 0x20, scoped, tag = 'scratch operand']
  #allocation13 [shape = 's32[]', space=sflag, size = 0x4, offset = 0, fixed_abs, tag = 'sflag constant byte address 0x0 - dummy sync flag']
  #allocation14 [shape = 's32[]', space=sflag, size = 0x4, offset = 0, fixed_abs, tag = 'sflag constant byte address 0x0 - dummy sync flag']
  #allocation15 [shape = 's32[]', space=sflag, size = 0x4, offset = 0, fixed_abs, tag = 'sflag constant byte address 0x0 - dummy sync flag']
  #allocation16 [shape = 's32[]', space=sflag, size = 0x4, offset = 0, fixed_abs, tag = 'sflag constant byte address 0x0 - dummy sync flag']
  #allocation17 [shape = 's32[]', space=sflag, size = 0x4, offset = 0, fixed_abs, tag = 'sflag constant byte address 0x0 - dummy sync flag']
  #allocation18 [shape = 's32[]', space=sflag, size = 0x4, offset = 0, fixed_abs, tag = 'sflag constant byte address 0x0 - dummy sync flag']
  #allocation19 [shape = 's32[]', space=sflag, size = 0x4, offset = 0, fixed_abs, tag = 'sflag constant byte address 0x0 - dummy sync flag']
  #allocation20 [shape = 's32[]', space=sflag, size = 0x4, offset = 0, fixed_abs, tag = 'sflag constant byte address 0x0 - dummy sync flag']
  %s0 = inlined_call_operand.vmem [shape: s32[8], index: 0, kind: input, shape index: {}]
  %s1 = inlined_call_operand.vmem [shape: f32[50,32], index: 1, kind: input, shape index: {}]
  %s2 = inlined_call_operand.hbm [shape: f32[128,256], index: 2, kind: input, shape index: {}]
  %s3 = inlined_call_operand.hbm [shape: f32[352,128], index: 3, kind: input, shape index: {}]
  %s4 = inlined_call_operand.vmem [shape: f32[5,256], index: 4, kind: input, shape index: {}]
  %s5 = inlined_call_operand.hbm [shape: f32[1,8], index: 5, kind: output, shape index: {}]
  %s6 = sld [smem:[#allocation0]]
  $region278: #{_net_forward_packed.1} parent=0
    _
  %s8 = ssub.s32 1, %s6
  %s9 = scalar_select 0, %s8, %s6
  $region1: #{_net_forward_packed.1} parent=0
    #allocation5 [shape = 'u8[512]{0}', space=smem, size = 0x200, scoped, tag = 'input window, operand 0, single buffered']
    #allocation6 [shape = 's32[1]{0}', space=sflag, size = 0x4, scoped, tag = 'scoped memory for _net_forward_packed.1']
    #allocation7 [shape = 's32[1]{0}', space=sflag, size = 0x4, scoped, tag = 'scoped memory for _net_forward_packed.1']
    #allocation8 [shape = 's32[1]{0}', space=sflag, size = 0x4, scoped, tag = 'scoped memory for _net_forward_packed.1']
    #allocation9 [shape = 'u8[131072]{0}', space=vmem, size = 0x20000, scoped, tag = 'input window, operand 2, single buffered']
    #allocation10 [shape = 'u8[180224]{0}', space=vmem, size = 0x2c000, scoped, tag = 'input window, operand 3, single buffered']
    #allocation11 [shape = 's32[1]{0}', space=sflag, size = 0x4, scoped, tag = 'scoped memory for _net_forward_packed.1']
    #allocation12 [shape = 'u8[512]{0}', space=vmem, size = 0x400, scoped, tag = 'output window, operand 0, single buffered']
    %10 = vsyncpa [#allocation8], 0
    %11 = vsyncpa [#allocation6], 0
    %12 = vsyncpa [#allocation11], 0
    %13 = vsyncpa [#allocation7], 0
    // Predicated region
    $region2: #{_net_forward_packed.1} parent=1 // pred_check
      _
    $region3: #{_net_forward_packed.1} parent=1 // pred_check_branch
      %15 = sbr.rel (0) target = $region5
    $region4: #{_net_forward_packed.1} parent=1 // pred_region
      %s17 = ssub.s32 16, 16
      %18 = vsyncadd [#allocation8], %s17
      %s20 = sshll.u32 %s0, 4
      %s21 = int_to_ptr.vmem [resolvable:$true] %s20
      %23 = dma.vmem_to_smem %s21, 16, [#allocation5], [#allocation8]
    $region5: #{_net_forward_packed.1} parent=1 // pred_fallthru
      _
    // Predicated region
    $region6: #{_net_forward_packed.1} parent=1 // pred_check
      _
    $region7: #{_net_forward_packed.1} parent=1 // pred_check_branch
      %25 = sbr.rel (0) target = $region9
    $region8: #{_net_forward_packed.1} parent=1 // pred_region
      %s27 = ssub.s32 4096, 4096
      %28 = vsyncadd [#allocation6], %s27
      %s29 = sshll.u32 [#allocation9], 4
      %s30 = int_to_ptr.vmem [resolvable:$true] %s29
      %35 = dma.hbm_to_vmem [thread:$0]  %s2, 4096, %s30, [#allocation6], 256, 256, 16
    $region9: #{_net_forward_packed.1} parent=1 // pred_fallthru
      _
    // Predicated region
    $region10: #{_net_forward_packed.1} parent=1 // pred_check
      _
    $region11: #{_net_forward_packed.1} parent=1 // pred_check_branch
      %37 = sbr.rel (0) target = $region13
    $region12: #{_net_forward_packed.1} parent=1 // pred_region
      %s39 = ssub.s32 5632, 5632
      %40 = vsyncadd [#allocation11], %s39
      %s41 = sshll.u32 [#allocation10], 4
      %s42 = int_to_ptr.vmem [resolvable:$true] %s41
      %47 = dma.hbm_to_vmem [thread:$0]  %s3, 5632, %s42, [#allocation11], 128, 128, 8
    $region13: #{_net_forward_packed.1} parent=1 // pred_fallthru
      _
    // Predicated region
    $region14: #{_net_forward_packed.1} parent=1 // pred_check
      _
    $region15: #{_net_forward_packed.1} parent=1 // pred_check_branch
      %49 = sbr.rel (0) target = $region17
    $region16: #{_net_forward_packed.1} parent=1 // pred_region
      _
    $region17: #{_net_forward_packed.1} parent=1 // pred_fallthru
      _
    // Predicated region
    $region18: #{_net_forward_packed.1} parent=1 // pred_check
      _
    $region19: #{_net_forward_packed.1} parent=1 // pred_check_branch
      %51 = sbr.rel (0) target = $region21
    $region20: #{_net_forward_packed.1} parent=1 // pred_region
      %52 = dma.done [#allocation8], 16
    $region21: #{_net_forward_packed.1} parent=1 // pred_fallthru
      _
    // Predicated region
    $region22: #{_net_forward_packed.1} parent=1 // pred_check
      _
    $region23: #{_net_forward_packed.1} parent=1 // pred_check_branch
      %54 = sbr.rel (0) target = $region25
    $region24: #{_net_forward_packed.1} parent=1 // pred_region
      %55 = dma.done [#allocation6], 4096
    $region25: #{_net_forward_packed.1} parent=1 // pred_fallthru
      _
    // Predicated region
    $region26: #{_net_forward_packed.1} parent=1 // pred_check
      _
    $region27: #{_net_forward_packed.1} parent=1 // pred_check_branch
      %57 = sbr.rel (0) target = $region29
    $region28: #{_net_forward_packed.1} parent=1 // pred_region
      %58 = dma.done [#allocation11], 5632
    $region29: #{_net_forward_packed.1} parent=1 // pred_fallthru
      _
    %59 = sfence
    %s60 = sld [smem:[#allocation5]]
    %s61 = scalar_lea.vmem %s1, %s60
    %p63 = scmp.lt.u32.totalorder 1, 8
    %p64 = pneg %p63
    // Predicated region
    $region30: #{_net_forward_packed.1} parent=1 // pred_check
      _
    $region31: #{_net_forward_packed.1} parent=1 // pred_check_branch
      %66 = sbr.rel (%p63) target = $region33
    $region32: #{_net_forward_packed.1} parent=1 // pred_region
      %s81 = sand.u32 1, 7
      %p82 = scmp.eq.s32.totalorder %s81, 0
      %p83 = pneg %p82
      // Predicated region
      $region45: #{_net_forward_packed.1} parent=32 // pred_check
        _
      $region46: #{_net_forward_packed.1} parent=32 // pred_check_branch
        %85 = sbr.rel (%p82) target = $region48
      $region47: #{_net_forward_packed.1} parent=32 // pred_region
        %s86 = sand.u32 1, 7
        %s87 = ssub.s32 1, %s86
        %s88 = scalar_lea.vmem %s61, %s87
        %s89 = ssub.s32 1, %s86
        %s90 = scalar_lea.vmem [#allocation2], %s89
        %s91 = sshllo.u32 0, %s86
        loop: start=0, step=1, limit=1
        $region49: #{_net_forward_packed.1} parent=47 // loop_pre_header
          _
        $region50: #{_net_forward_packed.1} parent=47 // loop_header
          %s93 = sphi 0, %s97
          %p94 = scmp.ge.s32.totalorder %s93, 1
          %s98 = sphi %s88, %s88
          %s99 = sphi %s90, %s90
        $region51: #{_net_forward_packed.1} parent=47 // loop_header_branch
          %96 = sbr.rel (%p94) target = $region55
        $region52: #{_net_forward_packed.1} parent=47 // loop_body
          %v100 = vld [vmem:[%s98] sm:%s91]
          %101 = vst [vmem:[%s99] sm:%s91] %v100
        $region53: #{_net_forward_packed.1} parent=47 // loop_footer
          %s97 = sadd.s32 1, %s93
        $region54: #{_net_forward_packed.1} parent=47 // loop_footer_branch
          %92 = sbr.rel target = $region50
        $region55: #{_net_forward_packed.1} parent=47 // loop_exit
          _
      $region48: #{_net_forward_packed.1} parent=32 // pred_fallthru
        _
    $region33: #{_net_forward_packed.1} parent=1 // pred_fallthru
      _
    // Predicated region
    $region34: #{_net_forward_packed.1} parent=1 // pred_check
      %p67 = pneg %p63
    $region35: #{_net_forward_packed.1} parent=1 // pred_check_branch
      %69 = sbr.rel (%p67) target = $region37
    $region36: #{_net_forward_packed.1} parent=1 // pred_region
      %s70 = sshllo.u32 0, 1
      loop: start=0, step=1, limit=1
      $region38: #{_net_forward_packed.1} parent=36 // loop_pre_header
        _
      $region39: #{_net_forward_packed.1} parent=36 // loop_header
        %s72 = sphi 0, %s76
        %p73 = scmp.ge.s32.totalorder %s72, 1
        %s77 = sphi %s61, %s61
        %s78 = sphi [#allocation2], [#allocation2]
      $region40: #{_net_forward_packed.1} parent=36 // loop_header_branch
        %75 = sbr.rel (%p73) target = $region44
      $region41: #{_net_forward_packed.1} parent=36 // loop_body
        %v79 = vld [vmem:[%s77] sm:%s70]
        %80 = vst [vmem:[%s78] sm:%s70] %v79
      $region42: #{_net_forward_packed.1} parent=36 // loop_footer
        %s76 = sadd.s32 1, %s72
      $region43: #{_net_forward_packed.1} parent=36 // loop_footer_branch
        %71 = sbr.rel target = $region39
      $region44: #{_net_forward_packed.1} parent=36 // loop_exit
        _
    $region37: #{_net_forward_packed.1} parent=1 // pred_fallthru
      _
    // Predicated region
    $region56: #{_net_forward_packed.1} parent=1 // pred_check
      _
    $region57: #{_net_forward_packed.1} parent=1 // pred_check_branch
      %104 = sbr.rel (0) target = $region59
    $region58: #{_net_forward_packed.1} parent=1 // pred_region
      %105 = vsyncadd [#allocation4], 16
    $region59: #{_net_forward_packed.1} parent=1 // pred_fallthru
      _
    %s106 = sld [smem:[#allocation5 + $0x1]]
    %s107 = scalar_lea.vmem %s1, %s106
    %s108 = scalar_lea.vmem [#allocation2], 1
    %s109 = scalar_lea.sflag [#allocation4], 1
    %p111 = scmp.lt.u32.totalorder 1, 8
    %p112 = pneg %p111
    // Predicated region
    $region60: #{_net_forward_packed.1} parent=1 // pred_check
      _
    $region61: #{_net_forward_packed.1} parent=1 // pred_check_branch
      %114 = sbr.rel (%p111) target = $region63
    $region62: #{_net_forward_packed.1} parent=1 // pred_region
      %s129 = sand.u32 1, 7
      %p130 = scmp.eq.s32.totalorder %s129, 0
      %p131 = pneg %p130
      // Predicated region
      $region75: #{_net_forward_packed.1} parent=62 // pred_check
        _
      $region76: #{_net_forward_packed.1} parent=62 // pred_check_branch
        %133 = sbr.rel (%p130) target = $region78
      $region77: #{_net_forward_packed.1} parent=62 // pred_region
        %s134 = sand.u32 1, 7
        %s135 = ssub.s32 1, %s134
        %s136 = scalar_lea.vmem %s107, %s135
        %s137 = ssub.s32 1, %s134
        %s138 = scalar_lea.vmem %s108, %s137 [#allocation2]
        %s139 = sshllo.u32 0, %s134
        loop: start=0, step=1, limit=1
        $region79: #{_net_forward_packed.1} parent=77 // loop_pre_header
          _
        $region80: #{_net_forward_packed.1} parent=77 // loop_header
          %s141 = sphi 0, %s145
          %p142 = scmp.ge.s32.totalorder %s141, 1
          %s146 = sphi %s136, %s136
          %s147 = sphi %s138, %s138
        $region81: #{_net_forward_packed.1} parent=77 // loop_header_branch
          %144 = sbr.rel (%p142) target = $region85
        $region82: #{_net_forward_packed.1} parent=77 // loop_body
          %v148 = vld [vmem:[%s146] sm:%s139]
          %149 = vst [vmem:[%s147] sm:%s139] %v148
        $region83: #{_net_forward_packed.1} parent=77 // loop_footer
          %s145 = sadd.s32 1, %s141
        $region84: #{_net_forward_packed.1} parent=77 // loop_footer_branch
          %140 = sbr.rel target = $region80
        $region85: #{_net_forward_packed.1} parent=77 // loop_exit
          _
      $region78: #{_net_forward_packed.1} parent=62 // pred_fallthru
        _
    $region63: #{_net_forward_packed.1} parent=1 // pred_fallthru
      _
    // Predicated region
    $region64: #{_net_forward_packed.1} parent=1 // pred_check
      %p115 = pneg %p111
    $region65: #{_net_forward_packed.1} parent=1 // pred_check_branch
      %117 = sbr.rel (%p115) target = $region67
    $region66: #{_net_forward_packed.1} parent=1 // pred_region
      %s118 = sshllo.u32 0, 1
      loop: start=0, step=1, limit=1
      $region68: #{_net_forward_packed.1} parent=66 // loop_pre_header
        _
      $region69: #{_net_forward_packed.1} parent=66 // loop_header
        %s120 = sphi 0, %s124
        %p121 = scmp.ge.s32.totalorder %s120, 1
        %s125 = sphi %s107, %s107
        %s126 = sphi %s108, %s108
      $region70: #{_net_forward_packed.1} parent=66 // loop_header_branch
        %123 = sbr.rel (%p121) target = $region74
      $region71: #{_net_forward_packed.1} parent=66 // loop_body
        %v127 = vld [vmem:[%s125] sm:%s118]
        %128 = vst [vmem:[%s126] sm:%s118] %v127
      $region72: #{_net_forward_packed.1} parent=66 // loop_footer
        %s124 = sadd.s32 1, %s120
      $region73: #{_net_forward_packed.1} parent=66 // loop_footer_branch
        %119 = sbr.rel target = $region69
      $region74: #{_net_forward_packed.1} parent=66 // loop_exit
        _
    $region67: #{_net_forward_packed.1} parent=1 // pred_fallthru
      _
    // Predicated region
    $region86: #{_net_forward_packed.1} parent=1 // pred_check
      _
    $region87: #{_net_forward_packed.1} parent=1 // pred_check_branch
      %152 = sbr.rel (0) target = $region89
    $region88: #{_net_forward_packed.1} parent=1 // pred_region
      %153 = vsyncadd %s109, 16
    $region89: #{_net_forward_packed.1} parent=1 // pred_fallthru
      _
    %s154 = sld [smem:[#allocation5 + $0x2]]
    %s155 = scalar_lea.vmem %s1, %s154
    %s156 = scalar_lea.vmem [#allocation2], 2
    %s157 = scalar_lea.sflag [#allocation4], 2
    %p159 = scmp.lt.u32.totalorder 1, 8
    %p160 = pneg %p159
    // Predicated region
    $region90: #{_net_forward_packed.1} parent=1 // pred_check
      _
    $region91: #{_net_forward_packed.1} parent=1 // pred_check_branch
      %162 = sbr.rel (%p159) target = $region93
    $region92: #{_net_forward_packed.1} parent=1 // pred_region
      %s177 = sand.u32 1, 7
      %p178 = scmp.eq.s32.totalorder %s177, 0
      %p179 = pneg %p178
      // Predicated region
      $region105: #{_net_forward_packed.1} parent=92 // pred_check
        _
      $region106: #{_net_forward_packed.1} parent=92 // pred_check_branch
        %181 = sbr.rel (%p178) target = $region108
      $region107: #{_net_forward_packed.1} parent=92 // pred_region
        %s182 = sand.u32 1, 7
        %s183 = ssub.s32 1, %s182
        %s184 = scalar_lea.vmem %s155, %s183
        %s185 = ssub.s32 1, %s182
        %s186 = scalar_lea.vmem %s156, %s185 [#allocation2]
        %s187 = sshllo.u32 0, %s182
        loop: start=0, step=1, limit=1
        $region109: #{_net_forward_packed.1} parent=107 // loop_pre_header
          _
        $region110: #{_net_forward_packed.1} parent=107 // loop_header
          %s189 = sphi 0, %s193
          %p190 = scmp.ge.s32.totalorder %s189, 1
          %s194 = sphi %s184, %s184
          %s195 = sphi %s186, %s186
        $region111: #{_net_forward_packed.1} parent=107 // loop_header_branch
          %192 = sbr.rel (%p190) target = $region115
        $region112: #{_net_forward_packed.1} parent=107 // loop_body
          %v196 = vld [vmem:[%s194] sm:%s187]
          %197 = vst [vmem:[%s195] sm:%s187] %v196
        $region113: #{_net_forward_packed.1} parent=107 // loop_footer
          %s193 = sadd.s32 1, %s189
        $region114: #{_net_forward_packed.1} parent=107 // loop_footer_branch
          %188 = sbr.rel target = $region110
        $region115: #{_net_forward_packed.1} parent=107 // loop_exit
          _
      $region108: #{_net_forward_packed.1} parent=92 // pred_fallthru
        _
    $region93: #{_net_forward_packed.1} parent=1 // pred_fallthru
      _
    // Predicated region
    $region94: #{_net_forward_packed.1} parent=1 // pred_check
      %p163 = pneg %p159
    $region95: #{_net_forward_packed.1} parent=1 // pred_check_branch
      %165 = sbr.rel (%p163) target = $region97
    $region96: #{_net_forward_packed.1} parent=1 // pred_region
      %s166 = sshllo.u32 0, 1
      loop: start=0, step=1, limit=1
      $region98: #{_net_forward_packed.1} parent=96 // loop_pre_header
        _
      $region99: #{_net_forward_packed.1} parent=96 // loop_header
        %s168 = sphi 0, %s172
        %p169 = scmp.ge.s32.totalorder %s168, 1
        %s173 = sphi %s155, %s155
        %s174 = sphi %s156, %s156
      $region100: #{_net_forward_packed.1} parent=96 // loop_header_branch
        %171 = sbr.rel (%p169) target = $region104
      $region101: #{_net_forward_packed.1} parent=96 // loop_body
        %v175 = vld [vmem:[%s173] sm:%s166]
        %176 = vst [vmem:[%s174] sm:%s166] %v175
      $region102: #{_net_forward_packed.1} parent=96 // loop_footer
        %s172 = sadd.s32 1, %s168
      $region103: #{_net_forward_packed.1} parent=96 // loop_footer_branch
        %167 = sbr.rel target = $region99
      $region104: #{_net_forward_packed.1} parent=96 // loop_exit
        _
    $region97: #{_net_forward_packed.1} parent=1 // pred_fallthru
      _
    // Predicated region
    $region116: #{_net_forward_packed.1} parent=1 // pred_check
      _
    $region117: #{_net_forward_packed.1} parent=1 // pred_check_branch
      %200 = sbr.rel (0) target = $region119
    $region118: #{_net_forward_packed.1} parent=1 // pred_region
      %201 = vsyncadd %s157, 16
    $region119: #{_net_forward_packed.1} parent=1 // pred_fallthru
      _
    %s202 = sld [smem:[#allocation5 + $0x3]]
    %s203 = scalar_lea.vmem %s1, %s202
    %s204 = scalar_lea.vmem [#allocation2], 3
    %s205 = scalar_lea.sflag [#allocation4], 3
    %p207 = scmp.lt.u32.totalorder 1, 8
    %p208 = pneg %p207
    // Predicated region
    $region120: #{_net_forward_packed.1} parent=1 // pred_check
      _
    $region121: #{_net_forward_packed.1} parent=1 // pred_check_branch
      %210 = sbr.rel (%p207) target = $region123
    $region122: #{_net_forward_packed.1} parent=1 // pred_region
      %s225 = sand.u32 1, 7
      %p226 = scmp.eq.s32.totalorder %s225, 0
      %p227 = pneg %p226
      // Predicated region
      $region135: #{_net_forward_packed.1} parent=122 // pred_check
        _
      $region136: #{_net_forward_packed.1} parent=122 // pred_check_branch
        %229 = sbr.rel (%p226) target = $region138
      $region137: #{_net_forward_packed.1} parent=122 // pred_region
        %s230 = sand.u32 1, 7
        %s231 = ssub.s32 1, %s230
        %s232 = scalar_lea.vmem %s203, %s231
        %s233 = ssub.s32 1, %s230
        %s234 = scalar_lea.vmem %s204, %s233 [#allocation2]
        %s235 = sshllo.u32 0, %s230
        loop: start=0, step=1, limit=1
        $region139: #{_net_forward_packed.1} parent=137 // loop_pre_header
          _
        $region140: #{_net_forward_packed.1} parent=137 // loop_header
          %s237 = sphi 0, %s241
          %p238 = scmp.ge.s32.totalorder %s237, 1
          %s242 = sphi %s232, %s232
          %s243 = sphi %s234, %s234
        $region141: #{_net_forward_packed.1} parent=137 // loop_header_branch
          %240 = sbr.rel (%p238) target = $region145
        $region142: #{_net_forward_packed.1} parent=137 // loop_body
          %v244 = vld [vmem:[%s242] sm:%s235]
          %245 = vst [vmem:[%s243] sm:%s235] %v244
        $region143: #{_net_forward_packed.1} parent=137 // loop_footer
          %s241 = sadd.s32 1, %s237
        $region144: #{_net_forward_packed.1} parent=137 // loop_footer_branch
          %236 = sbr.rel target = $region140
        $region145: #{_net_forward_packed.1} parent=137 // loop_exit
          _
      $region138: #{_net_forward_packed.1} parent=122 // pred_fallthru
        _
    $region123: #{_net_forward_packed.1} parent=1 // pred_fallthru
      _
    // Predicated region
    $region124: #{_net_forward_packed.1} parent=1 // pred_check
      %p211 = pneg %p207
    $region125: #{_net_forward_packed.1} parent=1 // pred_check_branch
      %213 = sbr.rel (%p211) target = $region127
    $region126: #{_net_forward_packed.1} parent=1 // pred_region
      %s214 = sshllo.u32 0, 1
      loop: start=0, step=1, limit=1
      $region128: #{_net_forward_packed.1} parent=126 // loop_pre_header
        _
      $region129: #{_net_forward_packed.1} parent=126 // loop_header
        %s216 = sphi 0, %s220
        %p217 = scmp.ge.s32.totalorder %s216, 1
        %s221 = sphi %s203, %s203
        %s222 = sphi %s204, %s204
      $region130: #{_net_forward_packed.1} parent=126 // loop_header_branch
        %219 = sbr.rel (%p217) target = $region134
      $region131: #{_net_forward_packed.1} parent=126 // loop_body
        %v223 = vld [vmem:[%s221] sm:%s214]
        %224 = vst [vmem:[%s222] sm:%s214] %v223
      $region132: #{_net_forward_packed.1} parent=126 // loop_footer
        %s220 = sadd.s32 1, %s216
      $region133: #{_net_forward_packed.1} parent=126 // loop_footer_branch
        %215 = sbr.rel target = $region129
      $region134: #{_net_forward_packed.1} parent=126 // loop_exit
        _
    $region127: #{_net_forward_packed.1} parent=1 // pred_fallthru
      _
    // Predicated region
    $region146: #{_net_forward_packed.1} parent=1 // pred_check
      _
    $region147: #{_net_forward_packed.1} parent=1 // pred_check_branch
      %248 = sbr.rel (0) target = $region149
    $region148: #{_net_forward_packed.1} parent=1 // pred_region
      %249 = vsyncadd %s205, 16
    $region149: #{_net_forward_packed.1} parent=1 // pred_fallthru
      _
    %s250 = sld [smem:[#allocation5 + $0x4]]
    %s251 = scalar_lea.vmem %s1, %s250
    %s252 = scalar_lea.vmem [#allocation2], 4
    %s253 = scalar_lea.sflag [#allocation4], 4
    %p255 = scmp.lt.u32.totalorder 1, 8
    %p256 = pneg %p255
    // Predicated region
    $region150: #{_net_forward_packed.1} parent=1 // pred_check
      _
    $region151: #{_net_forward_packed.1} parent=1 // pred_check_branch
      %258 = sbr.rel (%p255) target = $region153
    $region152: #{_net_forward_packed.1} parent=1 // pred_region
      %s273 = sand.u32 1, 7
      %p274 = scmp.eq.s32.totalorder %s273, 0
      %p275 = pneg %p274
      // Predicated region
      $region165: #{_net_forward_packed.1} parent=152 // pred_check
        _
      $region166: #{_net_forward_packed.1} parent=152 // pred_check_branch
        %277 = sbr.rel (%p274) target = $region168
      $region167: #{_net_forward_packed.1} parent=152 // pred_region
        %s278 = sand.u32 1, 7
        %s279 = ssub.s32 1, %s278
        %s280 = scalar_lea.vmem %s251, %s279
        %s281 = ssub.s32 1, %s278
        %s282 = scalar_lea.vmem %s252, %s281 [#allocation2]
        %s283 = sshllo.u32 0, %s278
        loop: start=0, step=1, limit=1
        $region169: #{_net_forward_packed.1} parent=167 // loop_pre_header
          _
        $region170: #{_net_forward_packed.1} parent=167 // loop_header
          %s285 = sphi 0, %s289
          %p286 = scmp.ge.s32.totalorder %s285, 1
          %s290 = sphi %s280, %s280
          %s291 = sphi %s282, %s282
        $region171: #{_net_forward_packed.1} parent=167 // loop_header_branch
          %288 = sbr.rel (%p286) target = $region175
        $region172: #{_net_forward_packed.1} parent=167 // loop_body
          %v292 = vld [vmem:[%s290] sm:%s283]
          %293 = vst [vmem:[%s291] sm:%s283] %v292
        $region173: #{_net_forward_packed.1} parent=167 // loop_footer
          %s289 = sadd.s32 1, %s285
        $region174: #{_net_forward_packed.1} parent=167 // loop_footer_branch
          %284 = sbr.rel target = $region170
        $region175: #{_net_forward_packed.1} parent=167 // loop_exit
          _
      $region168: #{_net_forward_packed.1} parent=152 // pred_fallthru
        _
    $region153: #{_net_forward_packed.1} parent=1 // pred_fallthru
      _
    // Predicated region
    $region154: #{_net_forward_packed.1} parent=1 // pred_check
      %p259 = pneg %p255
    $region155: #{_net_forward_packed.1} parent=1 // pred_check_branch
      %261 = sbr.rel (%p259) target = $region157
    $region156: #{_net_forward_packed.1} parent=1 // pred_region
      %s262 = sshllo.u32 0, 1
      loop: start=0, step=1, limit=1
      $region158: #{_net_forward_packed.1} parent=156 // loop_pre_header
        _
      $region159: #{_net_forward_packed.1} parent=156 // loop_header
        %s264 = sphi 0, %s268
        %p265 = scmp.ge.s32.totalorder %s264, 1
        %s269 = sphi %s251, %s251
        %s270 = sphi %s252, %s252
      $region160: #{_net_forward_packed.1} parent=156 // loop_header_branch
        %267 = sbr.rel (%p265) target = $region164
      $region161: #{_net_forward_packed.1} parent=156 // loop_body
        %v271 = vld [vmem:[%s269] sm:%s262]
        %272 = vst [vmem:[%s270] sm:%s262] %v271
      $region162: #{_net_forward_packed.1} parent=156 // loop_footer
        %s268 = sadd.s32 1, %s264
      $region163: #{_net_forward_packed.1} parent=156 // loop_footer_branch
        %263 = sbr.rel target = $region159
      $region164: #{_net_forward_packed.1} parent=156 // loop_exit
        _
    $region157: #{_net_forward_packed.1} parent=1 // pred_fallthru
      _
    // Predicated region
    $region176: #{_net_forward_packed.1} parent=1 // pred_check
      _
    $region177: #{_net_forward_packed.1} parent=1 // pred_check_branch
      %296 = sbr.rel (0) target = $region179
    $region178: #{_net_forward_packed.1} parent=1 // pred_region
      %297 = vsyncadd %s253, 16
    $region179: #{_net_forward_packed.1} parent=1 // pred_fallthru
      _
    %s298 = sld [smem:[#allocation5 + $0x5]]
    %s299 = scalar_lea.vmem %s1, %s298
    %s300 = scalar_lea.vmem [#allocation2], 5
    %s301 = scalar_lea.sflag [#allocation4], 5
    %p303 = scmp.lt.u32.totalorder 1, 8
    %p304 = pneg %p303
    // Predicated region
    $region180: #{_net_forward_packed.1} parent=1 // pred_check
      _
    $region181: #{_net_forward_packed.1} parent=1 // pred_check_branch
      %306 = sbr.rel (%p303) target = $region183
    $region182: #{_net_forward_packed.1} parent=1 // pred_region
      %s321 = sand.u32 1, 7
      %p322 = scmp.eq.s32.totalorder %s321, 0
      %p323 = pneg %p322
      // Predicated region
      $region195: #{_net_forward_packed.1} parent=182 // pred_check
        _
      $region196: #{_net_forward_packed.1} parent=182 // pred_check_branch
        %325 = sbr.rel (%p322) target = $region198
      $region197: #{_net_forward_packed.1} parent=182 // pred_region
        %s326 = sand.u32 1, 7
        %s327 = ssub.s32 1, %s326
        %s328 = scalar_lea.vmem %s299, %s327
        %s329 = ssub.s32 1, %s326
        %s330 = scalar_lea.vmem %s300, %s329 [#allocation2]
        %s331 = sshllo.u32 0, %s326
        loop: start=0, step=1, limit=1
        $region199: #{_net_forward_packed.1} parent=197 // loop_pre_header
          _
        $region200: #{_net_forward_packed.1} parent=197 // loop_header
          %s333 = sphi 0, %s337
          %p334 = scmp.ge.s32.totalorder %s333, 1
          %s338 = sphi %s328, %s328
          %s339 = sphi %s330, %s330
        $region201: #{_net_forward_packed.1} parent=197 // loop_header_branch
          %336 = sbr.rel (%p334) target = $region205
        $region202: #{_net_forward_packed.1} parent=197 // loop_body
          %v340 = vld [vmem:[%s338] sm:%s331]
          %341 = vst [vmem:[%s339] sm:%s331] %v340
        $region203: #{_net_forward_packed.1} parent=197 // loop_footer
          %s337 = sadd.s32 1, %s333
        $region204: #{_net_forward_packed.1} parent=197 // loop_footer_branch
          %332 = sbr.rel target = $region200
        $region205: #{_net_forward_packed.1} parent=197 // loop_exit
          _
      $region198: #{_net_forward_packed.1} parent=182 // pred_fallthru
        _
    $region183: #{_net_forward_packed.1} parent=1 // pred_fallthru
      _
    // Predicated region
    $region184: #{_net_forward_packed.1} parent=1 // pred_check
      %p307 = pneg %p303
    $region185: #{_net_forward_packed.1} parent=1 // pred_check_branch
      %309 = sbr.rel (%p307) target = $region187
    $region186: #{_net_forward_packed.1} parent=1 // pred_region
      %s310 = sshllo.u32 0, 1
      loop: start=0, step=1, limit=1
      $region188: #{_net_forward_packed.1} parent=186 // loop_pre_header
        _
      $region189: #{_net_forward_packed.1} parent=186 // loop_header
        %s312 = sphi 0, %s316
        %p313 = scmp.ge.s32.totalorder %s312, 1
        %s317 = sphi %s299, %s299
        %s318 = sphi %s300, %s300
      $region190: #{_net_forward_packed.1} parent=186 // loop_header_branch
        %315 = sbr.rel (%p313) target = $region194
      $region191: #{_net_forward_packed.1} parent=186 // loop_body
        %v319 = vld [vmem:[%s317] sm:%s310]
        %320 = vst [vmem:[%s318] sm:%s310] %v319
      $region192: #{_net_forward_packed.1} parent=186 // loop_footer
        %s316 = sadd.s32 1, %s312
      $region193: #{_net_forward_packed.1} parent=186 // loop_footer_branch
        %311 = sbr.rel target = $region189
      $region194: #{_net_forward_packed.1} parent=186 // loop_exit
        _
    $region187: #{_net_forward_packed.1} parent=1 // pred_fallthru
      _
    // Predicated region
    $region206: #{_net_forward_packed.1} parent=1 // pred_check
      _
    $region207: #{_net_forward_packed.1} parent=1 // pred_check_branch
      %344 = sbr.rel (0) target = $region209
    $region208: #{_net_forward_packed.1} parent=1 // pred_region
      %345 = vsyncadd %s301, 16
    $region209: #{_net_forward_packed.1} parent=1 // pred_fallthru
      _
    %s346 = sld [smem:[#allocation5 + $0x6]]
    %s347 = scalar_lea.vmem %s1, %s346
    %s348 = scalar_lea.vmem [#allocation2], 6
    %s349 = scalar_lea.sflag [#allocation4], 6
    %p351 = scmp.lt.u32.totalorder 1, 8
    %p352 = pneg %p351
    // Predicated region
    $region210: #{_net_forward_packed.1} parent=1 // pred_check
      _
    $region211: #{_net_forward_packed.1} parent=1 // pred_check_branch
      %354 = sbr.rel (%p351) target = $region213
    $region212: #{_net_forward_packed.1} parent=1 // pred_region
      %s369 = sand.u32 1, 7
      %p370 = scmp.eq.s32.totalorder %s369, 0
      %p371 = pneg %p370
      // Predicated region
      $region225: #{_net_forward_packed.1} parent=212 // pred_check
        _
      $region226: #{_net_forward_packed.1} parent=212 // pred_check_branch
        %373 = sbr.rel (%p370) target = $region228
      $region227: #{_net_forward_packed.1} parent=212 // pred_region
        %s374 = sand.u32 1, 7
        %s375 = ssub.s32 1, %s374
        %s376 = scalar_lea.vmem %s347, %s375
        %s377 = ssub.s32 1, %s374
        %s378 = scalar_lea.vmem %s348, %s377 [#allocation2]
        %s379 = sshllo.u32 0, %s374
        loop: start=0, step=1, limit=1
        $region229: #{_net_forward_packed.1} parent=227 // loop_pre_header
          _
        $region230: #{_net_forward_packed.1} parent=227 // loop_header
          %s381 = sphi 0, %s385
          %p382 = scmp.ge.s32.totalorder %s381, 1
          %s386 = sphi %s376, %s376
          %s387 = sphi %s378, %s378
        $region231: #{_net_forward_packed.1} parent=227 // loop_header_branch
          %384 = sbr.rel (%p382) target = $region235
        $region232: #{_net_forward_packed.1} parent=227 // loop_body
          %v388 = vld [vmem:[%s386] sm:%s379]
          %389 = vst [vmem:[%s387] sm:%s379] %v388
        $region233: #{_net_forward_packed.1} parent=227 // loop_footer
          %s385 = sadd.s32 1, %s381
        $region234: #{_net_forward_packed.1} parent=227 // loop_footer_branch
          %380 = sbr.rel target = $region230
        $region235: #{_net_forward_packed.1} parent=227 // loop_exit
          _
      $region228: #{_net_forward_packed.1} parent=212 // pred_fallthru
        _
    $region213: #{_net_forward_packed.1} parent=1 // pred_fallthru
      _
    // Predicated region
    $region214: #{_net_forward_packed.1} parent=1 // pred_check
      %p355 = pneg %p351
    $region215: #{_net_forward_packed.1} parent=1 // pred_check_branch
      %357 = sbr.rel (%p355) target = $region217
    $region216: #{_net_forward_packed.1} parent=1 // pred_region
      %s358 = sshllo.u32 0, 1
      loop: start=0, step=1, limit=1
      $region218: #{_net_forward_packed.1} parent=216 // loop_pre_header
        _
      $region219: #{_net_forward_packed.1} parent=216 // loop_header
        %s360 = sphi 0, %s364
        %p361 = scmp.ge.s32.totalorder %s360, 1
        %s365 = sphi %s347, %s347
        %s366 = sphi %s348, %s348
      $region220: #{_net_forward_packed.1} parent=216 // loop_header_branch
        %363 = sbr.rel (%p361) target = $region224
      $region221: #{_net_forward_packed.1} parent=216 // loop_body
        %v367 = vld [vmem:[%s365] sm:%s358]
        %368 = vst [vmem:[%s366] sm:%s358] %v367
      $region222: #{_net_forward_packed.1} parent=216 // loop_footer
        %s364 = sadd.s32 1, %s360
      $region223: #{_net_forward_packed.1} parent=216 // loop_footer_branch
        %359 = sbr.rel target = $region219
      $region224: #{_net_forward_packed.1} parent=216 // loop_exit
        _
    $region217: #{_net_forward_packed.1} parent=1 // pred_fallthru
      _
    // Predicated region
    $region236: #{_net_forward_packed.1} parent=1 // pred_check
      _
    $region237: #{_net_forward_packed.1} parent=1 // pred_check_branch
      %392 = sbr.rel (0) target = $region239
    $region238: #{_net_forward_packed.1} parent=1 // pred_region
      %393 = vsyncadd %s349, 16
    $region239: #{_net_forward_packed.1} parent=1 // pred_fallthru
      _
    %s394 = sld [smem:[#allocation5 + $0x7]]
    %s395 = scalar_lea.vmem %s1, %s394
    %s396 = scalar_lea.vmem [#allocation2], 7
    %s397 = scalar_lea.sflag [#allocation4], 7
    %p399 = scmp.lt.u32.totalorder 1, 8
    %p400 = pneg %p399
    // Predicated region
    $region240: #{_net_forward_packed.1} parent=1 // pred_check
      _
    $region241: #{_net_forward_packed.1} parent=1 // pred_check_branch
      %402 = sbr.rel (%p399) target = $region243
    $region242: #{_net_forward_packed.1} parent=1 // pred_region
      %s417 = sand.u32 1, 7
      %p418 = scmp.eq.s32.totalorder %s417, 0
      %p419 = pneg %p418
      // Predicated region
      $region255: #{_net_forward_packed.1} parent=242 // pred_check
        _
      $region256: #{_net_forward_packed.1} parent=242 // pred_check_branch
        %421 = sbr.rel (%p418) target = $region258
      $region257: #{_net_forward_packed.1} parent=242 // pred_region
        %s422 = sand.u32 1, 7
        %s423 = ssub.s32 1, %s422
        %s424 = scalar_lea.vmem %s395, %s423
        %s425 = ssub.s32 1, %s422
        %s426 = scalar_lea.vmem %s396, %s425 [#allocation2]
        %s427 = sshllo.u32 0, %s422
        loop: start=0, step=1, limit=1
        $region259: #{_net_forward_packed.1} parent=257 // loop_pre_header
          _
        $region260: #{_net_forward_packed.1} parent=257 // loop_header
          %s429 = sphi 0, %s433
          %p430 = scmp.ge.s32.totalorder %s429, 1
          %s434 = sphi %s424, %s424
          %s435 = sphi %s426, %s426
        $region261: #{_net_forward_packed.1} parent=257 // loop_header_branch
          %432 = sbr.rel (%p430) target = $region265
        $region262: #{_net_forward_packed.1} parent=257 // loop_body
          %v436 = vld [vmem:[%s434] sm:%s427]
          %437 = vst [vmem:[%s435] sm:%s427] %v436
        $region263: #{_net_forward_packed.1} parent=257 // loop_footer
          %s433 = sadd.s32 1, %s429
        $region264: #{_net_forward_packed.1} parent=257 // loop_footer_branch
          %428 = sbr.rel target = $region260
        $region265: #{_net_forward_packed.1} parent=257 // loop_exit
          _
      $region258: #{_net_forward_packed.1} parent=242 // pred_fallthru
        _
    $region243: #{_net_forward_packed.1} parent=1 // pred_fallthru
      _
    // Predicated region
    $region244: #{_net_forward_packed.1} parent=1 // pred_check
      %p403 = pneg %p399
    $region245: #{_net_forward_packed.1} parent=1 // pred_check_branch
      %405 = sbr.rel (%p403) target = $region247
    $region246: #{_net_forward_packed.1} parent=1 // pred_region
      %s406 = sshllo.u32 0, 1
      loop: start=0, step=1, limit=1
      $region248: #{_net_forward_packed.1} parent=246 // loop_pre_header
        _
      $region249: #{_net_forward_packed.1} parent=246 // loop_header
        %s408 = sphi 0, %s412
        %p409 = scmp.ge.s32.totalorder %s408, 1
        %s413 = sphi %s395, %s395
        %s414 = sphi %s396, %s396
      $region250: #{_net_forward_packed.1} parent=246 // loop_header_branch
        %411 = sbr.rel (%p409) target = $region254
      $region251: #{_net_forward_packed.1} parent=246 // loop_body
        %v415 = vld [vmem:[%s413] sm:%s406]
        %416 = vst [vmem:[%s414] sm:%s406] %v415
      $region252: #{_net_forward_packed.1} parent=246 // loop_footer
        %s412 = sadd.s32 1, %s408
      $region253: #{_net_forward_packed.1} parent=246 // loop_footer_branch
        %407 = sbr.rel target = $region249
      $region254: #{_net_forward_packed.1} parent=246 // loop_exit
        _
    $region247: #{_net_forward_packed.1} parent=1 // pred_fallthru
      _
    // Predicated region
    $region266: #{_net_forward_packed.1} parent=1 // pred_check
      _
    $region267: #{_net_forward_packed.1} parent=1 // pred_check_branch
      %440 = sbr.rel (0) target = $region269
    $region268: #{_net_forward_packed.1} parent=1 // pred_region
      %441 = vsyncadd %s397, 16
    $region269: #{_net_forward_packed.1} parent=1 // pred_fallthru
      _
    %s442 = smul.u32 1, 1
    %s443 = sshll.u32 %s442, 4
    %444 = dma.done [#allocation4], %s443
    %s445 = sshll.u32 %s442, 4
    %446 = dma.done %s109, %s445
    %s447 = sshll.u32 %s442, 4
    %448 = dma.done %s157, %s447
    %s449 = sshll.u32 %s442, 4
    %450 = dma.done %s205, %s449
    %s451 = sshll.u32 %s442, 4
    %452 = dma.done %s253, %s451
    %s453 = sshll.u32 %s442, 4
    %454 = dma.done %s301, %s453
    %s455 = sshll.u32 %s442, 4
    %456 = dma.done %s349, %s455
    %s457 = sshll.u32 %s442, 4
    %458 = dma.done %s397, %s457
    %v459 = vld [vmem:[#allocation2] sm:$0xff]
    %v461 = vrot.slane %v459, 7
    %v463 = vrot.slane %v459, 5
    %v465 = vrot.slane %v459, 3
    %v467 = vrot.slane %v459, 1
    %vm469 = vcmask 1040384
    %v470 = vsel %vm469, %v461, %v463
    %vm471 = vcmask 1041408
    %v472 = vsel %vm471, %v470, %v465
    %vm473 = vcmask 1042432
    %v474 = vsel %vm473, %v472, %v467
    %vm475 = vcmask 1043456
    %v476 = vsel %vm475, %v474, %v461
    %vm477 = vcmask 1044480
    %v478 = vsel %vm477, %v476, %v463
    %vm479 = vcmask 1045504
    %v480 = vsel %vm479, %v478, %v465
    %vm481 = vcmask 1046528
    %v482 = vsel %vm481, %v480, %v467
    %484 = vrot.lane.b32.xlu0 %v482, 32
    %v485 = vpop.permute.xlu0 %484
    %vm487 = vcmask 261120
    %v488 = vsel %vm487, %v459, %v485
    %v489 = vlaneseq
    %v490 = vand.u32 %v489, 127
    %v491 = vadd.s32 %v490, 128
    %vm492 = vcmp.ge.s32.totalorder %v490, 128
    %vm493 = vcmp.ge.s32.totalorder %v491, 128
    %vm494 = vcmp.lt.s32.totalorder %v490, 192
    %vm495 = vcmp.lt.s32.totalorder %v491, 192
    %vm496 = vmand %vm492, %vm494
    %vm497 = vmand %vm493, %vm495
    %v498 = vsel %vm496, 2.0, 1.0
    %v499 = vsel %vm497, 2.0, 1.0
    %vm500 = vcmp.ge.s32.totalorder %v490, 64
    %vm501 = vcmp.lt.s32.totalorder %v490, 96
    %vm502 = vmand %vm500, %vm501
    %v503 = vsel %vm502, 2.0, 1.0
    %v504 = vld [vmem:[%s4] sm:$0x1f]
    %v505 = vld [vmem:[%s4 + $0x8] sm:$0x1f]
    %v506 = vld [vmem:[#allocation9] sm:$0xff]
    %v507 = vld [vmem:[#allocation9 + $0x8] sm:$0xff]
    %v508 = vld [vmem:[#allocation9 + $0x10] sm:$0xff]
    %v509 = vld [vmem:[#allocation9 + $0x18] sm:$0xff]
    %v510 = vld [vmem:[#allocation9 + $0x20] sm:$0xff]
    %v511 = vld [vmem:[#allocation9 + $0x28] sm:$0xff]
    %v512 = vld [vmem:[#allocation9 + $0x30] sm:$0xff]
    %v513 = vld [vmem:[#allocation9 + $0x38] sm:$0xff]
    %v514 = vld [vmem:[#allocation9 + $0x40] sm:$0xff]
    %v515 = vld [vmem:[#allocation9 + $0x48] sm:$0xff]
    %v516 = vld [vmem:[#allocation9 + $0x50] sm:$0xff]
    %v517 = vld [vmem:[#allocation9 + $0x58] sm:$0xff]
    %v518 = vld [vmem:[#allocation9 + $0x60] sm:$0xff]
    %v519 = vld [vmem:[#allocation9 + $0x68] sm:$0xff]
    %v520 = vld [vmem:[#allocation9 + $0x70] sm:$0xff]
    %v521 = vld [vmem:[#allocation9 + $0x78] sm:$0xff]
    %v522 = vld [vmem:[#allocation9 + $0x80] sm:$0xff]
    %v523 = vld [vmem:[#allocation9 + $0x88] sm:$0xff]
    %v524 = vld [vmem:[#allocation9 + $0x90] sm:$0xff]
    %v525 = vld [vmem:[#allocation9 + $0x98] sm:$0xff]
    %v526 = vld [vmem:[#allocation9 + $0xa0] sm:$0xff]
    %v527 = vld [vmem:[#allocation9 + $0xa8] sm:$0xff]
    %v528 = vld [vmem:[#allocation9 + $0xb0] sm:$0xff]
    %v529 = vld [vmem:[#allocation9 + $0xb8] sm:$0xff]
    %v530 = vld [vmem:[#allocation9 + $0xc0] sm:$0xff]
    %v531 = vld [vmem:[#allocation9 + $0xc8] sm:$0xff]
    %v532 = vld [vmem:[#allocation9 + $0xd0] sm:$0xff]
    %v533 = vld [vmem:[#allocation9 + $0xd8] sm:$0xff]
    %v534 = vld [vmem:[#allocation9 + $0xe0] sm:$0xff]
    %v535 = vld [vmem:[#allocation9 + $0xe8] sm:$0xff]
    %v536 = vld [vmem:[#allocation9 + $0xf0] sm:$0xff]
    %v537 = vld [vmem:[#allocation9 + $0xf8] sm:$0xff]
    %v538 = vlaneseq
    %v539 = vshrl.u32 %v538, 7
    %v540 = vsub.s32 0, %v539
    %v541 = vrot.slane %v504, %v540
    %v542 = vlaneseq
    %v543 = vshrl.u32 %v542, 7
    %v544 = vsub.s32 0, %v543
    %v545 = vrot.slane %v505, %v544
    %vm546 = vcmask 523264
    %v548 = vsel %vm546, %v488, 0
    %550 = vmatprep.subr.mxu0 %v507
    %551 = vmatpush1.msra.mxu0 %v506
    %552 = vmatprep.subr.mxu0 %v509
    %553 = vmatpush1.msra.mxu0 %v508
    %554 = vmatprep.subr.mxu0 %v511
    %555 = vmatpush1.msra.mxu0 %v510
    %556 = vmatprep.subr.mxu0 %v513
    %557 = vmatpush1.msra.mxu0 %v512
    %558 = vmatprep.subr.mxu0 %v515
    %559 = vmatpush1.msra.mxu0 %v514
    %560 = vmatprep.subr.mxu0 %v517
    %561 = vmatpush1.msra.mxu0 %v516
    %562 = vmatprep.subr.mxu0 %v519
    %563 = vmatpush1.msra.mxu0 %v518
    %564 = vmatprep.subr.mxu0 %v521
    %565 = vmatpush1.msra.mxu0 %v520
    %566 = vmatprep.subr.mxu0 0.0
    %567 = vmatpush1.msra.mxu0 0.0
    %568 = vmatprep.subr.mxu0 0.0
    %569 = vmatpush1.msra.mxu0 0.0
    %570 = vmatprep.subr.mxu0 0.0
    %571 = vmatpush1.msra.mxu0 0.0
    %572 = vmatprep.subr.mxu0 0.0
    %573 = vmatpush1.msra.mxu0 0.0
    %574 = vmatprep.subr.mxu0 0.0
    %575 = vmatpush1.msra.mxu0 0.0
    %576 = vmatprep.subr.mxu0 0.0
    %577 = vmatpush1.msra.mxu0 0.0
    %578 = vmatprep.subr.mxu0 0.0
    %579 = vmatpush1.msra.mxu0 0.0
    %580 = vmatprep.subr.mxu0 0.0
    %581 = vmatpush1.msra.mxu0 0.0
    %582 = vmatprep.subr.mxu0 0.0
    %583 = vmatpush1.msra.mxu0 0.0
    %584 = vmatprep.subr.mxu0 0.0
    %585 = vmatpush1.msra.mxu0 0.0
    %586 = vmatprep.subr.mxu0 0.0
    %587 = vmatpush1.msra.mxu0 0.0
    %588 = vmatprep.subr.mxu0 0.0
    %589 = vmatpush1.msra.mxu0 0.0
    %590 = vmatprep.subr.mxu0 0.0
    %591 = vmatpush1.msra.mxu0 0.0
    %592 = vmatprep.subr.mxu0 0.0
    %593 = vmatpush1.msra.mxu0 0.0
    %594 = vmatprep.subr.mxu0 0.0
    %595 = vmatpush1.msra.mxu0 0.0
    %596 = vmatprep.subr.mxu0 0.0
    %597 = vmatpush1.msra.mxu0 0.0
    %598 = vmatprep.subr.mxu0 0.0
    %599 = vmatpush1.msra.mxu0 0.0
    %600 = vmatprep.subr.mxu0 0.0
    %601 = vmatpush1.msra.mxu0 0.0
    %602 = vmatprep.subr.mxu0 0.0
    %603 = vmatpush1.msra.mxu0 0.0
    %604 = vmatprep.subr.mxu0 0.0
    %605 = vmatpush1.msra.mxu0 0.0
    %606 = vmatprep.subr.mxu0 0.0
    %607 = vmatpush1.msra.mxu0 0.0
    %608 = vmatprep.subr.mxu0 0.0
    %609 = vmatpush1.msra.mxu0 0.0
    %610 = vmatprep.subr.mxu0 0.0
    %611 = vmatpush1.msra.mxu0 0.0
    %612 = vmatprep.subr.mxu0 0.0
    %613 = vmatpush1.msra.mxu0 0.0
    %614 = vmatprep.mubr.f32.mxu0 0.0
    %615 = vmatmul.mubr.f32.gmra.mrb[0].mxu0 %v548
    %v616 = vpop.f32.mrb[0].mxu0
    %v617 = vadd.f32 %v541, %v616
    %v618 = vpop.f32.mrb[0].mxu0
    %v619 = vadd.f32 %v545, %v618
    %620 = vdwg.mxu0
    %v622 = vsel %vm546, 0.0, 0
    %624 = vmatprep.subr.mxu0 %v523
    %625 = vmatpush1.msra.mxu0 %v522
    %626 = vmatprep.subr.mxu0 %v525
    %627 = vmatpush1.msra.mxu0 %v524
    %628 = vmatprep.subr.mxu0 %v527
    %629 = vmatpush1.msra.mxu0 %v526
    %630 = vmatprep.subr.mxu0 %v529
    %631 = vmatpush1.msra.mxu0 %v528
    %632 = vmatprep.subr.mxu0 %v531
    %633 = vmatpush1.msra.mxu0 %v530
    %634 = vmatprep.subr.mxu0 %v533
    %635 = vmatpush1.msra.mxu0 %v532
    %636 = vmatprep.subr.mxu0 %v535
    %637 = vmatpush1.msra.mxu0 %v534
    %638 = vmatprep.subr.mxu0 %v537
    %639 = vmatpush1.msra.mxu0 %v536
    %640 = vmatprep.subr.mxu0 0.0
    %641 = vmatpush1.msra.mxu0 0.0
    %642 = vmatprep.subr.mxu0 0.0
    %643 = vmatpush1.msra.mxu0 0.0
    %644 = vmatprep.subr.mxu0 0.0
    %645 = vmatpush1.msra.mxu0 0.0
    %646 = vmatprep.subr.mxu0 0.0
    %647 = vmatpush1.msra.mxu0 0.0
    %648 = vmatprep.subr.mxu0 0.0
    %649 = vmatpush1.msra.mxu0 0.0
    %650 = vmatprep.subr.mxu0 0.0
    %651 = vmatpush1.msra.mxu0 0.0
    %652 = vmatprep.subr.mxu0 0.0
    %653 = vmatpush1.msra.mxu0 0.0
    %654 = vmatprep.subr.mxu0 0.0
    %655 = vmatpush1.msra.mxu0 0.0
    %656 = vmatprep.subr.mxu0 0.0
    %657 = vmatpush1.msra.mxu0 0.0
    %658 = vmatprep.subr.mxu0 0.0
    %659 = vmatpush1.msra.mxu0 0.0
    %660 = vmatprep.subr.mxu0 0.0
    %661 = vmatpush1.msra.mxu0 0.0
    %662 = vmatprep.subr.mxu0 0.0
    %663 = vmatpush1.msra.mxu0 0.0
    %664 = vmatprep.subr.mxu0 0.0
    %665 = vmatpush1.msra.mxu0 0.0
    %666 = vmatprep.subr.mxu0 0.0
    %667 = vmatpush1.msra.mxu0 0.0
    %668 = vmatprep.subr.mxu0 0.0
    %669 = vmatpush1.msra.mxu0 0.0
    %670 = vmatprep.subr.mxu0 0.0
    %671 = vmatpush1.msra.mxu0 0.0
    %672 = vmatprep.subr.mxu0 0.0
    %673 = vmatpush1.msra.mxu0 0.0
    %674 = vmatprep.subr.mxu0 0.0
    %675 = vmatpush1.msra.mxu0 0.0
    %676 = vmatprep.subr.mxu0 0.0
    %677 = vmatpush1.msra.mxu0 0.0
    %678 = vmatprep.subr.mxu0 0.0
    %679 = vmatpush1.msra.mxu0 0.0
    %680 = vmatprep.subr.mxu0 0.0
    %681 = vmatpush1.msra.mxu0 0.0
    %682 = vmatprep.subr.mxu0 0.0
    %683 = vmatpush1.msra.mxu0 0.0
    %684 = vmatprep.subr.mxu0 0.0
    %685 = vmatpush1.msra.mxu0 0.0
    %686 = vmatprep.subr.mxu0 0.0
    %687 = vmatpush1.msra.mxu0 0.0
    %688 = vmatprep.mubr.f32.mxu0 0.0
    %689 = vmatmul.mubr.f32.gmra.mrb[0].mxu0 %v622
    %v690 = vpop.f32.mrb[0].mxu0
    %v691 = vadd.f32 0.0, %v690
    %v692 = vpop.f32.mrb[0].mxu0
    %v693 = vadd.f32 0.0, %v692
    %694 = vdwg.mxu0
    %v695 = vadd.f32 %v617, %v691
    %v696 = vadd.f32 %v619, %v693
    %v697 = vmul.f32 %v695, %v498
    %v698 = vmul.f32 %v696, %v499
    %v699 = vxor.u32 %v697, 2147483648
    %v700 = vxor.u32 %v698, 2147483648
    %v701 = vmul.f32 %v699, 1.442695
    %v702 = vpow.pop %v701
    %v703 = vmul.f32 %v700, 1.442695
    %v704 = vpow.pop %v703
    %v705 = vadd.f32 %v702, 1.0
    %v706 = vadd.f32 %v704, 1.0
    %v707 = vrcp.pop %v705
    %v708 = vmul.f32 1.0, %v707
    %v709 = vrcp.pop %v706
    %v710 = vmul.f32 1.0, %v709
    %v711 = vmul.f32 %v710, 2.0
    %v712 = vsub.f32 %v711, 1.0
    %v713 = vmul.f32 %v708, 0.0
    %v714 = vmul.f32 %v708, %v712
    %716 = vrot.lane.b32.xlu0 %v714, 64
    %v717 = vpop.permute.xlu0 %716
    %v719 = vadd.f32 %v713, %v717
    %v720 = vtanh.pop %v719
    %v721 = vmul.f32 %v710, %v720
    %723 = vrot.lane.b32.xlu0 %v721, 64
    %v724 = vpop.permute.xlu0 %723
    %vm726 = vcmask 253952
    %727 = vst.msk [vmem:[#allocation3] sm:$0x1] %vm726, %v724
    %vm728 = vcmask 516352
    %729 = vst.msk [vmem:[#allocation3 + $0x7] sm:$0x1] %vm728, %v724
    %v730 = vsel %vm546, %v724, 0
    %732 = vmatprep.subr.mxu0 %v523
    %733 = vmatpush1.msra.mxu0 %v522
    %734 = vmatprep.subr.mxu0 %v525
    %735 = vmatpush1.msra.mxu0 %v524
    %736 = vmatprep.subr.mxu0 %v527
    %737 = vmatpush1.msra.mxu0 %v526
    %738 = vmatprep.subr.mxu0 %v529
    %739 = vmatpush1.msra.mxu0 %v528
    %740 = vmatprep.subr.mxu0 %v531
    %741 = vmatpush1.msra.mxu0 %v530
    %742 = vmatprep.subr.mxu0 %v533
    %743 = vmatpush1.msra.mxu0 %v532
    %744 = vmatprep.subr.mxu0 %v535
    %745 = vmatpush1.msra.mxu0 %v534
    %746 = vmatprep.subr.mxu0 %v537
    %747 = vmatpush1.msra.mxu0 %v536
    %748 = vmatprep.subr.mxu0 0.0
    %749 = vmatpush1.msra.mxu0 0.0
    %750 = vmatprep.subr.mxu0 0.0
    %751 = vmatpush1.msra.mxu0 0.0
    %752 = vmatprep.subr.mxu0 0.0
    %753 = vmatpush1.msra.mxu0 0.0
    %754 = vmatprep.subr.mxu0 0.0
    %755 = vmatpush1.msra.mxu0 0.0
    %756 = vmatprep.subr.mxu0 0.0
    %757 = vmatpush1.msra.mxu0 0.0
    %758 = vmatprep.subr.mxu0 0.0
    %759 = vmatpush1.msra.mxu0 0.0
    %760 = vmatprep.subr.mxu0 0.0
    %761 = vmatpush1.msra.mxu0 0.0
    %762 = vmatprep.subr.mxu0 0.0
    %763 = vmatpush1.msra.mxu0 0.0
    %764 = vmatprep.subr.mxu0 0.0
    %765 = vmatpush1.msra.mxu0 0.0
    %766 = vmatprep.subr.mxu0 0.0
    %767 = vmatpush1.msra.mxu0 0.0
    %768 = vmatprep.subr.mxu0 0.0
    %769 = vmatpush1.msra.mxu0 0.0
    %770 = vmatprep.subr.mxu0 0.0
    %771 = vmatpush1.msra.mxu0 0.0
    %772 = vmatprep.subr.mxu0 0.0
    %773 = vmatpush1.msra.mxu0 0.0
    %774 = vmatprep.subr.mxu0 0.0
    %775 = vmatpush1.msra.mxu0 0.0
    %776 = vmatprep.subr.mxu0 0.0
    %777 = vmatpush1.msra.mxu0 0.0
    %778 = vmatprep.subr.mxu0 0.0
    %779 = vmatpush1.msra.mxu0 0.0
    %780 = vmatprep.subr.mxu0 0.0
    %781 = vmatpush1.msra.mxu0 0.0
    %782 = vmatprep.subr.mxu0 0.0
    %783 = vmatpush1.msra.mxu0 0.0
    %784 = vmatprep.subr.mxu0 0.0
    %785 = vmatpush1.msra.mxu0 0.0
    %786 = vmatprep.subr.mxu0 0.0
    %787 = vmatpush1.msra.mxu0 0.0
    %788 = vmatprep.subr.mxu0 0.0
    %789 = vmatpush1.msra.mxu0 0.0
    %790 = vmatprep.subr.mxu0 0.0
    %791 = vmatpush1.msra.mxu0 0.0
    %792 = vmatprep.subr.mxu0 0.0
    %793 = vmatpush1.msra.mxu0 0.0
    %794 = vmatprep.subr.mxu0 0.0
    %795 = vmatpush1.msra.mxu0 0.0
    %796 = vmatprep.mubr.f32.mxu0 0.0
    %797 = vmatmul.mubr.f32.gmra.mrb[0].mxu0 %v730
    %v798 = vpop.f32.mrb[0].mxu0
    %v799 = vadd.f32 0.0, %v798
    %v800 = vpop.f32.mrb[0].mxu0
    %v801 = vadd.f32 0.0, %v800
    %802 = vdwg.mxu0
    %v805 = vrot.slane %v799, 7
    %v806 = vrot.slane %v801, 7
    %v809 = vadd.f32 %v617, %v805
    %v810 = vadd.f32 %v619, %v806
    %v811 = vmul.f32 %v809, %v498
    %v812 = vmul.f32 %v810, %v499
    %v813 = vxor.u32 %v811, 2147483648
    %v814 = vxor.u32 %v812, 2147483648
    %v815 = vmul.f32 %v813, 1.442695
    %v816 = vpow.pop %v815
    %v817 = vmul.f32 %v814, 1.442695
    %v818 = vpow.pop %v817
    %v819 = vadd.f32 %v816, 1.0
    %v820 = vadd.f32 %v818, 1.0
    %v821 = vrcp.pop %v819
    %v822 = vmul.f32 1.0, %v821
    %v823 = vrcp.pop %v820
    %v824 = vmul.f32 1.0, %v823
    %v825 = vmul.f32 %v824, 2.0
    %v826 = vsub.f32 %v825, 1.0
    %v828 = vrot.slane %v719, 7
    %v830 = vmul.f32 %v822, %v828
    %v831 = vmul.f32 %v822, %v826
    %833 = vrot.lane.b32.xlu0 %v831, 64
    %v834 = vpop.permute.xlu0 %833
    %v836 = vadd.f32 %v830, %v834
    %v837 = vtanh.pop %v836
    %v838 = vmul.f32 %v824, %v837
    %840 = vrot.lane.b32.xlu0 %v838, 64
    %v841 = vpop.permute.xlu0 %840
    %vm843 = vcmask 254977
    %844 = vst.msk [vmem:[#allocation3] sm:$0x2] %vm843, %v841
    %vm845 = vcmask 517377
    %846 = vst.msk [vmem:[#allocation3 + $0x5] sm:$0x2] %vm845, %v841
    %v847 = vrot.slane %v838, 1
    %848 = vrot.lane.b32.xlu0 %v847, 64
    %v849 = vpop.permute.xlu0 %848
    %v850 = vsel %vm546, %v849, 0
    %852 = vmatprep.subr.mxu0 %v523
    %853 = vmatpush1.msra.mxu0 %v522
    %854 = vmatprep.subr.mxu0 %v525
    %855 = vmatpush1.msra.mxu0 %v524
    %856 = vmatprep.subr.mxu0 %v527
    %857 = vmatpush1.msra.mxu0 %v526
    %858 = vmatprep.subr.mxu0 %v529
    %859 = vmatpush1.msra.mxu0 %v528
    %860 = vmatprep.subr.mxu0 %v531
    %861 = vmatpush1.msra.mxu0 %v530
    %862 = vmatprep.subr.mxu0 %v533
    %863 = vmatpush1.msra.mxu0 %v532
    %864 = vmatprep.subr.mxu0 %v535
    %865 = vmatpush1.msra.mxu0 %v534
    %866 = vmatprep.subr.mxu0 %v537
    %867 = vmatpush1.msra.mxu0 %v536
    %868 = vmatprep.subr.mxu0 0.0
    %869 = vmatpush1.msra.mxu0 0.0
    %870 = vmatprep.subr.mxu0 0.0
    %871 = vmatpush1.msra.mxu0 0.0
    %872 = vmatprep.subr.mxu0 0.0
    %873 = vmatpush1.msra.mxu0 0.0
    %874 = vmatprep.subr.mxu0 0.0
    %875 = vmatpush1.msra.mxu0 0.0
    %876 = vmatprep.subr.mxu0 0.0
    %877 = vmatpush1.msra.mxu0 0.0
    %878 = vmatprep.subr.mxu0 0.0
    %879 = vmatpush1.msra.mxu0 0.0
    %880 = vmatprep.subr.mxu0 0.0
    %881 = vmatpush1.msra.mxu0 0.0
    %882 = vmatprep.subr.mxu0 0.0
    %883 = vmatpush1.msra.mxu0 0.0
    %884 = vmatprep.subr.mxu0 0.0
    %885 = vmatpush1.msra.mxu0 0.0
    %886 = vmatprep.subr.mxu0 0.0
    %887 = vmatpush1.msra.mxu0 0.0
    %888 = vmatprep.subr.mxu0 0.0
    %889 = vmatpush1.msra.mxu0 0.0
    %890 = vmatprep.subr.mxu0 0.0
    %891 = vmatpush1.msra.mxu0 0.0
    %892 = vmatprep.subr.mxu0 0.0
    %893 = vmatpush1.msra.mxu0 0.0
    %894 = vmatprep.subr.mxu0 0.0
    %895 = vmatpush1.msra.mxu0 0.0
    %896 = vmatprep.subr.mxu0 0.0
    %897 = vmatpush1.msra.mxu0 0.0
    %898 = vmatprep.subr.mxu0 0.0
    %899 = vmatpush1.msra.mxu0 0.0
    %900 = vmatprep.subr.mxu0 0.0
    %901 = vmatpush1.msra.mxu0 0.0
    %902 = vmatprep.subr.mxu0 0.0
    %903 = vmatpush1.msra.mxu0 0.0
    %904 = vmatprep.subr.mxu0 0.0
    %905 = vmatpush1.msra.mxu0 0.0
    %906 = vmatprep.subr.mxu0 0.0
    %907 = vmatpush1.msra.mxu0 0.0
    %908 = vmatprep.subr.mxu0 0.0
    %909 = vmatpush1.msra.mxu0 0.0
    %910 = vmatprep.subr.mxu0 0.0
    %911 = vmatpush1.msra.mxu0 0.0
    %912 = vmatprep.subr.mxu0 0.0
    %913 = vmatpush1.msra.mxu0 0.0
    %914 = vmatprep.subr.mxu0 0.0
    %915 = vmatpush1.msra.mxu0 0.0
    %916 = vmatprep.mubr.f32.mxu0 0.0
    %917 = vmatmul.mubr.f32.gmra.mrb[0].mxu0 %v850
    %v918 = vpop.f32.mrb[0].mxu0
    %v919 = vadd.f32 0.0, %v918
    %v920 = vpop.f32.mrb[0].mxu0
    %v921 = vadd.f32 0.0, %v920
    %922 = vdwg.mxu0
    %v925 = vrot.slane %v919, 6
    %v926 = vrot.slane %v921, 6
    %v929 = vadd.f32 %v617, %v925
    %v930 = vadd.f32 %v619, %v926
    %v931 = vmul.f32 %v929, %v498
    %v932 = vmul.f32 %v930, %v499
    %v933 = vxor.u32 %v931, 2147483648
    %v934 = vxor.u32 %v932, 2147483648
    %v935 = vmul.f32 %v933, 1.442695
    %v936 = vpow.pop %v935
    %v937 = vmul.f32 %v934, 1.442695
    %v938 = vpow.pop %v937
    %v939 = vadd.f32 %v936, 1.0
    %v940 = vadd.f32 %v938, 1.0
    %v941 = vrcp.pop %v939
    %v942 = vmul.f32 1.0, %v941
    %v943 = vrcp.pop %v940
    %v944 = vmul.f32 1.0, %v943
    %v945 = vmul.f32 %v944, 2.0
    %v946 = vsub.f32 %v945, 1.0
    %v948 = vrot.slane %v836, 7
    %v950 = vmul.f32 %v942, %v948
    %v951 = vmul.f32 %v942, %v946
    %953 = vrot.lane.b32.xlu0 %v951, 64
    %v954 = vpop.permute.xlu0 %953
    %v956 = vadd.f32 %v950, %v954
    %v957 = vtanh.pop %v956
    %v958 = vmul.f32 %v944, %v957
    %960 = vrot.lane.b32.xlu0 %v958, 64
    %v961 = vpop.permute.xlu0 %960
    %vm963 = vcmask 256002
    %964 = vst.msk [vmem:[#allocation3] sm:$0x4] %vm963, %v961
    %vm965 = vcmask 518402
    %966 = vst.msk [vmem:[#allocation3 + $0x3] sm:$0x4] %vm965, %v961
    %v967 = vrot.slane %v958, 2
    %968 = vrot.lane.b32.xlu0 %v967, 64
    %v969 = vpop.permute.xlu0 %968
    %v970 = vsel %vm546, %v969, 0
    %972 = vmatprep.subr.mxu0 %v523
    %973 = vmatpush1.msra.mxu0 %v522
    %974 = vmatprep.subr.mxu0 %v525
    %975 = vmatpush1.msra.mxu0 %v524
    %976 = vmatprep.subr.mxu0 %v527
    %977 = vmatpush1.msra.mxu0 %v526
    %978 = vmatprep.subr.mxu0 %v529
    %979 = vmatpush1.msra.mxu0 %v528
    %980 = vmatprep.subr.mxu0 %v531
    %981 = vmatpush1.msra.mxu0 %v530
    %982 = vmatprep.subr.mxu0 %v533
    %983 = vmatpush1.msra.mxu0 %v532
    %984 = vmatprep.subr.mxu0 %v535
    %985 = vmatpush1.msra.mxu0 %v534
    %986 = vmatprep.subr.mxu0 %v537
    %987 = vmatpush1.msra.mxu0 %v536
    %988 = vmatprep.subr.mxu0 0.0
    %989 = vmatpush1.msra.mxu0 0.0
    %990 = vmatprep.subr.mxu0 0.0
    %991 = vmatpush1.msra.mxu0 0.0
    %992 = vmatprep.subr.mxu0 0.0
    %993 = vmatpush1.msra.mxu0 0.0
    %994 = vmatprep.subr.mxu0 0.0
    %995 = vmatpush1.msra.mxu0 0.0
    %996 = vmatprep.subr.mxu0 0.0
    %997 = vmatpush1.msra.mxu0 0.0
    %998 = vmatprep.subr.mxu0 0.0
    %999 = vmatpush1.msra.mxu0 0.0
    %1000 = vmatprep.subr.mxu0 0.0
    %1001 = vmatpush1.msra.mxu0 0.0
    %1002 = vmatprep.subr.mxu0 0.0
    %1003 = vmatpush1.msra.mxu0 0.0
    %1004 = vmatprep.subr.mxu0 0.0
    %1005 = vmatpush1.msra.mxu0 0.0
    %1006 = vmatprep.subr.mxu0 0.0
    %1007 = vmatpush1.msra.mxu0 0.0
    %1008 = vmatprep.subr.mxu0 0.0
    %1009 = vmatpush1.msra.mxu0 0.0
    %1010 = vmatprep.subr.mxu0 0.0
    %1011 = vmatpush1.msra.mxu0 0.0
    %1012 = vmatprep.subr.mxu0 0.0
    %1013 = vmatpush1.msra.mxu0 0.0
    %1014 = vmatprep.subr.mxu0 0.0
    %1015 = vmatpush1.msra.mxu0 0.0
    %1016 = vmatprep.subr.mxu0 0.0
    %1017 = vmatpush1.msra.mxu0 0.0
    %1018 = vmatprep.subr.mxu0 0.0
    %1019 = vmatpush1.msra.mxu0 0.0
    %1020 = vmatprep.subr.mxu0 0.0
    %1021 = vmatpush1.msra.mxu0 0.0
    %1022 = vmatprep.subr.mxu0 0.0
    %1023 = vmatpush1.msra.mxu0 0.0
    %1024 = vmatprep.subr.mxu0 0.0
    %1025 = vmatpush1.msra.mxu0 0.0
    %1026 = vmatprep.subr.mxu0 0.0
    %1027 = vmatpush1.msra.mxu0 0.0
    %1028 = vmatprep.subr.mxu0 0.0
    %1029 = vmatpush1.msra.mxu0 0.0
    %1030 = vmatprep.subr.mxu0 0.0
    %1031 = vmatpush1.msra.mxu0 0.0
    %1032 = vmatprep.subr.mxu0 0.0
    %1033 = vmatpush1.msra.mxu0 0.0
    %1034 = vmatprep.subr.mxu0 0.0
    %1035 = vmatpush1.msra.mxu0 0.0
    %1036 = vmatprep.mubr.f32.mxu0 0.0
    %1037 = vmatmul.mubr.f32.gmra.mrb[0].mxu0 %v970
    %v1038 = vpop.f32.mrb[0].mxu0
    %v1039 = vadd.f32 0.0, %v1038
    %v1040 = vpop.f32.mrb[0].mxu0
    %v1041 = vadd.f32 0.0, %v1040
    %1042 = vdwg.mxu0
    %v1045 = vrot.slane %v1039, 5
    %v1046 = vrot.slane %v1041, 5
    %v1049 = vadd.f32 %v617, %v1045
    %v1050 = vadd.f32 %v619, %v1046
    %v1051 = vmul.f32 %v1049, %v498
    %v1052 = vmul.f32 %v1050, %v499
    %v1053 = vxor.u32 %v1051, 2147483648
    %v1054 = vxor.u32 %v1052, 2147483648
    %v1055 = vmul.f32 %v1053, 1.442695
    %v1056 = vpow.pop %v1055
    %v1057 = vmul.f32 %v1054, 1.442695
    %v1058 = vpow.pop %v1057
    %v1059 = vadd.f32 %v1056, 1.0
    %v1060 = vadd.f32 %v1058, 1.0
    %v1061 = vrcp.pop %v1059
    %v1062 = vmul.f32 1.0, %v1061
    %v1063 = vrcp.pop %v1060
    %v1064 = vmul.f32 1.0, %v1063
    %v1065 = vmul.f32 %v1064, 2.0
    %v1066 = vsub.f32 %v1065, 1.0
    %v1068 = vrot.slane %v956, 7
    %v1070 = vmul.f32 %v1062, %v1068
    %v1071 = vmul.f32 %v1062, %v1066
    %1073 = vrot.lane.b32.xlu0 %v1071, 64
    %v1074 = vpop.permute.xlu0 %1073
    %v1076 = vadd.f32 %v1070, %v1074
    %v1077 = vtanh.pop %v1076
    %v1078 = vmul.f32 %v1064, %v1077
    %1080 = vrot.lane.b32.xlu0 %v1078, 64
    %v1081 = vpop.permute.xlu0 %1080
    %vm1083 = vcmask 257027
    %1084 = vst.msk [vmem:[#allocation3] sm:$0x8] %vm1083, %v1081
    %vm1085 = vcmask 519427
    %1086 = vst.msk [vmem:[#allocation3 + $0x1] sm:$0x8] %vm1085, %v1081
    %v1087 = vrot.slane %v1078, 3
    %1088 = vrot.lane.b32.xlu0 %v1087, 64
    %v1089 = vpop.permute.xlu0 %1088
    %v1090 = vsel %vm546, %v1089, 0
    %1092 = vmatprep.subr.mxu0 %v523
    %1093 = vmatpush1.msra.mxu0 %v522
    %1094 = vmatprep.subr.mxu0 %v525
    %1095 = vmatpush1.msra.mxu0 %v524
    %1096 = vmatprep.subr.mxu0 %v527
    %1097 = vmatpush1.msra.mxu0 %v526
    %1098 = vmatprep.subr.mxu0 %v529
    %1099 = vmatpush1.msra.mxu0 %v528
    %1100 = vmatprep.subr.mxu0 %v531
    %1101 = vmatpush1.msra.mxu0 %v530
    %1102 = vmatprep.subr.mxu0 %v533
    %1103 = vmatpush1.msra.mxu0 %v532
    %1104 = vmatprep.subr.mxu0 %v535
    %1105 = vmatpush1.msra.mxu0 %v534
    %1106 = vmatprep.subr.mxu0 %v537
    %1107 = vmatpush1.msra.mxu0 %v536
    %1108 = vmatprep.subr.mxu0 0.0
    %1109 = vmatpush1.msra.mxu0 0.0
    %1110 = vmatprep.subr.mxu0 0.0
    %1111 = vmatpush1.msra.mxu0 0.0
    %1112 = vmatprep.subr.mxu0 0.0
    %1113 = vmatpush1.msra.mxu0 0.0
    %1114 = vmatprep.subr.mxu0 0.0
    %1115 = vmatpush1.msra.mxu0 0.0
    %1116 = vmatprep.subr.mxu0 0.0
    %1117 = vmatpush1.msra.mxu0 0.0
    %1118 = vmatprep.subr.mxu0 0.0
    %1119 = vmatpush1.msra.mxu0 0.0
    %1120 = vmatprep.subr.mxu0 0.0
    %1121 = vmatpush1.msra.mxu0 0.0
    %1122 = vmatprep.subr.mxu0 0.0
    %1123 = vmatpush1.msra.mxu0 0.0
    %1124 = vmatprep.subr.mxu0 0.0
    %1125 = vmatpush1.msra.mxu0 0.0
    %1126 = vmatprep.subr.mxu0 0.0
    %1127 = vmatpush1.msra.mxu0 0.0
    %1128 = vmatprep.subr.mxu0 0.0
    %1129 = vmatpush1.msra.mxu0 0.0
    %1130 = vmatprep.subr.mxu0 0.0
    %1131 = vmatpush1.msra.mxu0 0.0
    %1132 = vmatprep.subr.mxu0 0.0
    %1133 = vmatpush1.msra.mxu0 0.0
    %1134 = vmatprep.subr.mxu0 0.0
    %1135 = vmatpush1.msra.mxu0 0.0
    %1136 = vmatprep.subr.mxu0 0.0
    %1137 = vmatpush1.msra.mxu0 0.0
    %1138 = vmatprep.subr.mxu0 0.0
    %1139 = vmatpush1.msra.mxu0 0.0
    %1140 = vmatprep.subr.mxu0 0.0
    %1141 = vmatpush1.msra.mxu0 0.0
    %1142 = vmatprep.subr.mxu0 0.0
    %1143 = vmatpush1.msra.mxu0 0.0
    %1144 = vmatprep.subr.mxu0 0.0
    %1145 = vmatpush1.msra.mxu0 0.0
    %1146 = vmatprep.subr.mxu0 0.0
    %1147 = vmatpush1.msra.mxu0 0.0
    %1148 = vmatprep.subr.mxu0 0.0
    %1149 = vmatpush1.msra.mxu0 0.0
    %1150 = vmatprep.subr.mxu0 0.0
    %1151 = vmatpush1.msra.mxu0 0.0
    %1152 = vmatprep.subr.mxu0 0.0
    %1153 = vmatpush1.msra.mxu0 0.0
    %1154 = vmatprep.subr.mxu0 0.0
    %1155 = vmatpush1.msra.mxu0 0.0
    %1156 = vmatprep.mubr.f32.mxu0 0.0
    %1157 = vmatmul.mubr.f32.gmra.mrb[0].mxu0 %v1090
    %v1158 = vpop.f32.mrb[0].mxu0
    %v1159 = vadd.f32 0.0, %v1158
    %v1160 = vpop.f32.mrb[0].mxu0
    %v1161 = vadd.f32 0.0, %v1160
    %1162 = vdwg.mxu0
    %v1165 = vrot.slane %v1159, 4
    %v1166 = vrot.slane %v1161, 4
    %v1169 = vadd.f32 %v617, %v1165
    %v1170 = vadd.f32 %v619, %v1166
    %v1171 = vmul.f32 %v1169, %v498
    %v1172 = vmul.f32 %v1170, %v499
    %v1173 = vxor.u32 %v1171, 2147483648
    %v1174 = vxor.u32 %v1172, 2147483648
    %v1175 = vmul.f32 %v1173, 1.442695
    %v1176 = vpow.pop %v1175
    %v1177 = vmul.f32 %v1174, 1.442695
    %v1178 = vpow.pop %v1177
    %v1179 = vadd.f32 %v1176, 1.0
    %v1180 = vadd.f32 %v1178, 1.0
    %v1181 = vrcp.pop %v1179
    %v1182 = vmul.f32 1.0, %v1181
    %v1183 = vrcp.pop %v1180
    %v1184 = vmul.f32 1.0, %v1183
    %v1185 = vmul.f32 %v1184, 2.0
    %v1186 = vsub.f32 %v1185, 1.0
    %v1188 = vrot.slane %v1076, 7
    %v1190 = vmul.f32 %v1182, %v1188
    %v1191 = vmul.f32 %v1182, %v1186
    %1193 = vrot.lane.b32.xlu0 %v1191, 64
    %v1194 = vpop.permute.xlu0 %1193
    %v1196 = vadd.f32 %v1190, %v1194
    %v1197 = vtanh.pop %v1196
    %v1198 = vmul.f32 %v1184, %v1197
    %1200 = vrot.lane.b32.xlu0 %v1198, 64
    %v1201 = vpop.permute.xlu0 %1200
    %vm1203 = vcmask 258052
    %1204 = vst.msk [vmem:[#allocation3] sm:$0x10] %vm1203, %v1201
    %vm1205 = vcmask 520452
    %1206 = vst.msk [vmem:[#allocation3 - $0x1] sm:$0x10] %vm1205, %v1201
    %v1207 = vrot.slane %v1198, 4
    %1208 = vrot.lane.b32.xlu0 %v1207, 64
    %v1209 = vpop.permute.xlu0 %1208
    %v1210 = vsel %vm546, %v1209, 0
    %1212 = vmatprep.subr.mxu0 %v523
    %1213 = vmatpush1.msra.mxu0 %v522
    %1214 = vmatprep.subr.mxu0 %v525
    %1215 = vmatpush1.msra.mxu0 %v524
    %1216 = vmatprep.subr.mxu0 %v527
    %1217 = vmatpush1.msra.mxu0 %v526
    %1218 = vmatprep.subr.mxu0 %v529
    %1219 = vmatpush1.msra.mxu0 %v528
    %1220 = vmatprep.subr.mxu0 %v531
    %1221 = vmatpush1.msra.mxu0 %v530
    %1222 = vmatprep.subr.mxu0 %v533
    %1223 = vmatpush1.msra.mxu0 %v532
    %1224 = vmatprep.subr.mxu0 %v535
    %1225 = vmatpush1.msra.mxu0 %v534
    %1226 = vmatprep.subr.mxu0 %v537
    %1227 = vmatpush1.msra.mxu0 %v536
    %1228 = vmatprep.subr.mxu0 0.0
    %1229 = vmatpush1.msra.mxu0 0.0
    %1230 = vmatprep.subr.mxu0 0.0
    %1231 = vmatpush1.msra.mxu0 0.0
    %1232 = vmatprep.subr.mxu0 0.0
    %1233 = vmatpush1.msra.mxu0 0.0
    %1234 = vmatprep.subr.mxu0 0.0
    %1235 = vmatpush1.msra.mxu0 0.0
    %1236 = vmatprep.subr.mxu0 0.0
    %1237 = vmatpush1.msra.mxu0 0.0
    %1238 = vmatprep.subr.mxu0 0.0
    %1239 = vmatpush1.msra.mxu0 0.0
    %1240 = vmatprep.subr.mxu0 0.0
    %1241 = vmatpush1.msra.mxu0 0.0
    %1242 = vmatprep.subr.mxu0 0.0
    %1243 = vmatpush1.msra.mxu0 0.0
    %1244 = vmatprep.subr.mxu0 0.0
    %1245 = vmatpush1.msra.mxu0 0.0
    %1246 = vmatprep.subr.mxu0 0.0
    %1247 = vmatpush1.msra.mxu0 0.0
    %1248 = vmatprep.subr.mxu0 0.0
    %1249 = vmatpush1.msra.mxu0 0.0
    %1250 = vmatprep.subr.mxu0 0.0
    %1251 = vmatpush1.msra.mxu0 0.0
    %1252 = vmatprep.subr.mxu0 0.0
    %1253 = vmatpush1.msra.mxu0 0.0
    %1254 = vmatprep.subr.mxu0 0.0
    %1255 = vmatpush1.msra.mxu0 0.0
    %1256 = vmatprep.subr.mxu0 0.0
    %1257 = vmatpush1.msra.mxu0 0.0
    %1258 = vmatprep.subr.mxu0 0.0
    %1259 = vmatpush1.msra.mxu0 0.0
    %1260 = vmatprep.subr.mxu0 0.0
    %1261 = vmatpush1.msra.mxu0 0.0
    %1262 = vmatprep.subr.mxu0 0.0
    %1263 = vmatpush1.msra.mxu0 0.0
    %1264 = vmatprep.subr.mxu0 0.0
    %1265 = vmatpush1.msra.mxu0 0.0
    %1266 = vmatprep.subr.mxu0 0.0
    %1267 = vmatpush1.msra.mxu0 0.0
    %1268 = vmatprep.subr.mxu0 0.0
    %1269 = vmatpush1.msra.mxu0 0.0
    %1270 = vmatprep.subr.mxu0 0.0
    %1271 = vmatpush1.msra.mxu0 0.0
    %1272 = vmatprep.subr.mxu0 0.0
    %1273 = vmatpush1.msra.mxu0 0.0
    %1274 = vmatprep.subr.mxu0 0.0
    %1275 = vmatpush1.msra.mxu0 0.0
    %1276 = vmatprep.mubr.f32.mxu0 0.0
    %1277 = vmatmul.mubr.f32.gmra.mrb[0].mxu0 %v1210
    %v1278 = vpop.f32.mrb[0].mxu0
    %v1279 = vadd.f32 0.0, %v1278
    %v1280 = vpop.f32.mrb[0].mxu0
    %v1281 = vadd.f32 0.0, %v1280
    %1282 = vdwg.mxu0
    %v1285 = vrot.slane %v1279, 3
    %v1286 = vrot.slane %v1281, 3
    %v1289 = vadd.f32 %v617, %v1285
    %v1290 = vadd.f32 %v619, %v1286
    %v1291 = vmul.f32 %v1289, %v498
    %v1292 = vmul.f32 %v1290, %v499
    %v1293 = vxor.u32 %v1291, 2147483648
    %v1294 = vxor.u32 %v1292, 2147483648
    %v1295 = vmul.f32 %v1293, 1.442695
    %v1296 = vpow.pop %v1295
    %v1297 = vmul.f32 %v1294, 1.442695
    %v1298 = vpow.pop %v1297
    %v1299 = vadd.f32 %v1296, 1.0
    %v1300 = vadd.f32 %v1298, 1.0
    %v1301 = vrcp.pop %v1299
    %v1302 = vmul.f32 1.0, %v1301
    %v1303 = vrcp.pop %v1300
    %v1304 = vmul.f32 1.0, %v1303
    %v1305 = vmul.f32 %v1304, 2.0
    %v1306 = vsub.f32 %v1305, 1.0
    %v1308 = vrot.slane %v1196, 7
    %v1310 = vmul.f32 %v1302, %v1308
    %v1311 = vmul.f32 %v1302, %v1306
    %1313 = vrot.lane.b32.xlu0 %v1311, 64
    %v1314 = vpop.permute.xlu0 %1313
    %v1316 = vadd.f32 %v1310, %v1314
    %v1317 = vtanh.pop %v1316
    %v1318 = vmul.f32 %v1304, %v1317
    %1320 = vrot.lane.b32.xlu0 %v1318, 64
    %v1321 = vpop.permute.xlu0 %1320
    %vm1323 = vcmask 259077
    %1324 = vst.msk [vmem:[#allocation3] sm:$0x20] %vm1323, %v1321
    %vm1325 = vcmask 521477
    %1326 = vst.msk [vmem:[#allocation3 - $0x3] sm:$0x20] %vm1325, %v1321
    %v1327 = vrot.slane %v1318, 5
    %1328 = vrot.lane.b32.xlu0 %v1327, 64
    %v1329 = vpop.permute.xlu0 %1328
    %v1330 = vsel %vm546, %v1329, 0
    %1332 = vmatprep.subr.mxu0 %v523
    %1333 = vmatpush1.msra.mxu0 %v522
    %1334 = vmatprep.subr.mxu0 %v525
    %1335 = vmatpush1.msra.mxu0 %v524
    %1336 = vmatprep.subr.mxu0 %v527
    %1337 = vmatpush1.msra.mxu0 %v526
    %1338 = vmatprep.subr.mxu0 %v529
    %1339 = vmatpush1.msra.mxu0 %v528
    %1340 = vmatprep.subr.mxu0 %v531
    %1341 = vmatpush1.msra.mxu0 %v530
    %1342 = vmatprep.subr.mxu0 %v533
    %1343 = vmatpush1.msra.mxu0 %v532
    %1344 = vmatprep.subr.mxu0 %v535
    %1345 = vmatpush1.msra.mxu0 %v534
    %1346 = vmatprep.subr.mxu0 %v537
    %1347 = vmatpush1.msra.mxu0 %v536
    %1348 = vmatprep.subr.mxu0 0.0
    %1349 = vmatpush1.msra.mxu0 0.0
    %1350 = vmatprep.subr.mxu0 0.0
    %1351 = vmatpush1.msra.mxu0 0.0
    %1352 = vmatprep.subr.mxu0 0.0
    %1353 = vmatpush1.msra.mxu0 0.0
    %1354 = vmatprep.subr.mxu0 0.0
    %1355 = vmatpush1.msra.mxu0 0.0
    %1356 = vmatprep.subr.mxu0 0.0
    %1357 = vmatpush1.msra.mxu0 0.0
    %1358 = vmatprep.subr.mxu0 0.0
    %1359 = vmatpush1.msra.mxu0 0.0
    %1360 = vmatprep.subr.mxu0 0.0
    %1361 = vmatpush1.msra.mxu0 0.0
    %1362 = vmatprep.subr.mxu0 0.0
    %1363 = vmatpush1.msra.mxu0 0.0
    %1364 = vmatprep.subr.mxu0 0.0
    %1365 = vmatpush1.msra.mxu0 0.0
    %1366 = vmatprep.subr.mxu0 0.0
    %1367 = vmatpush1.msra.mxu0 0.0
    %1368 = vmatprep.subr.mxu0 0.0
    %1369 = vmatpush1.msra.mxu0 0.0
    %1370 = vmatprep.subr.mxu0 0.0
    %1371 = vmatpush1.msra.mxu0 0.0
    %1372 = vmatprep.subr.mxu0 0.0
    %1373 = vmatpush1.msra.mxu0 0.0
    %1374 = vmatprep.subr.mxu0 0.0
    %1375 = vmatpush1.msra.mxu0 0.0
    %1376 = vmatprep.subr.mxu0 0.0
    %1377 = vmatpush1.msra.mxu0 0.0
    %1378 = vmatprep.subr.mxu0 0.0
    %1379 = vmatpush1.msra.mxu0 0.0
    %1380 = vmatprep.subr.mxu0 0.0
    %1381 = vmatpush1.msra.mxu0 0.0
    %1382 = vmatprep.subr.mxu0 0.0
    %1383 = vmatpush1.msra.mxu0 0.0
    %1384 = vmatprep.subr.mxu0 0.0
    %1385 = vmatpush1.msra.mxu0 0.0
    %1386 = vmatprep.subr.mxu0 0.0
    %1387 = vmatpush1.msra.mxu0 0.0
    %1388 = vmatprep.subr.mxu0 0.0
    %1389 = vmatpush1.msra.mxu0 0.0
    %1390 = vmatprep.subr.mxu0 0.0
    %1391 = vmatpush1.msra.mxu0 0.0
    %1392 = vmatprep.subr.mxu0 0.0
    %1393 = vmatpush1.msra.mxu0 0.0
    %1394 = vmatprep.subr.mxu0 0.0
    %1395 = vmatpush1.msra.mxu0 0.0
    %1396 = vmatprep.mubr.f32.mxu0 0.0
    %1397 = vmatmul.mubr.f32.gmra.mrb[0].mxu0 %v1330
    %v1398 = vpop.f32.mrb[0].mxu0
    %v1399 = vadd.f32 0.0, %v1398
    %v1400 = vpop.f32.mrb[0].mxu0
    %v1401 = vadd.f32 0.0, %v1400
    %1402 = vdwg.mxu0
    %v1405 = vrot.slane %v1399, 2
    %v1406 = vrot.slane %v1401, 2
    %v1409 = vadd.f32 %v617, %v1405
    %v1410 = vadd.f32 %v619, %v1406
    %v1411 = vmul.f32 %v1409, %v498
    %v1412 = vmul.f32 %v1410, %v499
    %v1413 = vxor.u32 %v1411, 2147483648
    %v1414 = vxor.u32 %v1412, 2147483648
    %v1415 = vmul.f32 %v1413, 1.442695
    %v1416 = vpow.pop %v1415
    %v1417 = vmul.f32 %v1414, 1.442695
    %v1418 = vpow.pop %v1417
    %v1419 = vadd.f32 %v1416, 1.0
    %v1420 = vadd.f32 %v1418, 1.0
    %v1421 = vrcp.pop %v1419
    %v1422 = vmul.f32 1.0, %v1421
    %v1423 = vrcp.pop %v1420
    %v1424 = vmul.f32 1.0, %v1423
    %v1425 = vmul.f32 %v1424, 2.0
    %v1426 = vsub.f32 %v1425, 1.0
    %v1428 = vrot.slane %v1316, 7
    %v1430 = vmul.f32 %v1422, %v1428
    %v1431 = vmul.f32 %v1422, %v1426
    %1433 = vrot.lane.b32.xlu0 %v1431, 64
    %v1434 = vpop.permute.xlu0 %1433
    %v1436 = vadd.f32 %v1430, %v1434
    %v1437 = vtanh.pop %v1436
    %v1438 = vmul.f32 %v1424, %v1437
    %1440 = vrot.lane.b32.xlu0 %v1438, 64
    %v1441 = vpop.permute.xlu0 %1440
    %vm1443 = vcmask 260102
    %1444 = vst.msk [vmem:[#allocation3] sm:$0x40] %vm1443, %v1441
    %vm1445 = vcmask 522502
    %1446 = vst.msk [vmem:[#allocation3 - $0x5] sm:$0x40] %vm1445, %v1441
    %v1447 = vrot.slane %v1438, 6
    %1448 = vrot.lane.b32.xlu0 %v1447, 64
    %v1449 = vpop.permute.xlu0 %1448
    %v1450 = vsel %vm546, %v1449, 0
    %1452 = vmatprep.subr.mxu0 %v523
    %1453 = vmatpush1.msra.mxu0 %v522
    %1454 = vmatprep.subr.mxu0 %v525
    %1455 = vmatpush1.msra.mxu0 %v524
    %1456 = vmatprep.subr.mxu0 %v527
    %1457 = vmatpush1.msra.mxu0 %v526
    %1458 = vmatprep.subr.mxu0 %v529
    %1459 = vmatpush1.msra.mxu0 %v528
    %1460 = vmatprep.subr.mxu0 %v531
    %1461 = vmatpush1.msra.mxu0 %v530
    %1462 = vmatprep.subr.mxu0 %v533
    %1463 = vmatpush1.msra.mxu0 %v532
    %1464 = vmatprep.subr.mxu0 %v535
    %1465 = vmatpush1.msra.mxu0 %v534
    %1466 = vmatprep.subr.mxu0 %v537
    %1467 = vmatpush1.msra.mxu0 %v536
    %1468 = vmatprep.subr.mxu0 0.0
    %1469 = vmatpush1.msra.mxu0 0.0
    %1470 = vmatprep.subr.mxu0 0.0
    %1471 = vmatpush1.msra.mxu0 0.0
    %1472 = vmatprep.subr.mxu0 0.0
    %1473 = vmatpush1.msra.mxu0 0.0
    %1474 = vmatprep.subr.mxu0 0.0
    %1475 = vmatpush1.msra.mxu0 0.0
    %1476 = vmatprep.subr.mxu0 0.0
    %1477 = vmatpush1.msra.mxu0 0.0
    %1478 = vmatprep.subr.mxu0 0.0
    %1479 = vmatpush1.msra.mxu0 0.0
    %1480 = vmatprep.subr.mxu0 0.0
    %1481 = vmatpush1.msra.mxu0 0.0
    %1482 = vmatprep.subr.mxu0 0.0
    %1483 = vmatpush1.msra.mxu0 0.0
    %1484 = vmatprep.subr.mxu0 0.0
    %1485 = vmatpush1.msra.mxu0 0.0
    %1486 = vmatprep.subr.mxu0 0.0
    %1487 = vmatpush1.msra.mxu0 0.0
    %1488 = vmatprep.subr.mxu0 0.0
    %1489 = vmatpush1.msra.mxu0 0.0
    %1490 = vmatprep.subr.mxu0 0.0
    %1491 = vmatpush1.msra.mxu0 0.0
    %1492 = vmatprep.subr.mxu0 0.0
    %1493 = vmatpush1.msra.mxu0 0.0
    %1494 = vmatprep.subr.mxu0 0.0
    %1495 = vmatpush1.msra.mxu0 0.0
    %1496 = vmatprep.subr.mxu0 0.0
    %1497 = vmatpush1.msra.mxu0 0.0
    %1498 = vmatprep.subr.mxu0 0.0
    %1499 = vmatpush1.msra.mxu0 0.0
    %1500 = vmatprep.subr.mxu0 0.0
    %1501 = vmatpush1.msra.mxu0 0.0
    %1502 = vmatprep.subr.mxu0 0.0
    %1503 = vmatpush1.msra.mxu0 0.0
    %1504 = vmatprep.subr.mxu0 0.0
    %1505 = vmatpush1.msra.mxu0 0.0
    %1506 = vmatprep.subr.mxu0 0.0
    %1507 = vmatpush1.msra.mxu0 0.0
    %1508 = vmatprep.subr.mxu0 0.0
    %1509 = vmatpush1.msra.mxu0 0.0
    %1510 = vmatprep.subr.mxu0 0.0
    %1511 = vmatpush1.msra.mxu0 0.0
    %1512 = vmatprep.subr.mxu0 0.0
    %1513 = vmatpush1.msra.mxu0 0.0
    %1514 = vmatprep.subr.mxu0 0.0
    %1515 = vmatpush1.msra.mxu0 0.0
    %1516 = vmatprep.mubr.f32.mxu0 0.0
    %1517 = vmatmul.mubr.f32.gmra.mrb[0].mxu0 %v1450
    %v1518 = vpop.f32.mrb[0].mxu0
    %v1519 = vadd.f32 0.0, %v1518
    %v1520 = vpop.f32.mrb[0].mxu0
    %v1521 = vadd.f32 0.0, %v1520
    %1522 = vdwg.mxu0
    %v1525 = vrot.slane %v1519, 1
    %v1526 = vrot.slane %v1521, 1
    %v1529 = vadd.f32 %v617, %v1525
    %v1530 = vadd.f32 %v619, %v1526
    %v1531 = vmul.f32 %v1529, %v498
    %v1532 = vmul.f32 %v1530, %v499
    %v1533 = vxor.u32 %v1531, 2147483648
    %v1534 = vxor.u32 %v1532, 2147483648
    %v1535 = vmul.f32 %v1533, 1.442695
    %v1536 = vpow.pop %v1535
    %v1537 = vmul.f32 %v1534, 1.442695
    %v1538 = vpow.pop %v1537
    %v1539 = vadd.f32 %v1536, 1.0
    %v1540 = vadd.f32 %v1538, 1.0
    %v1541 = vrcp.pop %v1539
    %v1542 = vmul.f32 1.0, %v1541
    %v1543 = vrcp.pop %v1540
    %v1544 = vmul.f32 1.0, %v1543
    %v1545 = vmul.f32 %v1544, 2.0
    %v1546 = vsub.f32 %v1545, 1.0
    %v1548 = vrot.slane %v1436, 7
    %v1550 = vmul.f32 %v1542, %v1548
    %v1551 = vmul.f32 %v1542, %v1546
    %1553 = vrot.lane.b32.xlu0 %v1551, 64
    %v1554 = vpop.permute.xlu0 %1553
    %v1556 = vadd.f32 %v1550, %v1554
    %v1557 = vtanh.pop %v1556
    %v1558 = vmul.f32 %v1544, %v1557
    %1560 = vrot.lane.b32.xlu0 %v1558, 64
    %v1561 = vpop.permute.xlu0 %1560
    %vm1563 = vcmask 261127
    %1564 = vst.msk [vmem:[#allocation3] sm:$0x80] %vm1563, %v1561
    %vm1565 = vcmask 523527
    %1566 = vst.msk [vmem:[#allocation3 - $0x7] sm:$0x80] %vm1565, %v1561
    %v1567 = vld [vmem:[#allocation3] sm:$0xff]
    %v1568 = vld [vmem:[#allocation10] sm:$0xff]
    %v1569 = vld [vmem:[#allocation10 + $0x8] sm:$0xff]
    %v1570 = vld [vmem:[#allocation10 + $0x10] sm:$0xff]
    %v1571 = vld [vmem:[#allocation10 + $0x18] sm:$0xff]
    %v1572 = vld [vmem:[#allocation10 + $0x20] sm:$0xff]
    %v1573 = vld [vmem:[#allocation10 + $0x28] sm:$0xff]
    %v1574 = vld [vmem:[#allocation10 + $0x30] sm:$0xff]
    %v1575 = vld [vmem:[#allocation10 + $0x38] sm:$0xff]
    %v1576 = vld [vmem:[#allocation10 + $0x40] sm:$0xff]
    %v1577 = vld [vmem:[#allocation10 + $0x48] sm:$0xff]
    %v1578 = vld [vmem:[#allocation10 + $0x50] sm:$0xff]
    %v1579 = vld [vmem:[#allocation10 + $0x58] sm:$0xff]
    %v1580 = vlaneseq
    %v1581 = vshrl.u32 %v1580, 7
    %v1582 = vsub.s32 1, %v1581
    %v1583 = vrot.slane %v504, %v1582
    %v1585 = vsel %vm546, %v1567, 0
    %1587 = vmatprep.subr.mxu0 0.0
    %1588 = vmatpush1.msra.mxu0 %v1568
    %1589 = vmatprep.subr.mxu0 0.0
    %1590 = vmatpush1.msra.mxu0 %v1569
    %1591 = vmatprep.subr.mxu0 0.0
    %1592 = vmatpush1.msra.mxu0 %v1570
    %1593 = vmatprep.subr.mxu0 0.0
    %1594 = vmatpush1.msra.mxu0 %v1571
    %1595 = vmatprep.subr.mxu0 0.0
    %1596 = vmatpush1.msra.mxu0 %v1572
    %1597 = vmatprep.subr.mxu0 0.0
    %1598 = vmatpush1.msra.mxu0 %v1573
    %1599 = vmatprep.subr.mxu0 0.0
    %1600 = vmatpush1.msra.mxu0 %v1574
    %1601 = vmatprep.subr.mxu0 0.0
    %1602 = vmatpush1.msra.mxu0 %v1575
    %1603 = vmatprep.subr.mxu0 0.0
    %1604 = vmatpush1.msra.mxu0 0.0
    %1605 = vmatprep.subr.mxu0 0.0
    %1606 = vmatpush1.msra.mxu0 0.0
    %1607 = vmatprep.subr.mxu0 0.0
    %1608 = vmatpush1.msra.mxu0 0.0
    %1609 = vmatprep.subr.mxu0 0.0
    %1610 = vmatpush1.msra.mxu0 0.0
    %1611 = vmatprep.subr.mxu0 0.0
    %1612 = vmatpush1.msra.mxu0 0.0
    %1613 = vmatprep.subr.mxu0 0.0
    %1614 = vmatpush1.msra.mxu0 0.0
    %1615 = vmatprep.subr.mxu0 0.0
    %1616 = vmatpush1.msra.mxu0 0.0
    %1617 = vmatprep.subr.mxu0 0.0
    %1618 = vmatpush1.msra.mxu0 0.0
    %1619 = vmatprep.subr.mxu0 0.0
    %1620 = vmatpush1.msra.mxu0 0.0
    %1621 = vmatprep.subr.mxu0 0.0
    %1622 = vmatpush1.msra.mxu0 0.0
    %1623 = vmatprep.subr.mxu0 0.0
    %1624 = vmatpush1.msra.mxu0 0.0
    %1625 = vmatprep.subr.mxu0 0.0
    %1626 = vmatpush1.msra.mxu0 0.0
    %1627 = vmatprep.subr.mxu0 0.0
    %1628 = vmatpush1.msra.mxu0 0.0
    %1629 = vmatprep.subr.mxu0 0.0
    %1630 = vmatpush1.msra.mxu0 0.0
    %1631 = vmatprep.subr.mxu0 0.0
    %1632 = vmatpush1.msra.mxu0 0.0
    %1633 = vmatprep.subr.mxu0 0.0
    %1634 = vmatpush1.msra.mxu0 0.0
    %1635 = vmatprep.subr.mxu0 0.0
    %1636 = vmatpush1.msra.mxu0 0.0
    %1637 = vmatprep.subr.mxu0 0.0
    %1638 = vmatpush1.msra.mxu0 0.0
    %1639 = vmatprep.subr.mxu0 0.0
    %1640 = vmatpush1.msra.mxu0 0.0
    %1641 = vmatprep.subr.mxu0 0.0
    %1642 = vmatpush1.msra.mxu0 0.0
    %1643 = vmatprep.subr.mxu0 0.0
    %1644 = vmatpush1.msra.mxu0 0.0
    %1645 = vmatprep.subr.mxu0 0.0
    %1646 = vmatpush1.msra.mxu0 0.0
    %1647 = vmatprep.subr.mxu0 0.0
    %1648 = vmatpush1.msra.mxu0 0.0
    %1649 = vmatprep.subr.mxu0 0.0
    %1650 = vmatpush1.msra.mxu0 0.0
    %1651 = vmatprep.mubr.f32.mxu0 0.0
    %1652 = vmatmul.mubr.f32.gmra.mrb[0].mxu0 %v1585
    %v1653 = vpop.f32.mrb[0].mxu0
    %v1654 = vadd.f32 %v1583, %v1653
    %v1655 = vpop.f32.mrb[0].mxu0
    %1656 = vdwg.mxu0
    %v1657 = vsel %vm487, 0.0, 0
    %1659 = vmatprep.subr.mxu0 0.0
    %1660 = vmatpush1.msra.mxu0 %v1576
    %1661 = vmatprep.subr.mxu0 0.0
    %1662 = vmatpush1.msra.mxu0 %v1577
    %1663 = vmatprep.subr.mxu0 0.0
    %1664 = vmatpush1.msra.mxu0 %v1578
    %1665 = vmatprep.subr.mxu0 0.0
    %1666 = vmatpush1.msra.mxu0 %v1579
    %1667 = vmatprep.subr.mxu0 0.0
    %1668 = vmatpush1.msra.mxu0 0.0
    %1669 = vmatprep.subr.mxu0 0.0
    %1670 = vmatpush1.msra.mxu0 0.0
    %1671 = vmatprep.subr.mxu0 0.0
    %1672 = vmatpush1.msra.mxu0 0.0
    %1673 = vmatprep.subr.mxu0 0.0
    %1674 = vmatpush1.msra.mxu0 0.0
    %1675 = vmatprep.subr.mxu0 0.0
    %1676 = vmatpush1.msra.mxu0 0.0
    %1677 = vmatprep.subr.mxu0 0.0
    %1678 = vmatpush1.msra.mxu0 0.0
    %1679 = vmatprep.subr.mxu0 0.0
    %1680 = vmatpush1.msra.mxu0 0.0
    %1681 = vmatprep.subr.mxu0 0.0
    %1682 = vmatpush1.msra.mxu0 0.0
    %1683 = vmatprep.subr.mxu0 0.0
    %1684 = vmatpush1.msra.mxu0 0.0
    %1685 = vmatprep.subr.mxu0 0.0
    %1686 = vmatpush1.msra.mxu0 0.0
    %1687 = vmatprep.subr.mxu0 0.0
    %1688 = vmatpush1.msra.mxu0 0.0
    %1689 = vmatprep.subr.mxu0 0.0
    %1690 = vmatpush1.msra.mxu0 0.0
    %1691 = vmatprep.subr.mxu0 0.0
    %1692 = vmatpush1.msra.mxu0 0.0
    %1693 = vmatprep.subr.mxu0 0.0
    %1694 = vmatpush1.msra.mxu0 0.0
    %1695 = vmatprep.subr.mxu0 0.0
    %1696 = vmatpush1.msra.mxu0 0.0
    %1697 = vmatprep.subr.mxu0 0.0
    %1698 = vmatpush1.msra.mxu0 0.0
    %1699 = vmatprep.subr.mxu0 0.0
    %1700 = vmatpush1.msra.mxu0 0.0
    %1701 = vmatprep.subr.mxu0 0.0
    %1702 = vmatpush1.msra.mxu0 0.0
    %1703 = vmatprep.subr.mxu0 0.0
    %1704 = vmatpush1.msra.mxu0 0.0
    %1705 = vmatprep.subr.mxu0 0.0
    %1706 = vmatpush1.msra.mxu0 0.0
    %1707 = vmatprep.subr.mxu0 0.0
    %1708 = vmatpush1.msra.mxu0 0.0
    %1709 = vmatprep.subr.mxu0 0.0
    %1710 = vmatpush1.msra.mxu0 0.0
    %1711 = vmatprep.subr.mxu0 0.0
    %1712 = vmatpush1.msra.mxu0 0.0
    %1713 = vmatprep.subr.mxu0 0.0
    %1714 = vmatpush1.msra.mxu0 0.0
    %1715 = vmatprep.subr.mxu0 0.0
    %1716 = vmatpush1.msra.mxu0 0.0
    %1717 = vmatprep.subr.mxu0 0.0
    %1718 = vmatpush1.msra.mxu0 0.0
    %1719 = vmatprep.subr.mxu0 0.0
    %1720 = vmatpush1.msra.mxu0 0.0
    %1721 = vmatprep.subr.mxu0 0.0
    %1722 = vmatpush1.msra.mxu0 0.0
    %1723 = vmatprep.mubr.f32.mxu0 0.0
    %1724 = vmatmul.mubr.f32.gmra.mrb[0].mxu0 %v1657
    %v1725 = vpop.f32.mrb[0].mxu0
    %v1726 = vadd.f32 0.0, %v1725
    %v1727 = vpop.f32.mrb[0].mxu0
    %1728 = vdwg.mxu0
    %v1729 = vadd.f32 %v1654, %v1726
    %v1730 = vmul.f32 %v1729, %v503
    %v1731 = vxor.u32 %v1730, 2147483648
    %v1732 = vmul.f32 %v1731, 1.442695
    %v1733 = vpow.pop %v1732
    %v1734 = vadd.f32 %v1733, 1.0
    %v1735 = vrcp.pop %v1734
    %v1736 = vmul.f32 1.0, %v1735
    %v1737 = vmul.f32 %v1736, 2.0
    %v1738 = vsub.f32 %v1737, 1.0
    %v1739 = vmul.f32 %v1736, 0.0
    %1741 = vrot.lane.b32.xlu0 %v1738, 64
    %v1742 = vpop.permute.xlu0 %1741
    %v1744 = vmul.f32 %v1736, %v1742
    %1746 = vrot.lane.b32.xlu0 %v1744, 32
    %v1747 = vpop.permute.xlu0 %1746
    %v1749 = vadd.f32 %v1739, %v1747
    %v1750 = vtanh.pop %v1749
    %1752 = vrot.lane.b32.xlu0 %v1750, 64
    %v1753 = vpop.permute.xlu0 %1752
    %v1755 = vmul.f32 %v1736, %v1753
    %1757 = vrot.lane.b32.xlu0 %v1755, 32
    %v1758 = vpop.permute.xlu0 %1757
    %v1759 = vsel %vm487, %v1758, 0
    %1761 = vmatprep.subr.mxu0 0.0
    %1762 = vmatpush1.msra.mxu0 %v1576
    %1763 = vmatprep.subr.mxu0 0.0
    %1764 = vmatpush1.msra.mxu0 %v1577
    %1765 = vmatprep.subr.mxu0 0.0
    %1766 = vmatpush1.msra.mxu0 %v1578
    %1767 = vmatprep.subr.mxu0 0.0
    %1768 = vmatpush1.msra.mxu0 %v1579
    %1769 = vmatprep.subr.mxu0 0.0
    %1770 = vmatpush1.msra.mxu0 0.0
    %1771 = vmatprep.subr.mxu0 0.0
    %1772 = vmatpush1.msra.mxu0 0.0
    %1773 = vmatprep.subr.mxu0 0.0
    %1774 = vmatpush1.msra.mxu0 0.0
    %1775 = vmatprep.subr.mxu0 0.0
    %1776 = vmatpush1.msra.mxu0 0.0
    %1777 = vmatprep.subr.mxu0 0.0
    %1778 = vmatpush1.msra.mxu0 0.0
    %1779 = vmatprep.subr.mxu0 0.0
    %1780 = vmatpush1.msra.mxu0 0.0
    %1781 = vmatprep.subr.mxu0 0.0
    %1782 = vmatpush1.msra.mxu0 0.0
    %1783 = vmatprep.subr.mxu0 0.0
    %1784 = vmatpush1.msra.mxu0 0.0
    %1785 = vmatprep.subr.mxu0 0.0
    %1786 = vmatpush1.msra.mxu0 0.0
    %1787 = vmatprep.subr.mxu0 0.0
    %1788 = vmatpush1.msra.mxu0 0.0
    %1789 = vmatprep.subr.mxu0 0.0
    %1790 = vmatpush1.msra.mxu0 0.0
    %1791 = vmatprep.subr.mxu0 0.0
    %1792 = vmatpush1.msra.mxu0 0.0
    %1793 = vmatprep.subr.mxu0 0.0
    %1794 = vmatpush1.msra.mxu0 0.0
    %1795 = vmatprep.subr.mxu0 0.0
    %1796 = vmatpush1.msra.mxu0 0.0
    %1797 = vmatprep.subr.mxu0 0.0
    %1798 = vmatpush1.msra.mxu0 0.0
    %1799 = vmatprep.subr.mxu0 0.0
    %1800 = vmatpush1.msra.mxu0 0.0
    %1801 = vmatprep.subr.mxu0 0.0
    %1802 = vmatpush1.msra.mxu0 0.0
    %1803 = vmatprep.subr.mxu0 0.0
    %1804 = vmatpush1.msra.mxu0 0.0
    %1805 = vmatprep.subr.mxu0 0.0
    %1806 = vmatpush1.msra.mxu0 0.0
    %1807 = vmatprep.subr.mxu0 0.0
    %1808 = vmatpush1.msra.mxu0 0.0
    %1809 = vmatprep.subr.mxu0 0.0
    %1810 = vmatpush1.msra.mxu0 0.0
    %1811 = vmatprep.subr.mxu0 0.0
    %1812 = vmatpush1.msra.mxu0 0.0
    %1813 = vmatprep.subr.mxu0 0.0
    %1814 = vmatpush1.msra.mxu0 0.0
    %1815 = vmatprep.subr.mxu0 0.0
    %1816 = vmatpush1.msra.mxu0 0.0
    %1817 = vmatprep.subr.mxu0 0.0
    %1818 = vmatpush1.msra.mxu0 0.0
    %1819 = vmatprep.subr.mxu0 0.0
    %1820 = vmatpush1.msra.mxu0 0.0
    %1821 = vmatprep.subr.mxu0 0.0
    %1822 = vmatpush1.msra.mxu0 0.0
    %1823 = vmatprep.subr.mxu0 0.0
    %1824 = vmatpush1.msra.mxu0 0.0
    %1825 = vmatprep.mubr.f32.mxu0 0.0
    %1826 = vmatmul.mubr.f32.gmra.mrb[0].mxu0 %v1759
    %v1827 = vpop.f32.mrb[0].mxu0
    %v1828 = vadd.f32 0.0, %v1827
    %v1829 = vpop.f32.mrb[0].mxu0
    %1830 = vdwg.mxu0
    %v1832 = vrot.slane %v1828, 7
    %v1834 = vadd.f32 %v1654, %v1832
    %v1835 = vmul.f32 %v1834, %v503
    %v1836 = vxor.u32 %v1835, 2147483648
    %v1837 = vmul.f32 %v1836, 1.442695
    %v1838 = vpow.pop %v1837
    %v1839 = vadd.f32 %v1838, 1.0
    %v1840 = vrcp.pop %v1839
    %v1841 = vmul.f32 1.0, %v1840
    %v1842 = vmul.f32 %v1841, 2.0
    %v1843 = vsub.f32 %v1842, 1.0
    %v1845 = vrot.slane %v1749, 7
    %v1847 = vmul.f32 %v1841, %v1845
    %1849 = vrot.lane.b32.xlu0 %v1843, 64
    %v1850 = vpop.permute.xlu0 %1849
    %v1852 = vmul.f32 %v1841, %v1850
    %1854 = vrot.lane.b32.xlu0 %v1852, 32
    %v1855 = vpop.permute.xlu0 %1854
    %v1857 = vadd.f32 %v1847, %v1855
    %v1858 = vtanh.pop %v1857
    %1860 = vrot.lane.b32.xlu0 %v1858, 64
    %v1861 = vpop.permute.xlu0 %1860
    %v1863 = vmul.f32 %v1841, %v1861
    %v1865 = vrot.slane %v1863, 1
    %1866 = vrot.lane.b32.xlu0 %v1865, 32
    %v1867 = vpop.permute.xlu0 %1866
    %v1868 = vsel %vm487, %v1867, 0
    %1870 = vmatprep.subr.mxu0 0.0
    %1871 = vmatpush1.msra.mxu0 %v1576
    %1872 = vmatprep.subr.mxu0 0.0
    %1873 = vmatpush1.msra.mxu0 %v1577
    %1874 = vmatprep.subr.mxu0 0.0
    %1875 = vmatpush1.msra.mxu0 %v1578
    %1876 = vmatprep.subr.mxu0 0.0
    %1877 = vmatpush1.msra.mxu0 %v1579
    %1878 = vmatprep.subr.mxu0 0.0
    %1879 = vmatpush1.msra.mxu0 0.0
    %1880 = vmatprep.subr.mxu0 0.0
    %1881 = vmatpush1.msra.mxu0 0.0
    %1882 = vmatprep.subr.mxu0 0.0
    %1883 = vmatpush1.msra.mxu0 0.0
    %1884 = vmatprep.subr.mxu0 0.0
    %1885 = vmatpush1.msra.mxu0 0.0
    %1886 = vmatprep.subr.mxu0 0.0
    %1887 = vmatpush1.msra.mxu0 0.0
    %1888 = vmatprep.subr.mxu0 0.0
    %1889 = vmatpush1.msra.mxu0 0.0
    %1890 = vmatprep.subr.mxu0 0.0
    %1891 = vmatpush1.msra.mxu0 0.0
    %1892 = vmatprep.subr.mxu0 0.0
    %1893 = vmatpush1.msra.mxu0 0.0
    %1894 = vmatprep.subr.mxu0 0.0
    %1895 = vmatpush1.msra.mxu0 0.0
    %1896 = vmatprep.subr.mxu0 0.0
    %1897 = vmatpush1.msra.mxu0 0.0
    %1898 = vmatprep.subr.mxu0 0.0
    %1899 = vmatpush1.msra.mxu0 0.0
    %1900 = vmatprep.subr.mxu0 0.0
    %1901 = vmatpush1.msra.mxu0 0.0
    %1902 = vmatprep.subr.mxu0 0.0
    %1903 = vmatpush1.msra.mxu0 0.0
    %1904 = vmatprep.subr.mxu0 0.0
    %1905 = vmatpush1.msra.mxu0 0.0
    %1906 = vmatprep.subr.mxu0 0.0
    %1907 = vmatpush1.msra.mxu0 0.0
    %1908 = vmatprep.subr.mxu0 0.0
    %1909 = vmatpush1.msra.mxu0 0.0
    %1910 = vmatprep.subr.mxu0 0.0
    %1911 = vmatpush1.msra.mxu0 0.0
    %1912 = vmatprep.subr.mxu0 0.0
    %1913 = vmatpush1.msra.mxu0 0.0
    %1914 = vmatprep.subr.mxu0 0.0
    %1915 = vmatpush1.msra.mxu0 0.0
    %1916 = vmatprep.subr.mxu0 0.0
    %1917 = vmatpush1.msra.mxu0 0.0
    %1918 = vmatprep.subr.mxu0 0.0
    %1919 = vmatpush1.msra.mxu0 0.0
    %1920 = vmatprep.subr.mxu0 0.0
    %1921 = vmatpush1.msra.mxu0 0.0
    %1922 = vmatprep.subr.mxu0 0.0
    %1923 = vmatpush1.msra.mxu0 0.0
    %1924 = vmatprep.subr.mxu0 0.0
    %1925 = vmatpush1.msra.mxu0 0.0
    %1926 = vmatprep.subr.mxu0 0.0
    %1927 = vmatpush1.msra.mxu0 0.0
    %1928 = vmatprep.subr.mxu0 0.0
    %1929 = vmatpush1.msra.mxu0 0.0
    %1930 = vmatprep.subr.mxu0 0.0
    %1931 = vmatpush1.msra.mxu0 0.0
    %1932 = vmatprep.subr.mxu0 0.0
    %1933 = vmatpush1.msra.mxu0 0.0
    %1934 = vmatprep.mubr.f32.mxu0 0.0
    %1935 = vmatmul.mubr.f32.gmra.mrb[0].mxu0 %v1868
    %v1936 = vpop.f32.mrb[0].mxu0
    %v1937 = vadd.f32 0.0, %v1936
    %v1938 = vpop.f32.mrb[0].mxu0
    %1939 = vdwg.mxu0
    %v1941 = vrot.slane %v1937, 6
    %v1943 = vadd.f32 %v1654, %v1941
    %v1944 = vmul.f32 %v1943, %v503
    %v1945 = vxor.u32 %v1944, 2147483648
    %v1946 = vmul.f32 %v1945, 1.442695
    %v1947 = vpow.pop %v1946
    %v1948 = vadd.f32 %v1947, 1.0
    %v1949 = vrcp.pop %v1948
    %v1950 = vmul.f32 1.0, %v1949
    %v1951 = vmul.f32 %v1950, 2.0
    %v1952 = vsub.f32 %v1951, 1.0
    %v1954 = vrot.slane %v1857, 7
    %v1956 = vmul.f32 %v1950, %v1954
    %1958 = vrot.lane.b32.xlu0 %v1952, 64
    %v1959 = vpop.permute.xlu0 %1958
    %v1961 = vmul.f32 %v1950, %v1959
    %1963 = vrot.lane.b32.xlu0 %v1961, 32
    %v1964 = vpop.permute.xlu0 %1963
    %v1966 = vadd.f32 %v1956, %v1964
    %v1967 = vtanh.pop %v1966
    %1969 = vrot.lane.b32.xlu0 %v1967, 64
    %v1970 = vpop.permute.xlu0 %1969
    %v1972 = vmul.f32 %v1950, %v1970
    %v1974 = vrot.slane %v1972, 2
    %1975 = vrot.lane.b32.xlu0 %v1974, 32
    %v1976 = vpop.permute.xlu0 %1975
    %v1977 = vsel %vm487, %v1976, 0
    %1979 = vmatprep.subr.mxu0 0.0
    %1980 = vmatpush1.msra.mxu0 %v1576
    %1981 = vmatprep.subr.mxu0 0.0
    %1982 = vmatpush1.msra.mxu0 %v1577
    %1983 = vmatprep.subr.mxu0 0.0
    %1984 = vmatpush1.msra.mxu0 %v1578
    %1985 = vmatprep.subr.mxu0 0.0
    %1986 = vmatpush1.msra.mxu0 %v1579
    %1987 = vmatprep.subr.mxu0 0.0
    %1988 = vmatpush1.msra.mxu0 0.0
    %1989 = vmatprep.subr.mxu0 0.0
    %1990 = vmatpush1.msra.mxu0 0.0
    %1991 = vmatprep.subr.mxu0 0.0
    %1992 = vmatpush1.msra.mxu0 0.0
    %1993 = vmatprep.subr.mxu0 0.0
    %1994 = vmatpush1.msra.mxu0 0.0
    %1995 = vmatprep.subr.mxu0 0.0
    %1996 = vmatpush1.msra.mxu0 0.0
    %1997 = vmatprep.subr.mxu0 0.0
    %1998 = vmatpush1.msra.mxu0 0.0
    %1999 = vmatprep.subr.mxu0 0.0
    %2000 = vmatpush1.msra.mxu0 0.0
    %2001 = vmatprep.subr.mxu0 0.0
    %2002 = vmatpush1.msra.mxu0 0.0
    %2003 = vmatprep.subr.mxu0 0.0
    %2004 = vmatpush1.msra.mxu0 0.0
    %2005 = vmatprep.subr.mxu0 0.0
    %2006 = vmatpush1.msra.mxu0 0.0
    %2007 = vmatprep.subr.mxu0 0.0
    %2008 = vmatpush1.msra.mxu0 0.0
    %2009 = vmatprep.subr.mxu0 0.0
    %2010 = vmatpush1.msra.mxu0 0.0
    %2011 = vmatprep.subr.mxu0 0.0
    %2012 = vmatpush1.msra.mxu0 0.0
    %2013 = vmatprep.subr.mxu0 0.0
    %2014 = vmatpush1.msra.mxu0 0.0
    %2015 = vmatprep.subr.mxu0 0.0
    %2016 = vmatpush1.msra.mxu0 0.0
    %2017 = vmatprep.subr.mxu0 0.0
    %2018 = vmatpush1.msra.mxu0 0.0
    %2019 = vmatprep.subr.mxu0 0.0
    %2020 = vmatpush1.msra.mxu0 0.0
    %2021 = vmatprep.subr.mxu0 0.0
    %2022 = vmatpush1.msra.mxu0 0.0
    %2023 = vmatprep.subr.mxu0 0.0
    %2024 = vmatpush1.msra.mxu0 0.0
    %2025 = vmatprep.subr.mxu0 0.0
    %2026 = vmatpush1.msra.mxu0 0.0
    %2027 = vmatprep.subr.mxu0 0.0
    %2028 = vmatpush1.msra.mxu0 0.0
    %2029 = vmatprep.subr.mxu0 0.0
    %2030 = vmatpush1.msra.mxu0 0.0
    %2031 = vmatprep.subr.mxu0 0.0
    %2032 = vmatpush1.msra.mxu0 0.0
    %2033 = vmatprep.subr.mxu0 0.0
    %2034 = vmatpush1.msra.mxu0 0.0
    %2035 = vmatprep.subr.mxu0 0.0
    %2036 = vmatpush1.msra.mxu0 0.0
    %2037 = vmatprep.subr.mxu0 0.0
    %2038 = vmatpush1.msra.mxu0 0.0
    %2039 = vmatprep.subr.mxu0 0.0
    %2040 = vmatpush1.msra.mxu0 0.0
    %2041 = vmatprep.subr.mxu0 0.0
    %2042 = vmatpush1.msra.mxu0 0.0
    %2043 = vmatprep.mubr.f32.mxu0 0.0
    %2044 = vmatmul.mubr.f32.gmra.mrb[0].mxu0 %v1977
    %v2045 = vpop.f32.mrb[0].mxu0
    %v2046 = vadd.f32 0.0, %v2045
    %v2047 = vpop.f32.mrb[0].mxu0
    %2048 = vdwg.mxu0
    %v2050 = vrot.slane %v2046, 5
    %v2052 = vadd.f32 %v1654, %v2050
    %v2053 = vmul.f32 %v2052, %v503
    %v2054 = vxor.u32 %v2053, 2147483648
    %v2055 = vmul.f32 %v2054, 1.442695
    %v2056 = vpow.pop %v2055
    %v2057 = vadd.f32 %v2056, 1.0
    %v2058 = vrcp.pop %v2057
    %v2059 = vmul.f32 1.0, %v2058
    %v2060 = vmul.f32 %v2059, 2.0
    %v2061 = vsub.f32 %v2060, 1.0
    %v2063 = vrot.slane %v1966, 7
    %v2065 = vmul.f32 %v2059, %v2063
    %2067 = vrot.lane.b32.xlu0 %v2061, 64
    %v2068 = vpop.permute.xlu0 %2067
    %v2070 = vmul.f32 %v2059, %v2068
    %2072 = vrot.lane.b32.xlu0 %v2070, 32
    %v2073 = vpop.permute.xlu0 %2072
    %v2075 = vadd.f32 %v2065, %v2073
    %v2076 = vtanh.pop %v2075
    %2078 = vrot.lane.b32.xlu0 %v2076, 64
    %v2079 = vpop.permute.xlu0 %2078
    %v2081 = vmul.f32 %v2059, %v2079
    %v2083 = vrot.slane %v2081, 3
    %2084 = vrot.lane.b32.xlu0 %v2083, 32
    %v2085 = vpop.permute.xlu0 %2084
    %v2086 = vsel %vm487, %v2085, 0
    %2088 = vmatprep.subr.mxu0 0.0
    %2089 = vmatpush1.msra.mxu0 %v1576
    %2090 = vmatprep.subr.mxu0 0.0
    %2091 = vmatpush1.msra.mxu0 %v1577
    %2092 = vmatprep.subr.mxu0 0.0
    %2093 = vmatpush1.msra.mxu0 %v1578
    %2094 = vmatprep.subr.mxu0 0.0
    %2095 = vmatpush1.msra.mxu0 %v1579
    %2096 = vmatprep.subr.mxu0 0.0
    %2097 = vmatpush1.msra.mxu0 0.0
    %2098 = vmatprep.subr.mxu0 0.0
    %2099 = vmatpush1.msra.mxu0 0.0
    %2100 = vmatprep.subr.mxu0 0.0
    %2101 = vmatpush1.msra.mxu0 0.0
    %2102 = vmatprep.subr.mxu0 0.0
    %2103 = vmatpush1.msra.mxu0 0.0
    %2104 = vmatprep.subr.mxu0 0.0
    %2105 = vmatpush1.msra.mxu0 0.0
    %2106 = vmatprep.subr.mxu0 0.0
    %2107 = vmatpush1.msra.mxu0 0.0
    %2108 = vmatprep.subr.mxu0 0.0
    %2109 = vmatpush1.msra.mxu0 0.0
    %2110 = vmatprep.subr.mxu0 0.0
    %2111 = vmatpush1.msra.mxu0 0.0
    %2112 = vmatprep.subr.mxu0 0.0
    %2113 = vmatpush1.msra.mxu0 0.0
    %2114 = vmatprep.subr.mxu0 0.0
    %2115 = vmatpush1.msra.mxu0 0.0
    %2116 = vmatprep.subr.mxu0 0.0
    %2117 = vmatpush1.msra.mxu0 0.0
    %2118 = vmatprep.subr.mxu0 0.0
    %2119 = vmatpush1.msra.mxu0 0.0
    %2120 = vmatprep.subr.mxu0 0.0
    %2121 = vmatpush1.msra.mxu0 0.0
    %2122 = vmatprep.subr.mxu0 0.0
    %2123 = vmatpush1.msra.mxu0 0.0
    %2124 = vmatprep.subr.mxu0 0.0
    %2125 = vmatpush1.msra.mxu0 0.0
    %2126 = vmatprep.subr.mxu0 0.0
    %2127 = vmatpush1.msra.mxu0 0.0
    %2128 = vmatprep.subr.mxu0 0.0
    %2129 = vmatpush1.msra.mxu0 0.0
    %2130 = vmatprep.subr.mxu0 0.0
    %2131 = vmatpush1.msra.mxu0 0.0
    %2132 = vmatprep.subr.mxu0 0.0
    %2133 = vmatpush1.msra.mxu0 0.0
    %2134 = vmatprep.subr.mxu0 0.0
    %2135 = vmatpush1.msra.mxu0 0.0
    %2136 = vmatprep.subr.mxu0 0.0
    %2137 = vmatpush1.msra.mxu0 0.0
    %2138 = vmatprep.subr.mxu0 0.0
    %2139 = vmatpush1.msra.mxu0 0.0
    %2140 = vmatprep.subr.mxu0 0.0
    %2141 = vmatpush1.msra.mxu0 0.0
    %2142 = vmatprep.subr.mxu0 0.0
    %2143 = vmatpush1.msra.mxu0 0.0
    %2144 = vmatprep.subr.mxu0 0.0
    %2145 = vmatpush1.msra.mxu0 0.0
    %2146 = vmatprep.subr.mxu0 0.0
    %2147 = vmatpush1.msra.mxu0 0.0
    %2148 = vmatprep.subr.mxu0 0.0
    %2149 = vmatpush1.msra.mxu0 0.0
    %2150 = vmatprep.subr.mxu0 0.0
    %2151 = vmatpush1.msra.mxu0 0.0
    %2152 = vmatprep.mubr.f32.mxu0 0.0
    %2153 = vmatmul.mubr.f32.gmra.mrb[0].mxu0 %v2086
    %v2154 = vpop.f32.mrb[0].mxu0
    %v2155 = vadd.f32 0.0, %v2154
    %v2156 = vpop.f32.mrb[0].mxu0
    %2157 = vdwg.mxu0
    %v2159 = vrot.slane %v2155, 4
    %v2161 = vadd.f32 %v1654, %v2159
    %v2162 = vmul.f32 %v2161, %v503
    %v2163 = vxor.u32 %v2162, 2147483648
    %v2164 = vmul.f32 %v2163, 1.442695
    %v2165 = vpow.pop %v2164
    %v2166 = vadd.f32 %v2165, 1.0
    %v2167 = vrcp.pop %v2166
    %v2168 = vmul.f32 1.0, %v2167
    %v2169 = vmul.f32 %v2168, 2.0
    %v2170 = vsub.f32 %v2169, 1.0
    %v2172 = vrot.slane %v2075, 7
    %v2174 = vmul.f32 %v2168, %v2172
    %2176 = vrot.lane.b32.xlu0 %v2170, 64
    %v2177 = vpop.permute.xlu0 %2176
    %v2179 = vmul.f32 %v2168, %v2177
    %2181 = vrot.lane.b32.xlu0 %v2179, 32
    %v2182 = vpop.permute.xlu0 %2181
    %v2184 = vadd.f32 %v2174, %v2182
    %v2185 = vtanh.pop %v2184
    %2187 = vrot.lane.b32.xlu0 %v2185, 64
    %v2188 = vpop.permute.xlu0 %2187
    %v2190 = vmul.f32 %v2168, %v2188
    %v2192 = vrot.slane %v2190, 4
    %2193 = vrot.lane.b32.xlu0 %v2192, 32
    %v2194 = vpop.permute.xlu0 %2193
    %v2195 = vsel %vm487, %v2194, 0
    %2197 = vmatprep.subr.mxu0 0.0
    %2198 = vmatpush1.msra.mxu0 %v1576
    %2199 = vmatprep.subr.mxu0 0.0
    %2200 = vmatpush1.msra.mxu0 %v1577
    %2201 = vmatprep.subr.mxu0 0.0
    %2202 = vmatpush1.msra.mxu0 %v1578
    %2203 = vmatprep.subr.mxu0 0.0
    %2204 = vmatpush1.msra.mxu0 %v1579
    %2205 = vmatprep.subr.mxu0 0.0
    %2206 = vmatpush1.msra.mxu0 0.0
    %2207 = vmatprep.subr.mxu0 0.0
    %2208 = vmatpush1.msra.mxu0 0.0
    %2209 = vmatprep.subr.mxu0 0.0
    %2210 = vmatpush1.msra.mxu0 0.0
    %2211 = vmatprep.subr.mxu0 0.0
    %2212 = vmatpush1.msra.mxu0 0.0
    %2213 = vmatprep.subr.mxu0 0.0
    %2214 = vmatpush1.msra.mxu0 0.0
    %2215 = vmatprep.subr.mxu0 0.0
    %2216 = vmatpush1.msra.mxu0 0.0
    %2217 = vmatprep.subr.mxu0 0.0
    %2218 = vmatpush1.msra.mxu0 0.0
    %2219 = vmatprep.subr.mxu0 0.0
    %2220 = vmatpush1.msra.mxu0 0.0
    %2221 = vmatprep.subr.mxu0 0.0
    %2222 = vmatpush1.msra.mxu0 0.0
    %2223 = vmatprep.subr.mxu0 0.0
    %2224 = vmatpush1.msra.mxu0 0.0
    %2225 = vmatprep.subr.mxu0 0.0
    %2226 = vmatpush1.msra.mxu0 0.0
    %2227 = vmatprep.subr.mxu0 0.0
    %2228 = vmatpush1.msra.mxu0 0.0
    %2229 = vmatprep.subr.mxu0 0.0
    %2230 = vmatpush1.msra.mxu0 0.0
    %2231 = vmatprep.subr.mxu0 0.0
    %2232 = vmatpush1.msra.mxu0 0.0
    %2233 = vmatprep.subr.mxu0 0.0
    %2234 = vmatpush1.msra.mxu0 0.0
    %2235 = vmatprep.subr.mxu0 0.0
    %2236 = vmatpush1.msra.mxu0 0.0
    %2237 = vmatprep.subr.mxu0 0.0
    %2238 = vmatpush1.msra.mxu0 0.0
    %2239 = vmatprep.subr.mxu0 0.0
    %2240 = vmatpush1.msra.mxu0 0.0
    %2241 = vmatprep.subr.mxu0 0.0
    %2242 = vmatpush1.msra.mxu0 0.0
    %2243 = vmatprep.subr.mxu0 0.0
    %2244 = vmatpush1.msra.mxu0 0.0
    %2245 = vmatprep.subr.mxu0 0.0
    %2246 = vmatpush1.msra.mxu0 0.0
    %2247 = vmatprep.subr.mxu0 0.0
    %2248 = vmatpush1.msra.mxu0 0.0
    %2249 = vmatprep.subr.mxu0 0.0
    %2250 = vmatpush1.msra.mxu0 0.0
    %2251 = vmatprep.subr.mxu0 0.0
    %2252 = vmatpush1.msra.mxu0 0.0
    %2253 = vmatprep.subr.mxu0 0.0
    %2254 = vmatpush1.msra.mxu0 0.0
    %2255 = vmatprep.subr.mxu0 0.0
    %2256 = vmatpush1.msra.mxu0 0.0
    %2257 = vmatprep.subr.mxu0 0.0
    %2258 = vmatpush1.msra.mxu0 0.0
    %2259 = vmatprep.subr.mxu0 0.0
    %2260 = vmatpush1.msra.mxu0 0.0
    %2261 = vmatprep.mubr.f32.mxu0 0.0
    %2262 = vmatmul.mubr.f32.gmra.mrb[0].mxu0 %v2195
    %v2263 = vpop.f32.mrb[0].mxu0
    %v2264 = vadd.f32 0.0, %v2263
    %v2265 = vpop.f32.mrb[0].mxu0
    %2266 = vdwg.mxu0
    %v2268 = vrot.slane %v2264, 3
    %v2270 = vadd.f32 %v1654, %v2268
    %v2271 = vmul.f32 %v2270, %v503
    %v2272 = vxor.u32 %v2271, 2147483648
    %v2273 = vmul.f32 %v2272, 1.442695
    %v2274 = vpow.pop %v2273
    %v2275 = vadd.f32 %v2274, 1.0
    %v2276 = vrcp.pop %v2275
    %v2277 = vmul.f32 1.0, %v2276
    %v2278 = vmul.f32 %v2277, 2.0
    %v2279 = vsub.f32 %v2278, 1.0
    %v2281 = vrot.slane %v2184, 7
    %v2283 = vmul.f32 %v2277, %v2281
    %2285 = vrot.lane.b32.xlu0 %v2279, 64
    %v2286 = vpop.permute.xlu0 %2285
    %v2288 = vmul.f32 %v2277, %v2286
    %2290 = vrot.lane.b32.xlu0 %v2288, 32
    %v2291 = vpop.permute.xlu0 %2290
    %v2293 = vadd.f32 %v2283, %v2291
    %v2294 = vtanh.pop %v2293
    %2296 = vrot.lane.b32.xlu0 %v2294, 64
    %v2297 = vpop.permute.xlu0 %2296
    %v2299 = vmul.f32 %v2277, %v2297
    %v2301 = vrot.slane %v2299, 5
    %2302 = vrot.lane.b32.xlu0 %v2301, 32
    %v2303 = vpop.permute.xlu0 %2302
    %v2304 = vsel %vm487, %v2303, 0
    %2306 = vmatprep.subr.mxu0 0.0
    %2307 = vmatpush1.msra.mxu0 %v1576
    %2308 = vmatprep.subr.mxu0 0.0
    %2309 = vmatpush1.msra.mxu0 %v1577
    %2310 = vmatprep.subr.mxu0 0.0
    %2311 = vmatpush1.msra.mxu0 %v1578
    %2312 = vmatprep.subr.mxu0 0.0
    %2313 = vmatpush1.msra.mxu0 %v1579
    %2314 = vmatprep.subr.mxu0 0.0
    %2315 = vmatpush1.msra.mxu0 0.0
    %2316 = vmatprep.subr.mxu0 0.0
    %2317 = vmatpush1.msra.mxu0 0.0
    %2318 = vmatprep.subr.mxu0 0.0
    %2319 = vmatpush1.msra.mxu0 0.0
    %2320 = vmatprep.subr.mxu0 0.0
    %2321 = vmatpush1.msra.mxu0 0.0
    %2322 = vmatprep.subr.mxu0 0.0
    %2323 = vmatpush1.msra.mxu0 0.0
    %2324 = vmatprep.subr.mxu0 0.0
    %2325 = vmatpush1.msra.mxu0 0.0
    %2326 = vmatprep.subr.mxu0 0.0
    %2327 = vmatpush1.msra.mxu0 0.0
    %2328 = vmatprep.subr.mxu0 0.0
    %2329 = vmatpush1.msra.mxu0 0.0
    %2330 = vmatprep.subr.mxu0 0.0
    %2331 = vmatpush1.msra.mxu0 0.0
    %2332 = vmatprep.subr.mxu0 0.0
    %2333 = vmatpush1.msra.mxu0 0.0
    %2334 = vmatprep.subr.mxu0 0.0
    %2335 = vmatpush1.msra.mxu0 0.0
    %2336 = vmatprep.subr.mxu0 0.0
    %2337 = vmatpush1.msra.mxu0 0.0
    %2338 = vmatprep.subr.mxu0 0.0
    %2339 = vmatpush1.msra.mxu0 0.0
    %2340 = vmatprep.subr.mxu0 0.0
    %2341 = vmatpush1.msra.mxu0 0.0
    %2342 = vmatprep.subr.mxu0 0.0
    %2343 = vmatpush1.msra.mxu0 0.0
    %2344 = vmatprep.subr.mxu0 0.0
    %2345 = vmatpush1.msra.mxu0 0.0
    %2346 = vmatprep.subr.mxu0 0.0
    %2347 = vmatpush1.msra.mxu0 0.0
    %2348 = vmatprep.subr.mxu0 0.0
    %2349 = vmatpush1.msra.mxu0 0.0
    %2350 = vmatprep.subr.mxu0 0.0
    %2351 = vmatpush1.msra.mxu0 0.0
    %2352 = vmatprep.subr.mxu0 0.0
    %2353 = vmatpush1.msra.mxu0 0.0
    %2354 = vmatprep.subr.mxu0 0.0
    %2355 = vmatpush1.msra.mxu0 0.0
    %2356 = vmatprep.subr.mxu0 0.0
    %2357 = vmatpush1.msra.mxu0 0.0
    %2358 = vmatprep.subr.mxu0 0.0
    %2359 = vmatpush1.msra.mxu0 0.0
    %2360 = vmatprep.subr.mxu0 0.0
    %2361 = vmatpush1.msra.mxu0 0.0
    %2362 = vmatprep.subr.mxu0 0.0
    %2363 = vmatpush1.msra.mxu0 0.0
    %2364 = vmatprep.subr.mxu0 0.0
    %2365 = vmatpush1.msra.mxu0 0.0
    %2366 = vmatprep.subr.mxu0 0.0
    %2367 = vmatpush1.msra.mxu0 0.0
    %2368 = vmatprep.subr.mxu0 0.0
    %2369 = vmatpush1.msra.mxu0 0.0
    %2370 = vmatprep.mubr.f32.mxu0 0.0
    %2371 = vmatmul.mubr.f32.gmra.mrb[0].mxu0 %v2304
    %v2372 = vpop.f32.mrb[0].mxu0
    %v2373 = vadd.f32 0.0, %v2372
    %v2374 = vpop.f32.mrb[0].mxu0
    %2375 = vdwg.mxu0
    %v2377 = vrot.slane %v2373, 2
    %v2379 = vadd.f32 %v1654, %v2377
    %v2380 = vmul.f32 %v2379, %v503
    %v2381 = vxor.u32 %v2380, 2147483648
    %v2382 = vmul.f32 %v2381, 1.442695
    %v2383 = vpow.pop %v2382
    %v2384 = vadd.f32 %v2383, 1.0
    %v2385 = vrcp.pop %v2384
    %v2386 = vmul.f32 1.0, %v2385
    %v2387 = vmul.f32 %v2386, 2.0
    %v2388 = vsub.f32 %v2387, 1.0
    %v2390 = vrot.slane %v2293, 7
    %v2392 = vmul.f32 %v2386, %v2390
    %2394 = vrot.lane.b32.xlu0 %v2388, 64
    %v2395 = vpop.permute.xlu0 %2394
    %v2397 = vmul.f32 %v2386, %v2395
    %2399 = vrot.lane.b32.xlu0 %v2397, 32
    %v2400 = vpop.permute.xlu0 %2399
    %v2402 = vadd.f32 %v2392, %v2400
    %v2403 = vtanh.pop %v2402
    %2405 = vrot.lane.b32.xlu0 %v2403, 64
    %v2406 = vpop.permute.xlu0 %2405
    %v2408 = vmul.f32 %v2386, %v2406
    %v2410 = vrot.slane %v2408, 6
    %2411 = vrot.lane.b32.xlu0 %v2410, 32
    %v2412 = vpop.permute.xlu0 %2411
    %v2413 = vsel %vm487, %v2412, 0
    %2415 = vmatprep.subr.mxu0 0.0
    %2416 = vmatpush1.msra.mxu0 %v1576
    %2417 = vmatprep.subr.mxu0 0.0
    %2418 = vmatpush1.msra.mxu0 %v1577
    %2419 = vmatprep.subr.mxu0 0.0
    %2420 = vmatpush1.msra.mxu0 %v1578
    %2421 = vmatprep.subr.mxu0 0.0
    %2422 = vmatpush1.msra.mxu0 %v1579
    %2423 = vmatprep.subr.mxu0 0.0
    %2424 = vmatpush1.msra.mxu0 0.0
    %2425 = vmatprep.subr.mxu0 0.0
    %2426 = vmatpush1.msra.mxu0 0.0
    %2427 = vmatprep.subr.mxu0 0.0
    %2428 = vmatpush1.msra.mxu0 0.0
    %2429 = vmatprep.subr.mxu0 0.0
    %2430 = vmatpush1.msra.mxu0 0.0
    %2431 = vmatprep.subr.mxu0 0.0
    %2432 = vmatpush1.msra.mxu0 0.0
    %2433 = vmatprep.subr.mxu0 0.0
    %2434 = vmatpush1.msra.mxu0 0.0
    %2435 = vmatprep.subr.mxu0 0.0
    %2436 = vmatpush1.msra.mxu0 0.0
    %2437 = vmatprep.subr.mxu0 0.0
    %2438 = vmatpush1.msra.mxu0 0.0
    %2439 = vmatprep.subr.mxu0 0.0
    %2440 = vmatpush1.msra.mxu0 0.0
    %2441 = vmatprep.subr.mxu0 0.0
    %2442 = vmatpush1.msra.mxu0 0.0
    %2443 = vmatprep.subr.mxu0 0.0
    %2444 = vmatpush1.msra.mxu0 0.0
    %2445 = vmatprep.subr.mxu0 0.0
    %2446 = vmatpush1.msra.mxu0 0.0
    %2447 = vmatprep.subr.mxu0 0.0
    %2448 = vmatpush1.msra.mxu0 0.0
    %2449 = vmatprep.subr.mxu0 0.0
    %2450 = vmatpush1.msra.mxu0 0.0
    %2451 = vmatprep.subr.mxu0 0.0
    %2452 = vmatpush1.msra.mxu0 0.0
    %2453 = vmatprep.subr.mxu0 0.0
    %2454 = vmatpush1.msra.mxu0 0.0
    %2455 = vmatprep.subr.mxu0 0.0
    %2456 = vmatpush1.msra.mxu0 0.0
    %2457 = vmatprep.subr.mxu0 0.0
    %2458 = vmatpush1.msra.mxu0 0.0
    %2459 = vmatprep.subr.mxu0 0.0
    %2460 = vmatpush1.msra.mxu0 0.0
    %2461 = vmatprep.subr.mxu0 0.0
    %2462 = vmatpush1.msra.mxu0 0.0
    %2463 = vmatprep.subr.mxu0 0.0
    %2464 = vmatpush1.msra.mxu0 0.0
    %2465 = vmatprep.subr.mxu0 0.0
    %2466 = vmatpush1.msra.mxu0 0.0
    %2467 = vmatprep.subr.mxu0 0.0
    %2468 = vmatpush1.msra.mxu0 0.0
    %2469 = vmatprep.subr.mxu0 0.0
    %2470 = vmatpush1.msra.mxu0 0.0
    %2471 = vmatprep.subr.mxu0 0.0
    %2472 = vmatpush1.msra.mxu0 0.0
    %2473 = vmatprep.subr.mxu0 0.0
    %2474 = vmatpush1.msra.mxu0 0.0
    %2475 = vmatprep.subr.mxu0 0.0
    %2476 = vmatpush1.msra.mxu0 0.0
    %2477 = vmatprep.subr.mxu0 0.0
    %2478 = vmatpush1.msra.mxu0 0.0
    %2479 = vmatprep.mubr.f32.mxu0 0.0
    %2480 = vmatmul.mubr.f32.gmra.mrb[0].mxu0 %v2413
    %v2481 = vpop.f32.mrb[0].mxu0
    %v2482 = vadd.f32 0.0, %v2481
    %v2483 = vpop.f32.mrb[0].mxu0
    %2484 = vdwg.mxu0
    %v2486 = vrot.slane %v2482, 1
    %v2488 = vadd.f32 %v1654, %v2486
    %v2489 = vmul.f32 %v2488, %v503
    %v2490 = vxor.u32 %v2489, 2147483648
    %v2491 = vmul.f32 %v2490, 1.442695
    %v2492 = vpow.pop %v2491
    %v2493 = vadd.f32 %v2492, 1.0
    %v2494 = vrcp.pop %v2493
    %v2495 = vmul.f32 1.0, %v2494
    %v2496 = vmul.f32 %v2495, 2.0
    %v2497 = vsub.f32 %v2496, 1.0
    %v2499 = vrot.slane %v2402, 7
    %v2501 = vmul.f32 %v2495, %v2499
    %2503 = vrot.lane.b32.xlu0 %v2497, 64
    %v2504 = vpop.permute.xlu0 %2503
    %v2506 = vmul.f32 %v2495, %v2504
    %2508 = vrot.lane.b32.xlu0 %v2506, 32
    %v2509 = vpop.permute.xlu0 %2508
    %v2511 = vadd.f32 %v2501, %v2509
    %v2512 = vtanh.pop %v2511
    %2514 = vrot.lane.b32.xlu0 %v2512, 64
    %v2515 = vpop.permute.xlu0 %2514
    %v2517 = vmul.f32 %v2495, %v2515
    %v2518 = vld [vmem:[#allocation10 + $0x60] sm:$0xff]
    %v2519 = vld [vmem:[#allocation10 + $0x68] sm:$0xff]
    %v2520 = vld [vmem:[#allocation10 + $0x70] sm:$0xff]
    %v2521 = vld [vmem:[#allocation10 + $0x78] sm:$0xff]
    %v2522 = vld [vmem:[#allocation10 + $0x80] sm:$0xff]
    %v2523 = vld [vmem:[#allocation10 + $0x88] sm:$0xff]
    %v2524 = vld [vmem:[#allocation10 + $0x90] sm:$0xff]
    %v2525 = vld [vmem:[#allocation10 + $0x98] sm:$0xff]
    %v2526 = vrot.slane %v1567, 7
    %v2528 = vrot.slane %v504, 2
    %v2530 = vsel %vm546, %v2526, 0
    %2532 = vmatprep.subr.mxu0 0.0
    %2533 = vmatpush1.msra.mxu0 %v2518
    %2534 = vmatprep.subr.mxu0 0.0
    %2535 = vmatpush1.msra.mxu0 %v2519
    %2536 = vmatprep.subr.mxu0 0.0
    %2537 = vmatpush1.msra.mxu0 %v2520
    %2538 = vmatprep.subr.mxu0 0.0
    %2539 = vmatpush1.msra.mxu0 %v2521
    %2540 = vmatprep.subr.mxu0 0.0
    %2541 = vmatpush1.msra.mxu0 %v2522
    %2542 = vmatprep.subr.mxu0 0.0
    %2543 = vmatpush1.msra.mxu0 %v2523
    %2544 = vmatprep.subr.mxu0 0.0
    %2545 = vmatpush1.msra.mxu0 %v2524
    %2546 = vmatprep.subr.mxu0 0.0
    %2547 = vmatpush1.msra.mxu0 %v2525
    %2548 = vmatprep.subr.mxu0 0.0
    %2549 = vmatpush1.msra.mxu0 0.0
    %2550 = vmatprep.subr.mxu0 0.0
    %2551 = vmatpush1.msra.mxu0 0.0
    %2552 = vmatprep.subr.mxu0 0.0
    %2553 = vmatpush1.msra.mxu0 0.0
    %2554 = vmatprep.subr.mxu0 0.0
    %2555 = vmatpush1.msra.mxu0 0.0
    %2556 = vmatprep.subr.mxu0 0.0
    %2557 = vmatpush1.msra.mxu0 0.0
    %2558 = vmatprep.subr.mxu0 0.0
    %2559 = vmatpush1.msra.mxu0 0.0
    %2560 = vmatprep.subr.mxu0 0.0
    %2561 = vmatpush1.msra.mxu0 0.0
    %2562 = vmatprep.subr.mxu0 0.0
    %2563 = vmatpush1.msra.mxu0 0.0
    %2564 = vmatprep.subr.mxu0 0.0
    %2565 = vmatpush1.msra.mxu0 0.0
    %2566 = vmatprep.subr.mxu0 0.0
    %2567 = vmatpush1.msra.mxu0 0.0
    %2568 = vmatprep.subr.mxu0 0.0
    %2569 = vmatpush1.msra.mxu0 0.0
    %2570 = vmatprep.subr.mxu0 0.0
    %2571 = vmatpush1.msra.mxu0 0.0
    %2572 = vmatprep.subr.mxu0 0.0
    %2573 = vmatpush1.msra.mxu0 0.0
    %2574 = vmatprep.subr.mxu0 0.0
    %2575 = vmatpush1.msra.mxu0 0.0
    %2576 = vmatprep.subr.mxu0 0.0
    %2577 = vmatpush1.msra.mxu0 0.0
    %2578 = vmatprep.subr.mxu0 0.0
    %2579 = vmatpush1.msra.mxu0 0.0
    %2580 = vmatprep.subr.mxu0 0.0
    %2581 = vmatpush1.msra.mxu0 0.0
    %2582 = vmatprep.subr.mxu0 0.0
    %2583 = vmatpush1.msra.mxu0 0.0
    %2584 = vmatprep.subr.mxu0 0.0
    %2585 = vmatpush1.msra.mxu0 0.0
    %2586 = vmatprep.subr.mxu0 0.0
    %2587 = vmatpush1.msra.mxu0 0.0
    %2588 = vmatprep.subr.mxu0 0.0
    %2589 = vmatpush1.msra.mxu0 0.0
    %2590 = vmatprep.subr.mxu0 0.0
    %2591 = vmatpush1.msra.mxu0 0.0
    %2592 = vmatprep.subr.mxu0 0.0
    %2593 = vmatpush1.msra.mxu0 0.0
    %2594 = vmatprep.subr.mxu0 0.0
    %2595 = vmatpush1.msra.mxu0 0.0
    %2596 = vmatprep.mubr.f32.mxu0 0.0
    %2597 = vmatmul.mubr.f32.gmra.mrb[0].mxu0 %v2530
    %v2598 = vpop.f32.mrb[0].mxu0
    %v2599 = vadd.f32 %v2528, %v2598
    %v2600 = vpop.f32.mrb[0].mxu0
    %2601 = vdwg.mxu0
    %v2602 = vmul.f32 %v2599, %v503
    %v2603 = vxor.u32 %v2602, 2147483648
    %v2604 = vmul.f32 %v2603, 1.442695
    %v2605 = vpow.pop %v2604
    %v2606 = vadd.f32 %v2605, 1.0
    %v2607 = vrcp.pop %v2606
    %v2608 = vmul.f32 1.0, %v2607
    %v2609 = vmul.f32 %v2608, 2.0
    %v2610 = vsub.f32 %v2609, 1.0
    %v2611 = vmul.f32 %v2608, 0.0
    %2613 = vrot.lane.b32.xlu0 %v2610, 64
    %v2614 = vpop.permute.xlu0 %2613
    %v2616 = vmul.f32 %v2608, %v2614
    %2618 = vrot.lane.b32.xlu0 %v2616, 32
    %v2619 = vpop.permute.xlu0 %2618
    %v2621 = vadd.f32 %v2611, %v2619
    %v2622 = vtanh.pop %v2621
    %2624 = vrot.lane.b32.xlu0 %v2622, 64
    %v2625 = vpop.permute.xlu0 %2624
    %v2627 = vmul.f32 %v2608, %v2625
    %v2628 = vld [vmem:[#allocation10 + $0xa0] sm:$0xff]
    %v2629 = vld [vmem:[#allocation10 + $0xa8] sm:$0xff]
    %v2630 = vld [vmem:[#allocation10 + $0xb0] sm:$0xff]
    %v2631 = vld [vmem:[#allocation10 + $0xb8] sm:$0xff]
    %v2632 = vld [vmem:[#allocation10 + $0xc0] sm:$0xff]
    %v2633 = vld [vmem:[#allocation10 + $0xc8] sm:$0xff]
    %v2634 = vld [vmem:[#allocation10 + $0xd0] sm:$0xff]
    %v2635 = vld [vmem:[#allocation10 + $0xd8] sm:$0xff]
    %v2636 = vld [vmem:[#allocation10 + $0xe0] sm:$0xff]
    %v2637 = vld [vmem:[#allocation10 + $0xe8] sm:$0xff]
    %v2638 = vld [vmem:[#allocation10 + $0xf0] sm:$0xff]
    %v2639 = vld [vmem:[#allocation10 + $0xf8] sm:$0xff]
    %v2640 = vld [vmem:[#allocation10 + $0x100] sm:$0xff]
    %v2641 = vld [vmem:[#allocation10 + $0x108] sm:$0xff]
    %v2642 = vld [vmem:[#allocation10 + $0x110] sm:$0xff]
    %v2643 = vld [vmem:[#allocation10 + $0x118] sm:$0xff]
    %v2644 = vld [vmem:[#allocation10 + $0x120] sm:$0xff]
    %v2645 = vld [vmem:[#allocation10 + $0x128] sm:$0xff]
    %v2646 = vld [vmem:[#allocation10 + $0x130] sm:$0xff]
    %v2647 = vld [vmem:[#allocation10 + $0x138] sm:$0xff]
    %v2648 = vld [vmem:[#allocation10 + $0x140] sm:$0xff]
    %v2649 = vld [vmem:[#allocation10 + $0x148] sm:$0xff]
    %v2650 = vld [vmem:[#allocation10 + $0x150] sm:$0xff]
    %v2651 = vld [vmem:[#allocation10 + $0x158] sm:$0xff]
    %2653 = vrot.lane.b32.xlu0 %v2517, 32
    %v2654 = vpop.permute.xlu0 %2653
    %v2657 = vrot.slane %v2627, 1
    %2658 = vrot.lane.b32.xlu0 %v2657, 64
    %v2659 = vpop.permute.xlu0 %2658
    %v2661 = vsel %vm487, %v2654, %v2659
    %v2663 = vrot.slane %v2661, 7
    %v2664 = vrot.slane %v504, 3
    %v2666 = vsel %vm546, %v2663, 0
    %2668 = vmatprep.subr.mxu0 0.0
    %2669 = vmatpush1.msra.mxu0 %v2628
    %2670 = vmatprep.subr.mxu0 0.0
    %2671 = vmatpush1.msra.mxu0 %v2629
    %2672 = vmatprep.subr.mxu0 0.0
    %2673 = vmatpush1.msra.mxu0 %v2630
    %2674 = vmatprep.subr.mxu0 0.0
    %2675 = vmatpush1.msra.mxu0 %v2631
    %2676 = vmatprep.subr.mxu0 0.0
    %2677 = vmatpush1.msra.mxu0 %v2632
    %2678 = vmatprep.subr.mxu0 0.0
    %2679 = vmatpush1.msra.mxu0 %v2633
    %2680 = vmatprep.subr.mxu0 0.0
    %2681 = vmatpush1.msra.mxu0 %v2634
    %2682 = vmatprep.subr.mxu0 0.0
    %2683 = vmatpush1.msra.mxu0 %v2635
    %2684 = vmatprep.subr.mxu0 0.0
    %2685 = vmatpush1.msra.mxu0 0.0
    %2686 = vmatprep.subr.mxu0 0.0
    %2687 = vmatpush1.msra.mxu0 0.0
    %2688 = vmatprep.subr.mxu0 0.0
    %2689 = vmatpush1.msra.mxu0 0.0
    %2690 = vmatprep.subr.mxu0 0.0
    %2691 = vmatpush1.msra.mxu0 0.0
    %2692 = vmatprep.subr.mxu0 0.0
    %2693 = vmatpush1.msra.mxu0 0.0
    %2694 = vmatprep.subr.mxu0 0.0
    %2695 = vmatpush1.msra.mxu0 0.0
    %2696 = vmatprep.subr.mxu0 0.0
    %2697 = vmatpush1.msra.mxu0 0.0
    %2698 = vmatprep.subr.mxu0 0.0
    %2699 = vmatpush1.msra.mxu0 0.0
    %2700 = vmatprep.subr.mxu0 0.0
    %2701 = vmatpush1.msra.mxu0 0.0
    %2702 = vmatprep.subr.mxu0 0.0
    %2703 = vmatpush1.msra.mxu0 0.0
    %2704 = vmatprep.subr.mxu0 0.0
    %2705 = vmatpush1.msra.mxu0 0.0
    %2706 = vmatprep.subr.mxu0 0.0
    %2707 = vmatpush1.msra.mxu0 0.0
    %2708 = vmatprep.subr.mxu0 0.0
    %2709 = vmatpush1.msra.mxu0 0.0
    %2710 = vmatprep.subr.mxu0 0.0
    %2711 = vmatpush1.msra.mxu0 0.0
    %2712 = vmatprep.subr.mxu0 0.0
    %2713 = vmatpush1.msra.mxu0 0.0
    %2714 = vmatprep.subr.mxu0 0.0
    %2715 = vmatpush1.msra.mxu0 0.0
    %2716 = vmatprep.subr.mxu0 0.0
    %2717 = vmatpush1.msra.mxu0 0.0
    %2718 = vmatprep.subr.mxu0 0.0
    %2719 = vmatpush1.msra.mxu0 0.0
    %2720 = vmatprep.subr.mxu0 0.0
    %2721 = vmatpush1.msra.mxu0 0.0
    %2722 = vmatprep.subr.mxu0 0.0
    %2723 = vmatpush1.msra.mxu0 0.0
    %2724 = vmatprep.subr.mxu0 0.0
    %2725 = vmatpush1.msra.mxu0 0.0
    %2726 = vmatprep.subr.mxu0 0.0
    %2727 = vmatpush1.msra.mxu0 0.0
    %2728 = vmatprep.subr.mxu0 0.0
    %2729 = vmatpush1.msra.mxu0 0.0
    %2730 = vmatprep.subr.mxu0 0.0
    %2731 = vmatpush1.msra.mxu0 0.0
    %2732 = vmatprep.mubr.f32.mxu0 0.0
    %2733 = vmatmul.mubr.f32.gmra.mrb[0].mxu0 %v2666
    %v2734 = vpop.f32.mrb[0].mxu0
    %v2735 = vadd.f32 %v2664, %v2734
    %v2736 = vpop.f32.mrb[0].mxu0
    %2737 = vdwg.mxu0
    %v2738 = vmax.f32 %v2735, 0.0
    %2739 = vmatprep.subr.mxu0 0.0
    %2740 = vmatpush1.msra.mxu0 %v2636
    %2741 = vmatprep.subr.mxu0 0.0
    %2742 = vmatpush1.msra.mxu0 %v2637
    %2743 = vmatprep.subr.mxu0 0.0
    %2744 = vmatpush1.msra.mxu0 %v2638
    %2745 = vmatprep.subr.mxu0 0.0
    %2746 = vmatpush1.msra.mxu0 %v2639
    %2747 = vmatprep.subr.mxu0 0.0
    %2748 = vmatpush1.msra.mxu0 %v2640
    %2749 = vmatprep.subr.mxu0 0.0
    %2750 = vmatpush1.msra.mxu0 %v2641
    %2751 = vmatprep.subr.mxu0 0.0
    %2752 = vmatpush1.msra.mxu0 %v2642
    %2753 = vmatprep.subr.mxu0 0.0
    %2754 = vmatpush1.msra.mxu0 %v2643
    %2755 = vmatprep.subr.mxu0 0.0
    %2756 = vmatpush1.msra.mxu0 %v2644
    %2757 = vmatprep.subr.mxu0 0.0
    %2758 = vmatpush1.msra.mxu0 %v2645
    %2759 = vmatprep.subr.mxu0 0.0
    %2760 = vmatpush1.msra.mxu0 %v2646
    %2761 = vmatprep.subr.mxu0 0.0
    %2762 = vmatpush1.msra.mxu0 %v2647
    %2763 = vmatprep.subr.mxu0 0.0
    %2764 = vmatpush1.msra.mxu0 %v2648
    %2765 = vmatprep.subr.mxu0 0.0
    %2766 = vmatpush1.msra.mxu0 %v2649
    %2767 = vmatprep.subr.mxu0 0.0
    %2768 = vmatpush1.msra.mxu0 %v2650
    %2769 = vmatprep.subr.mxu0 0.0
    %2770 = vmatpush1.msra.mxu0 %v2651
    %2771 = vmatprep.subr.mxu0 0.0
    %2772 = vmatpush1.msra.mxu0 0.0
    %2773 = vmatprep.subr.mxu0 0.0
    %2774 = vmatpush1.msra.mxu0 0.0
    %2775 = vmatprep.subr.mxu0 0.0
    %2776 = vmatpush1.msra.mxu0 0.0
    %2777 = vmatprep.subr.mxu0 0.0
    %2778 = vmatpush1.msra.mxu0 0.0
    %2779 = vmatprep.subr.mxu0 0.0
    %2780 = vmatpush1.msra.mxu0 0.0
    %2781 = vmatprep.subr.mxu0 0.0
    %2782 = vmatpush1.msra.mxu0 0.0
    %2783 = vmatprep.subr.mxu0 0.0
    %2784 = vmatpush1.msra.mxu0 0.0
    %2785 = vmatprep.subr.mxu0 0.0
    %2786 = vmatpush1.msra.mxu0 0.0
    %2787 = vmatprep.subr.mxu0 0.0
    %2788 = vmatpush1.msra.mxu0 0.0
    %2789 = vmatprep.subr.mxu0 0.0
    %2790 = vmatpush1.msra.mxu0 0.0
    %2791 = vmatprep.subr.mxu0 0.0
    %2792 = vmatpush1.msra.mxu0 0.0
    %2793 = vmatprep.subr.mxu0 0.0
    %2794 = vmatpush1.msra.mxu0 0.0
    %2795 = vmatprep.subr.mxu0 0.0
    %2796 = vmatpush1.msra.mxu0 0.0
    %2797 = vmatprep.subr.mxu0 0.0
    %2798 = vmatpush1.msra.mxu0 0.0
    %2799 = vmatprep.subr.mxu0 0.0
    %2800 = vmatpush1.msra.mxu0 0.0
    %2801 = vmatprep.subr.mxu0 0.0
    %2802 = vmatpush1.msra.mxu0 0.0
    %2803 = vmatprep.mubr.f32.mxu0 0.0
    %2804 = vmatmul.mubr.f32.gmra.mrb[0].mxu0 %v2738
    %v2805 = vpop.f32.mrb[0].mxu0
    %v2806 = vadd.f32 0.0, %v2805
    %v2807 = vpop.f32.mrb[0].mxu0
    %2808 = vdwg.mxu0
    %v2809 = vrot.slane %v504, 4
    %v2811 = vadd.f32 %v2806, %v2809
    %vm2812 = vcmask 57344
    %2813 = vst.msk [vmem:[#allocation12] sm:$0x1] %vm2812, %v2811
    // Predicated region
    $region270: #{_net_forward_packed.1} parent=1 // pred_check
      _
    $region271: #{_net_forward_packed.1} parent=1 // pred_check_branch
      %2815 = sbr.rel (0) target = $region273
    $region272: #{_net_forward_packed.1} parent=1 // pred_region
      %s2817 = ssub.s32 16, 16
      %2818 = vsyncadd [#allocation7], %s2817
      %s2820 = sshll.u32 [#allocation12], 4
      %s2821 = int_to_ptr.vmem [resolvable:$true] %s2820
      %2823 = dma.vmem_to_hbm [thread:$0]  %s2821, 16, %s5, [#allocation7]
    $region273: #{_net_forward_packed.1} parent=1 // pred_fallthru
      _
    // Predicated region
    $region274: #{_net_forward_packed.1} parent=1 // pred_check
      _
    $region275: #{_net_forward_packed.1} parent=1 // pred_check_branch
      %2825 = sbr.rel (0) target = $region277
    $region276: #{_net_forward_packed.1} parent=1 // pred_region
      %2826 = dma.done [#allocation7], 16
    $region277: #{_net_forward_packed.1} parent=1 // pred_fallthru
      _
    %2827 = vsyncpa [#allocation6], 1
    %2828 = vsyncpa [#allocation11], 1
    %2829 = vsyncpa [#allocation7], 1
    %2830 = vsyncpa [#allocation8], 1
  %2831 = vsyncmov [#allocation4]
  %s2832 = vpop.sfrf %2831
  %p2833 = scmp.eq.s32.totalorder %s2832, 0
  %p2834 = pneg %p2833
  %2836 = shalt.err (%p2834)
  %s2837 = scalar_lea.sflag [#allocation4], 1
  %2838 = vsyncmov %s2837
  %s2839 = vpop.sfrf %2838
  %p2840 = scmp.eq.s32.totalorder %s2839, 0
  %p2841 = pneg %p2840
  %2843 = shalt.err (%p2841)
  %s2844 = scalar_lea.sflag [#allocation4], 2
  %2845 = vsyncmov %s2844
  %s2846 = vpop.sfrf %2845
  %p2847 = scmp.eq.s32.totalorder %s2846, 0
  %p2848 = pneg %p2847
  %2850 = shalt.err (%p2848)
  %s2851 = scalar_lea.sflag [#allocation4], 3
  %2852 = vsyncmov %s2851
  %s2853 = vpop.sfrf %2852
  %p2854 = scmp.eq.s32.totalorder %s2853, 0
  %p2855 = pneg %p2854
  %2857 = shalt.err (%p2855)
  %s2858 = scalar_lea.sflag [#allocation4], 4
  %2859 = vsyncmov %s2858
  %s2860 = vpop.sfrf %2859
  %p2861 = scmp.eq.s32.totalorder %s2860, 0
  %p2862 = pneg %p2861
  %2864 = shalt.err (%p2862)
  %s2865 = scalar_lea.sflag [#allocation4], 5
  %2866 = vsyncmov %s2865
  %s2867 = vpop.sfrf %2866
  %p2868 = scmp.eq.s32.totalorder %s2867, 0
  %p2869 = pneg %p2868
  %2871 = shalt.err (%p2869)
  %s2872 = scalar_lea.sflag [#allocation4], 6
  %2873 = vsyncmov %s2872
  %s2874 = vpop.sfrf %2873
  %p2875 = scmp.eq.s32.totalorder %s2874, 0
  %p2876 = pneg %p2875
  %2878 = shalt.err (%p2876)
  %s2879 = scalar_lea.sflag [#allocation4], 7
  %2880 = vsyncmov %s2879
  %s2881 = vpop.sfrf %2880
  %p2882 = scmp.eq.s32.totalorder %s2881, 0
  %p2883 = pneg %p2882
  %2885 = shalt.err (%p2883)

</llo_original>
